<compile_context>
chip_gen: v7x
topology: tpu7x:2x2x1
jax: 0.10.0
libtpu: 0.0.40
codegen_flags: <defaults>
</compile_context>

<pallas_src>
import math

import jax
import jax.numpy as jnp
from jax.experimental import pallas as pl
from jax.experimental.pallas import tpu as pltpu

# Logical (PyTorch) dims.
INPUT_DIM, HIDDEN_DIM, LATENT_DIM, BOTTLENECK = 784, 400, 200, 2
BATCH = 8

# Lane-padded dims (multiples of 128).
I_P, H_P, L_P, ML_P = 896, 512, 256, 128

# Static offsets into the concatenated bias slab (all 128-aligned).
OFF_E1 = 0
OFF_E2 = OFF_E1 + H_P          # 512
OFF_ML = OFF_E2 + L_P          # 768
OFF_D1 = OFF_ML + ML_P         # 896
OFF_D2 = OFF_D1 + L_P          # 1152
OFF_D3 = OFF_D2 + H_P          # 1664
B_TOTAL = OFF_D3 + I_P         # 2560


def vae_kernel(x_ref, epsg_ref,
               w_e1_ref, s_e1_ref, w_e2_ref, w_ml_ref,
               w_d1_ref, w_d2_ref, w_d3_ref, s_d3_ref, b_ref,
               xhat_ref, ml_ref):
    bf16, f32 = jnp.bfloat16, jnp.float32

    def lrelu(v):
        return jnp.where(v > 0, v, 0.2 * v)

    x = x_ref[...].astype(bf16)

    # --- encoder L1: int8 weight; per-output-column scale applied post-accumulate.
    h = jnp.dot(x, w_e1_ref[...].astype(bf16), preferred_element_type=f32)
    h = lrelu(h * s_e1_ref[...] + b_ref[:, OFF_E1:OFF_E1 + H_P])

    # --- encoder L2
    h = jnp.dot(h.astype(bf16), w_e2_ref[...], preferred_element_type=f32)
    h = lrelu(h + b_ref[:, OFF_E2:OFF_E2 + L_P])

    # --- fused mean|logvar head (lanes 0..1 = mean, 2..3 = logvar, 4..127 = 0)
    ml = jnp.dot(h.astype(bf16), w_ml_ref[...], preferred_element_type=f32)
    ml = ml + b_ref[:, OFF_ML:OFF_ML + ML_P]
    ml_ref[...] = ml

    # --- reparameterization fused into the first decoder matmul:
    # epsg = [1, 1, e0, e1, 0...]; w_d1_eff rows = [w_d1; w_d1; 0...], so
    # (ml * epsg) @ w_d1_eff == (mean + logvar * eps) @ w_d1   (exactly).
    zg = ml * epsg_ref[...]

    d = jnp.dot(zg.astype(bf16), w_d1_ref[...], preferred_element_type=f32)
    d = lrelu(d + b_ref[:, OFF_D1:OFF_D1 + L_P])

    d = jnp.dot(d.astype(bf16), w_d2_ref[...], preferred_element_type=f32)
    d = lrelu(d + b_ref[:, OFF_D2:OFF_D2 + H_P])

    logits = jnp.dot(d.astype(bf16), w_d3_ref[...].astype(bf16),
                     preferred_element_type=f32)
    logits = logits * s_d3_ref[...] + b_ref[:, OFF_D3:OFF_D3 + I_P]

    # Exact sigmoid (exp -> EUP; divide is hidden under the HBM-bound weight fetch).
    xhat_ref[...] = 1.0 / (1.0 + jnp.exp(-logits))


def _init_linear(key, in_dim, out_dim):
    """PyTorch nn.Linear init, weight pre-transposed to [in, out], f32."""
    kw, kb = jax.random.split(key)
    bound = 1.0 / math.sqrt(in_dim)
    w = jax.random.uniform(kw, (in_dim, out_dim), jnp.float32, -bound, bound)
    b = jax.random.uniform(kb, (1, out_dim), jnp.float32, -bound, bound)
    return w, b


def _pad2(a, rows, cols):
    return jnp.pad(a, ((0, rows - a.shape[0]), (0, cols - a.shape[1])))


def _quantize_per_col(w):
    """Symmetric int8 per-output-column quantization of a zero-padded [in, out] weight."""
    amax = jnp.max(jnp.abs(w), axis=0, keepdims=True)              # [1, out]
    scale = jnp.maximum(amax, 1e-8) / 127.0                        # [1, out] f32
    w_q = jnp.clip(jnp.round(w / scale), -127, 127).astype(jnp.int8)
    return w_q, scale


def init_vae_params(key):
    keys = jax.random.split(key, 7)
    w_e1, b_e1 = _init_linear(keys[0], INPUT_DIM, HIDDEN_DIM)
    w_e2, b_e2 = _init_linear(keys[1], HIDDEN_DIM, LATENT_DIM)
    w_mu, b_mu = _init_linear(keys[2], LATENT_DIM, BOTTLENECK)
    w_lv, b_lv = _init_linear(keys[3], LATENT_DIM, BOTTLENECK)
    w_d1, b_d1 = _init_linear(keys[4], BOTTLENECK, LATENT_DIM)
    w_d2, b_d2 = _init_linear(keys[5], LATENT_DIM, HIDDEN_DIM)
    w_d3, b_d3 = _init_linear(keys[6], HIDDEN_DIM, INPUT_DIM)

    # Zero-padded, lane-dense weights.  Padded rows/cols are exactly 0 so no
    # garbage can leak into the real lanes.
    w_e1_q, s_e1 = _quantize_per_col(_pad2(w_e1, I_P, H_P))        # int8 + f32 scale
    w_e2_p = _pad2(w_e2, H_P, L_P).astype(jnp.bfloat16)
    w_ml = _pad2(jnp.concatenate([w_mu, w_lv], axis=1), L_P, ML_P).astype(jnp.bfloat16)
    # Duplicate w_d1's two rows (mean / logvar*eps halves of the gate), pad rows to 128.
    w_d1_eff = _pad2(jnp.concatenate([w_d1, w_d1], axis=0), ML_P, L_P).astype(jnp.bfloat16)
    w_d2_p = _pad2(w_d2, L_P, H_P).astype(jnp.bfloat16)
    w_d3_q, s_d3 = _quantize_per_col(_pad2(w_d3, H_P, I_P))        # int8 + f32 scale

    # Single lane-padded bias slab [1, 2560] (f32), sliced with static offsets in-kernel.
    biases = jnp.concatenate([
        _pad2(b_e1, 1, H_P),
        _pad2(b_e2, 1, L_P),
        _pad2(jnp.concatenate([b_mu, b_lv], axis=1), 1, ML_P),
        _pad2(b_d1, 1, L_P),
        _pad2(b_d2, 1, H_P),
        _pad2(b_d3, 1, I_P),
    ], axis=1)

    return (w_e1_q, s_e1, w_e2_p, w_ml, w_d1_eff, w_d2_p, w_d3_q, s_d3, biases)


@jax.jit
def vae_forward(x, eps, params):
    B = x.shape[0]
    f32 = jnp.float32

    # Generation-aware batch tile:
    #  * B <= 128: single grid step (kernel is weight-fetch bound; sharding across
    #    v7x's 2 TCs would just duplicate the weight DMA).
    #  * 128 < B < 512: TB=128 -> >=2 "parallel" steps for v7x megacore; fills v5e MXU rows.
    #  * B >= 512: TB=256 fills the 256-row MXU on v6e/v7x (VMEM stays ~a few MB).
    if B <= 128:
        TB = max(8, ((B + 7) // 8) * 8)
    elif B < 512:
        TB = 128
    else:
        TB = 256
    pB = ((B + TB - 1) // TB) * TB
    grid = (pB // TB,)

    # Pad batch and features to the lane-dense shapes.
    x_p = jnp.pad(x, ((0, pB - B), (0, I_P - INPUT_DIM)))
    # eps gate: [1, 1, e0, e1, 0, ..., 0]  (128 lanes; see kernel comment)
    eps_g = jnp.concatenate(
        [jnp.ones((B, BOTTLENECK), f32), eps.astype(f32),
         jnp.zeros((B, ML_P - 2 * BOTTLENECK), f32)], axis=1)
    eps_p = jnp.pad(eps_g, ((0, pB - B), (0, 0)))

    inputs = (x_p, eps_p) + tuple(params)

    in_specs = (
        [pl.BlockSpec((TB, I_P), lambda i: (i, 0)),
         pl.BlockSpec((TB, ML_P), lambda i: (i, 0))]
        # Weights / scales / bias slab: constant index_map -> VMEM-resident across tiles.
        + [pl.BlockSpec(p.shape, lambda i: (0, 0)) for p in params]
    )
    out_specs = (
        pl.BlockSpec((TB, I_P), lambda i: (i, 0)),
        pl.BlockSpec((TB, ML_P), lambda i: (i, 0)),
    )
    out_shape = (
        jax.ShapeDtypeStruct((pB, I_P), f32),    # x_hat (lane-dense, padded)
        jax.ShapeDtypeStruct((pB, ML_P), f32),   # [mean | logvar | 0-pad]
    )

    flops = 2 * pB * (I_P * H_P + H_P * L_P + L_P * ML_P
                      + ML_P * L_P + L_P * H_P + H_P * I_P)
    bytes_accessed = (sum(int(a.size) * a.dtype.itemsize for a in inputs)
                      + pB * I_P * 4 + pB * ML_P * 4)
    cost = pl.CostEstimate(flops=flops, transcendentals=pB * I_P,
                           bytes_accessed=bytes_accessed)

    x_hat, ml = pl.pallas_call(
        vae_kernel,
        grid=grid,
        in_specs=in_specs,
        out_specs=out_specs,
        out_shape=out_shape,
        compiler_params=pltpu.CompilerParams(
            dimension_semantics=("parallel",)),
        cost_estimate=cost,
    )(*inputs)

    x_hat = x_hat[:B, :INPUT_DIM]
    mean = ml[:B, :BOTTLENECK]
    logvar = ml[:B, BOTTLENECK:2 * BOTTLENECK]
    return x_hat, mean, logvar


def vae_forward_ref(x, eps, params):
    """Pure-JAX reference mirroring the kernel math exactly (same quantization/padding)."""
    (w_e1_q, s_e1, w_e2, w_ml, w_d1, w_d2, w_d3_q, s_d3, biases) = params
    bf16, f32 = jnp.bfloat16, jnp.float32
    mm = lambda a, w: jnp.dot(a.astype(bf16), w.astype(bf16), preferred_element_type=f32)
    lrelu = lambda v: jnp.where(v > 0, v, 0.2 * v)
    b = lambda off, n: biases[:, off:off + n]
    B = x.shape[0]

    x_p = jnp.pad(x, ((0, 0), (0, I_P - INPUT_DIM)))
    eps_g = jnp.concatenate(
        [jnp.ones((B, BOTTLENECK), f32), eps.astype(f32),
         jnp.zeros((B, ML_P - 2 * BOTTLENECK), f32)], axis=1)

    h = lrelu(mm(x_p, w_e1_q) * s_e1 + b(OFF_E1, H_P))
    h = lrelu(mm(h, w_e2) + b(OFF_E2, L_P))
    ml = mm(h, w_ml) + b(OFF_ML, ML_P)
    zg = ml * eps_g                                   # == mean + logvar*eps (verbatim PyTorch)
    d = lrelu(mm(zg, w_d1) + b(OFF_D1, L_P))
    d = lrelu(mm(d, w_d2) + b(OFF_D2, H_P))
    logits = mm(d, w_d3_q) * s_d3 + b(OFF_D3, I_P)
    x_hat = jax.nn.sigmoid(logits)
    return x_hat[:, :INPUT_DIM], ml[:, :BOTTLENECK], ml[:, BOTTLENECK:2 * BOTTLENECK]


if __name__ == "__main__":
    key = jax.random.PRNGKey(0)
    k_x, k_eps, k_params = jax.random.split(key, 3)

    x = jax.random.uniform(k_x, (BATCH, INPUT_DIM), jnp.float32)      # MNIST-like in [0,1)
    eps = jax.random.normal(k_eps, (BATCH, BOTTLENECK), jnp.float32)  # torch.randn_like(logvar)
    params = init_vae_params(k_params)

    x_hat, mean, logvar = vae_forward(x, eps, params)
    jax.block_until_ready((x_hat, mean, logvar))

    # Correctness vs. pure-JAX reference (same bf16/int8 math -> tight tolerances).
    x_hat_r, mean_r, logvar_r = vae_forward_ref(x, eps, params)
    assert x_hat.shape == (BATCH, INPUT_DIM)
    assert mean.shape == (BATCH, BOTTLENECK) and logvar.shape == (BATCH, BOTTLENECK)
    assert bool(jnp.all((x_hat >= 0.0) & (x_hat <= 1.0))), "x_hat out of [0,1]"
    assert jnp.allclose(mean, mean_r, atol=2e-3, rtol=2e-3), "mean mismatch"
    assert jnp.allclose(logvar, logvar_r, atol=2e-3, rtol=2e-3), "logvar mismatch"
    assert jnp.allclose(x_hat, x_hat_r, atol=2e-2), "x_hat mismatch"

    print("KERNEL_OK")
</pallas_src>

<mosaic_0001>
module attributes {stable_mosaic.version = 11 : i64} {
  func.func @vae_kernel(%arg0: i32, %arg1: memref<8x896xf32, #tpu.memory_space<vmem>>, %arg2: memref<8x128xf32, #tpu.memory_space<vmem>>, %arg3: memref<896x512xi8, #tpu.memory_space<vmem>>, %arg4: memref<1x512xf32, #tpu.memory_space<vmem>>, %arg5: memref<512x256xbf16, #tpu.memory_space<vmem>>, %arg6: memref<256x128xbf16, #tpu.memory_space<vmem>>, %arg7: memref<128x256xbf16, #tpu.memory_space<vmem>>, %arg8: memref<256x512xbf16, #tpu.memory_space<vmem>>, %arg9: memref<512x896xi8, #tpu.memory_space<vmem>>, %arg10: memref<1x896xf32, #tpu.memory_space<vmem>>, %arg11: memref<1x2560xf32, #tpu.memory_space<vmem>>, %arg12: memref<8x896xf32, #tpu.memory_space<vmem>>, %arg13: memref<8x128xf32, #tpu.memory_space<vmem>>) attributes {dimension_semantics = [#tpu.dimension_semantics<parallel>], iteration_bounds = array<i64: 1>, scalar_prefetch = 0 : i64, scratch_operands = 0 : i64, tpu.core_type = #tpu.core_type<tc>, window_params = [{transform_indices = @transform_0, window_bounds = array<i64: 8, 896>}, {transform_indices = @transform_1, window_bounds = array<i64: 8, 128>}, {pipeline_mode = #tpu.pipeline_mode<synchronous>, transform_indices = @transform_2, window_bounds = array<i64: 896, 512>}, {pipeline_mode = #tpu.pipeline_mode<synchronous>, transform_indices = @transform_3, window_bounds = array<i64: 1, 512>}, {pipeline_mode = #tpu.pipeline_mode<synchronous>, transform_indices = @transform_4, window_bounds = array<i64: 512, 256>}, {pipeline_mode = #tpu.pipeline_mode<synchronous>, transform_indices = @transform_5, window_bounds = array<i64: 256, 128>}, {pipeline_mode = #tpu.pipeline_mode<synchronous>, transform_indices = @transform_6, window_bounds = array<i64: 128, 256>}, {pipeline_mode = #tpu.pipeline_mode<synchronous>, transform_indices = @transform_7, window_bounds = array<i64: 256, 512>}, {pipeline_mode = #tpu.pipeline_mode<synchronous>, transform_indices = @transform_8, window_bounds = array<i64: 512, 896>}, {pipeline_mode = #tpu.pipeline_mode<synchronous>, transform_indices = @transform_9, window_bounds = array<i64: 1, 896>}, {pipeline_mode = #tpu.pipeline_mode<synchronous>, transform_indices = @transform_10, window_bounds = array<i64: 1, 2560>}, {transform_indices = @transform_11, window_bounds = array<i64: 8, 896>}, {transform_indices = @transform_12, window_bounds = array<i64: 8, 128>}]} {
    %c0 = arith.constant 0 : index
    %c0_0 = arith.constant 0 : index
    %0 = vector.load %arg1[%c0, %c0_0] : memref<8x896xf32, #tpu.memory_space<vmem>>, vector<8x896xf32>
    %1 = arith.truncf %0 : vector<8x896xf32> to vector<8x896xbf16>
    %c0_1 = arith.constant 0 : index
    %c0_2 = arith.constant 0 : index
    %2 = vector.load %arg3[%c0_1, %c0_2] : memref<896x512xi8, #tpu.memory_space<vmem>>, vector<896x512xi8>
    %3 = arith.sitofp %2 : vector<896x512xi8> to vector<896x512xbf16>
    %cst = arith.constant dense<0.000000e+00> : vector<8x512xf32>
    %4 = tpu.matmul %1, %3, %cst {dimension_numbers = #tpu.dot_dimension_numbers<[1], [0], [0], [1], [0, 0, 1, 1], [], []>} : vector<8x896xbf16>, vector<896x512xbf16>, vector<8x512xf32> -> vector<8x512xf32>
    %c0_3 = arith.constant 0 : index
    %c0_4 = arith.constant 0 : index
    %5 = vector.load %arg4[%c0_3, %c0_4] : memref<1x512xf32, #tpu.memory_space<vmem>>, vector<1x512xf32>
    %6 = vector.broadcast %5 : vector<1x512xf32> to vector<8x512xf32>
    %7 = arith.mulf %4, %6 : vector<8x512xf32>
    %c0_5 = arith.constant 0 : index
    %c0_6 = arith.constant 0 : index
    %8 = vector.load %arg11[%c0_5, %c0_6] : memref<1x2560xf32, #tpu.memory_space<vmem>>, vector<1x512xf32>
    %9 = vector.broadcast %8 : vector<1x512xf32> to vector<8x512xf32>
    %10 = arith.addf %7, %9 : vector<8x512xf32>
    %cst_7 = arith.constant 0.000000e+00 : f32
    %11 = vector.broadcast %cst_7 : f32 to vector<8x512xf32>
    %12 = arith.cmpf ogt, %10, %11 : vector<8x512xf32>
    %cst_8 = arith.constant 2.000000e-01 : f32
    %13 = vector.broadcast %cst_8 : f32 to vector<8x512xf32>
    %14 = arith.mulf %13, %10 : vector<8x512xf32>
    %15 = arith.select %12, %10, %14 : vector<8x512xi1>, vector<8x512xf32>
    %16 = arith.truncf %15 : vector<8x512xf32> to vector<8x512xbf16>
    %c0_9 = arith.constant 0 : index
    %c0_10 = arith.constant 0 : index
    %17 = vector.load %arg5[%c0_9, %c0_10] : memref<512x256xbf16, #tpu.memory_space<vmem>>, vector<512x256xbf16>
    %cst_11 = arith.constant dense<0.000000e+00> : vector<8x256xf32>
    %18 = tpu.matmul %16, %17, %cst_11 {dimension_numbers = #tpu.dot_dimension_numbers<[1], [0], [0], [1], [0, 0, 1, 1], [], []>} : vector<8x512xbf16>, vector<512x256xbf16>, vector<8x256xf32> -> vector<8x256xf32>
    %c0_12 = arith.constant 0 : index
    %c512 = arith.constant 512 : index
    %19 = vector.load %arg11[%c0_12, %c512] : memref<1x2560xf32, #tpu.memory_space<vmem>>, vector<1x256xf32>
    %20 = vector.broadcast %19 : vector<1x256xf32> to vector<8x256xf32>
    %21 = arith.addf %18, %20 : vector<8x256xf32>
    %cst_13 = arith.constant 0.000000e+00 : f32
    %22 = vector.broadcast %cst_13 : f32 to vector<8x256xf32>
    %23 = arith.cmpf ogt, %21, %22 : vector<8x256xf32>
    %cst_14 = arith.constant 2.000000e-01 : f32
    %24 = vector.broadcast %cst_14 : f32 to vector<8x256xf32>
    %25 = arith.mulf %24, %21 : vector<8x256xf32>
    %26 = arith.select %23, %21, %25 : vector<8x256xi1>, vector<8x256xf32>
    %27 = arith.truncf %26 : vector<8x256xf32> to vector<8x256xbf16>
    %c0_15 = arith.constant 0 : index
    %c0_16 = arith.constant 0 : index
    %28 = vector.load %arg6[%c0_15, %c0_16] : memref<256x128xbf16, #tpu.memory_space<vmem>>, vector<256x128xbf16>
    %cst_17 = arith.constant dense<0.000000e+00> : vector<8x128xf32>
    %29 = tpu.matmul %27, %28, %cst_17 {dimension_numbers = #tpu.dot_dimension_numbers<[1], [0], [0], [1], [0, 0, 1, 1], [], []>} : vector<8x256xbf16>, vector<256x128xbf16>, vector<8x128xf32> -> vector<8x128xf32>
    %c0_18 = arith.constant 0 : index
    %c768 = arith.constant 768 : index
    %30 = vector.load %arg11[%c0_18, %c768] : memref<1x2560xf32, #tpu.memory_space<vmem>>, vector<1x128xf32>
    %31 = vector.broadcast %30 : vector<1x128xf32> to vector<8x128xf32>
    %32 = arith.addf %29, %31 : vector<8x128xf32>
    %c0_19 = arith.constant 0 : index
    %c0_20 = arith.constant 0 : index
    %33 = vector.load %arg13[%c0_19, %c0_20] : memref<8x128xf32, #tpu.memory_space<vmem>>, vector<8x128xf32>
    tpu.vector_store %arg13[%c0_19, %c0_20], %32 {strides = array<i32>} : memref<8x128xf32, #tpu.memory_space<vmem>>, vector<8x128xf32>,
    %c0_21 = arith.constant 0 : index
    %c0_22 = arith.constant 0 : index
    %34 = vector.load %arg2[%c0_21, %c0_22] : memref<8x128xf32, #tpu.memory_space<vmem>>, vector<8x128xf32>
    %35 = arith.mulf %32, %34 : vector<8x128xf32>
    %36 = arith.truncf %35 : vector<8x128xf32> to vector<8x128xbf16>
    %c0_23 = arith.constant 0 : index
    %c0_24 = arith.constant 0 : index
    %37 = vector.load %arg7[%c0_23, %c0_24] : memref<128x256xbf16, #tpu.memory_space<vmem>>, vector<128x256xbf16>
    %cst_25 = arith.constant dense<0.000000e+00> : vector<8x256xf32>
    %38 = tpu.matmul %36, %37, %cst_25 {dimension_numbers = #tpu.dot_dimension_numbers<[1], [0], [0], [1], [0, 0, 1, 1], [], []>} : vector<8x128xbf16>, vector<128x256xbf16>, vector<8x256xf32> -> vector<8x256xf32>
    %c0_26 = arith.constant 0 : index
    %c896 = arith.constant 896 : index
    %39 = vector.load %arg11[%c0_26, %c896] : memref<1x2560xf32, #tpu.memory_space<vmem>>, vector<1x256xf32>
    %40 = vector.broadcast %39 : vector<1x256xf32> to vector<8x256xf32>
    %41 = arith.addf %38, %40 : vector<8x256xf32>
    %cst_27 = arith.constant 0.000000e+00 : f32
    %42 = vector.broadcast %cst_27 : f32 to vector<8x256xf32>
    %43 = arith.cmpf ogt, %41, %42 : vector<8x256xf32>
    %cst_28 = arith.constant 2.000000e-01 : f32
    %44 = vector.broadcast %cst_28 : f32 to vector<8x256xf32>
    %45 = arith.mulf %44, %41 : vector<8x256xf32>
    %46 = arith.select %43, %41, %45 : vector<8x256xi1>, vector<8x256xf32>
    %47 = arith.truncf %46 : vector<8x256xf32> to vector<8x256xbf16>
    %c0_29 = arith.constant 0 : index
    %c0_30 = arith.constant 0 : index
    %48 = vector.load %arg8[%c0_29, %c0_30] : memref<256x512xbf16, #tpu.memory_space<vmem>>, vector<256x512xbf16>
    %cst_31 = arith.constant dense<0.000000e+00> : vector<8x512xf32>
    %49 = tpu.matmul %47, %48, %cst_31 {dimension_numbers = #tpu.dot_dimension_numbers<[1], [0], [0], [1], [0, 0, 1, 1], [], []>} : vector<8x256xbf16>, vector<256x512xbf16>, vector<8x512xf32> -> vector<8x512xf32>
    %c0_32 = arith.constant 0 : index
    %c1152 = arith.constant 1152 : index
    %50 = vector.load %arg11[%c0_32, %c1152] : memref<1x2560xf32, #tpu.memory_space<vmem>>, vector<1x512xf32>
    %51 = vector.broadcast %50 : vector<1x512xf32> to vector<8x512xf32>
    %52 = arith.addf %49, %51 : vector<8x512xf32>
    %cst_33 = arith.constant 0.000000e+00 : f32
    %53 = vector.broadcast %cst_33 : f32 to vector<8x512xf32>
    %54 = arith.cmpf ogt, %52, %53 : vector<8x512xf32>
    %cst_34 = arith.constant 2.000000e-01 : f32
    %55 = vector.broadcast %cst_34 : f32 to vector<8x512xf32>
    %56 = arith.mulf %55, %52 : vector<8x512xf32>
    %57 = arith.select %54, %52, %56 : vector<8x512xi1>, vector<8x512xf32>
    %58 = arith.truncf %57 : vector<8x512xf32> to vector<8x512xbf16>
    %c0_35 = arith.constant 0 : index
    %c0_36 = arith.constant 0 : index
    %59 = vector.load %arg9[%c0_35, %c0_36] : memref<512x896xi8, #tpu.memory_space<vmem>>, vector<512x896xi8>
    %60 = arith.sitofp %59 : vector<512x896xi8> to vector<512x896xbf16>
    %cst_37 = arith.constant dense<0.000000e+00> : vector<8x896xf32>
    %61 = tpu.matmul %58, %60, %cst_37 {dimension_numbers = #tpu.dot_dimension_numbers<[1], [0], [0], [1], [0, 0, 1, 1], [], []>} : vector<8x512xbf16>, vector<512x896xbf16>, vector<8x896xf32> -> vector<8x896xf32>
    %c0_38 = arith.constant 0 : index
    %c0_39 = arith.constant 0 : index
    %62 = vector.load %arg10[%c0_38, %c0_39] : memref<1x896xf32, #tpu.memory_space<vmem>>, vector<1x896xf32>
    %63 = vector.broadcast %62 : vector<1x896xf32> to vector<8x896xf32>
    %64 = arith.mulf %61, %63 : vector<8x896xf32>
    %c0_40 = arith.constant 0 : index
    %c1664 = arith.constant 1664 : index
    %65 = vector.load %arg11[%c0_40, %c1664] : memref<1x2560xf32, #tpu.memory_space<vmem>>, vector<1x896xf32>
    %66 = vector.broadcast %65 : vector<1x896xf32> to vector<8x896xf32>
    %67 = arith.addf %64, %66 : vector<8x896xf32>
    %cst_41 = arith.constant 0.000000e+00 : f32
    %68 = vector.broadcast %cst_41 : f32 to vector<8x896xf32>
    %69 = arith.subf %68, %67 : vector<8x896xf32>
    %70 = math.exp %69 : vector<8x896xf32>
    %cst_42 = arith.constant 1.000000e+00 : f32
    %71 = vector.broadcast %cst_42 : f32 to vector<8x896xf32>
    %72 = arith.addf %71, %70 : vector<8x896xf32>
    %cst_43 = arith.constant 1.000000e+00 : f32
    %73 = vector.broadcast %cst_43 : f32 to vector<8x896xf32>
    %74 = arith.divf %73, %72 : vector<8x896xf32>
    %c0_44 = arith.constant 0 : index
    %c0_45 = arith.constant 0 : index
    %75 = vector.load %arg12[%c0_44, %c0_45] : memref<8x896xf32, #tpu.memory_space<vmem>>, vector<8x896xf32>
    tpu.vector_store %arg12[%c0_44, %c0_45], %74 {strides = array<i32>} : memref<8x896xf32, #tpu.memory_space<vmem>>, vector<8x896xf32>,
    return
  }
  func.func @transform_0(%arg0: i32) -> (i32, i32) {
    %c0_i32 = arith.constant 0 : i32
    %c0_i32_0 = arith.constant 0 : i32
    return %arg0, %c0_i32 : i32, i32
  }
  func.func @transform_1(%arg0: i32) -> (i32, i32) {
    %c0_i32 = arith.constant 0 : i32
    %c0_i32_0 = arith.constant 0 : i32
    return %arg0, %c0_i32 : i32, i32
  }
  func.func @transform_2(%arg0: i32) -> (i32, i32) {
    %c0_i32 = arith.constant 0 : i32
    %c0_i32_0 = arith.constant 0 : i32
    %c0_i32_1 = arith.constant 0 : i32
    return %c0_i32, %c0_i32_0 : i32, i32
  }
  func.func @transform_3(%arg0: i32) -> (i32, i32) {
    %c0_i32 = arith.constant 0 : i32
    %c0_i32_0 = arith.constant 0 : i32
    %c0_i32_1 = arith.constant 0 : i32
    return %c0_i32, %c0_i32_0 : i32, i32
  }
  func.func @transform_4(%arg0: i32) -> (i32, i32) {
    %c0_i32 = arith.constant 0 : i32
    %c0_i32_0 = arith.constant 0 : i32
    %c0_i32_1 = arith.constant 0 : i32
    return %c0_i32, %c0_i32_0 : i32, i32
  }
  func.func @transform_5(%arg0: i32) -> (i32, i32) {
    %c0_i32 = arith.constant 0 : i32
    %c0_i32_0 = arith.constant 0 : i32
    %c0_i32_1 = arith.constant 0 : i32
    return %c0_i32, %c0_i32_0 : i32, i32
  }
  func.func @transform_6(%arg0: i32) -> (i32, i32) {
    %c0_i32 = arith.constant 0 : i32
    %c0_i32_0 = arith.constant 0 : i32
    %c0_i32_1 = arith.constant 0 : i32
    return %c0_i32, %c0_i32_0 : i32, i32
  }
  func.func @transform_7(%arg0: i32) -> (i32, i32) {
    %c0_i32 = arith.constant 0 : i32
    %c0_i32_0 = arith.constant 0 : i32
    %c0_i32_1 = arith.constant 0 : i32
    return %c0_i32, %c0_i32_0 : i32, i32
  }
  func.func @transform_8(%arg0: i32) -> (i32, i32) {
    %c0_i32 = arith.constant 0 : i32
    %c0_i32_0 = arith.constant 0 : i32
    %c0_i32_1 = arith.constant 0 : i32
    return %c0_i32, %c0_i32_0 : i32, i32
  }
  func.func @transform_9(%arg0: i32) -> (i32, i32) {
    %c0_i32 = arith.constant 0 : i32
    %c0_i32_0 = arith.constant 0 : i32
    %c0_i32_1 = arith.constant 0 : i32
    return %c0_i32, %c0_i32_0 : i32, i32
  }
  func.func @transform_10(%arg0: i32) -> (i32, i32) {
    %c0_i32 = arith.constant 0 : i32
    %c0_i32_0 = arith.constant 0 : i32
    %c0_i32_1 = arith.constant 0 : i32
    return %c0_i32, %c0_i32_0 : i32, i32
  }
  func.func @transform_11(%arg0: i32) -> (i32, i32) {
    %c0_i32 = arith.constant 0 : i32
    %c0_i32_0 = arith.constant 0 : i32
    return %arg0, %c0_i32 : i32, i32
  }
  func.func @transform_12(%arg0: i32) -> (i32, i32) {
    %c0_i32 = arith.constant 0 : i32
    %c0_i32_0 = arith.constant 0 : i32
    return %arg0, %c0_i32 : i32, i32
  }
}

</mosaic_0001>

<llo_original>
// kernel: vae_forward.1
$region0: #{vae_forward.1}
  #allocation0 [shape = 'u32[]', space=smem, size = 0x4, offset = 0x4, fixed_abs, tag = 'smem constant byte address 0x4 - core index']
  #allocation1 [shape = 'u32[144,128]{1,0:T(1,128)}', space=vmem, size = 0x12000, scoped, tag = 'internal scratch']
  %s0 = inlined_call_operand.vmem [shape: f32[8,896], index: 0, kind: input, shape index: {}]
  %s1 = inlined_call_operand.vmem [shape: f32[8,128], index: 1, kind: input, shape index: {}]
  %s2 = inlined_call_operand.hbm [shape: s8[896,512], index: 2, kind: input, shape index: {}]
  %s3 = inlined_call_operand.vmem [shape: f32[1,512], index: 3, kind: input, shape index: {}]
  %s4 = inlined_call_operand.hbm [shape: bf16[512,256], index: 4, kind: input, shape index: {}]
  %s5 = inlined_call_operand.vmem [shape: bf16[256,128], index: 5, kind: input, shape index: {}]
  %s6 = inlined_call_operand.hbm [shape: bf16[128,256], index: 6, kind: input, shape index: {}]
  %s7 = inlined_call_operand.hbm [shape: bf16[256,512], index: 7, kind: input, shape index: {}]
  %s8 = inlined_call_operand.hbm [shape: s8[512,896], index: 8, kind: input, shape index: {}]
  %s9 = inlined_call_operand.vmem [shape: f32[1,896], index: 9, kind: input, shape index: {}]
  %s10 = inlined_call_operand.vmem [shape: f32[1,2560], index: 10, kind: input, shape index: {}]
  %s11 = inlined_call_operand.hbm [shape: f32[8,896], index: 11, kind: output, shape index: {0}]
  %s12 = inlined_call_operand.vmem [shape: f32[8,128], index: 12, kind: output, shape index: {1}]
  %13 = xla_tuple %s11, %s12
  %s14 = sld [smem:[#allocation0]]
  $region82: #{vae_forward.1} parent=0
    _
  %s16 = ssub.s32 1, %s14
  %s17 = scalar_select 0, %s16, %s14
  $region1: #{vae_forward.1} parent=0
    #allocation2 [shape = 'u8[458752]{0}', space=vmem, size = 0x70000, scoped, tag = 'input window, operand 2, single buffered']
    #allocation3 [shape = 's32[1]{0}', space=sflag, size = 0x4, scoped, tag = 'scoped memory for vae_forward.1']
    #allocation4 [shape = 's32[1]{0}', space=sflag, size = 0x4, scoped, tag = 'scoped memory for vae_forward.1']
    #allocation5 [shape = 'u8[262144]{0}', space=vmem, size = 0x40000, scoped, tag = 'input window, operand 4, single buffered']
    #allocation6 [shape = 's32[1]{0}', space=sflag, size = 0x4, scoped, tag = 'scoped memory for vae_forward.1']
    #allocation7 [shape = 'u8[65536]{0}', space=vmem, size = 0x10000, scoped, tag = 'input window, operand 6, single buffered']
    #allocation8 [shape = 'u8[262144]{0}', space=vmem, size = 0x40000, scoped, tag = 'input window, operand 7, single buffered']
    #allocation9 [shape = 's32[1]{0}', space=sflag, size = 0x4, scoped, tag = 'scoped memory for vae_forward.1']
    #allocation10 [shape = 'u8[458752]{0}', space=vmem, size = 0x70000, scoped, tag = 'input window, operand 8, single buffered']
    #allocation11 [shape = 'u8[28672]{0}', space=vmem, size = 0x7000, scoped, tag = 'output window, operand 0, single buffered']
    %18 = vsyncpa [#allocation3], 0
    %19 = vsyncpa [#allocation6], 0
    %20 = vsyncpa [#allocation9], 0
    %21 = vsyncpa [#allocation4], 0
    // Predicated region
    $region2: #{vae_forward.1} parent=1 // pred_check
      _
    $region3: #{vae_forward.1} parent=1 // pred_check_branch
      %23 = sbr.rel (0) target = $region5
    $region4: #{vae_forward.1} parent=1 // pred_region
      _
    $region5: #{vae_forward.1} parent=1 // pred_fallthru
      _
    // Predicated region
    $region6: #{vae_forward.1} parent=1 // pred_check
      _
    $region7: #{vae_forward.1} parent=1 // pred_check_branch
      %25 = sbr.rel (0) target = $region9
    $region8: #{vae_forward.1} parent=1 // pred_region
      _
    $region9: #{vae_forward.1} parent=1 // pred_fallthru
      _
    // Predicated region
    $region10: #{vae_forward.1} parent=1 // pred_check
      _
    $region11: #{vae_forward.1} parent=1 // pred_check_branch
      %27 = sbr.rel (0) target = $region13
    $region12: #{vae_forward.1} parent=1 // pred_region
      %s29 = ssub.s32 14336, 14336
      %30 = vsyncadd [#allocation3], %s29
      %s31 = sshll.u32 [#allocation2], 4
      %s32 = int_to_ptr.vmem [resolvable:$true] %s31
      %37 = dma.hbm_to_vmem [thread:$0]  %s2, 14336, %s32, [#allocation3], 512, 512, 32
    $region13: #{vae_forward.1} parent=1 // pred_fallthru
      _
    // Predicated region
    $region14: #{vae_forward.1} parent=1 // pred_check
      _
    $region15: #{vae_forward.1} parent=1 // pred_check_branch
      %39 = sbr.rel (0) target = $region17
    $region16: #{vae_forward.1} parent=1 // pred_region
      _
    $region17: #{vae_forward.1} parent=1 // pred_fallthru
      _
    // Predicated region
    $region18: #{vae_forward.1} parent=1 // pred_check
      _
    $region19: #{vae_forward.1} parent=1 // pred_check_branch
      %41 = sbr.rel (0) target = $region21
    $region20: #{vae_forward.1} parent=1 // pred_region
      %s43 = ssub.s32 8192, 8192
      %44 = vsyncadd [#allocation6], %s43
      %s45 = sshll.u32 [#allocation5], 4
      %s46 = int_to_ptr.vmem [resolvable:$true] %s45
      %51 = dma.hbm_to_vmem [thread:$0]  %s4, 8192, %s46, [#allocation6], 128, 128, 8
    $region21: #{vae_forward.1} parent=1 // pred_fallthru
      _
    // Predicated region
    $region22: #{vae_forward.1} parent=1 // pred_check
      _
    $region23: #{vae_forward.1} parent=1 // pred_check_branch
      %53 = sbr.rel (0) target = $region25
    $region24: #{vae_forward.1} parent=1 // pred_region
      _
    $region25: #{vae_forward.1} parent=1 // pred_fallthru
      _
    // Predicated region
    $region26: #{vae_forward.1} parent=1 // pred_check
      _
    $region27: #{vae_forward.1} parent=1 // pred_check_branch
      %55 = sbr.rel (0) target = $region29
    $region28: #{vae_forward.1} parent=1 // pred_region
      %s57 = ssub.s32 2048, 2048
      %58 = vsyncadd [#allocation6], %s57
      %s59 = sshll.u32 [#allocation7], 4
      %s60 = int_to_ptr.vmem [resolvable:$true] %s59
      %65 = dma.hbm_to_vmem [thread:$0]  %s6, 2048, %s60, [#allocation6], 128, 128, 8
    $region29: #{vae_forward.1} parent=1 // pred_fallthru
      _
    // Predicated region
    $region30: #{vae_forward.1} parent=1 // pred_check
      _
    $region31: #{vae_forward.1} parent=1 // pred_check_branch
      %67 = sbr.rel (0) target = $region33
    $region32: #{vae_forward.1} parent=1 // pred_region
      %s69 = ssub.s32 8192, 8192
      %70 = vsyncadd [#allocation9], %s69
      %s71 = sshll.u32 [#allocation8], 4
      %s72 = int_to_ptr.vmem [resolvable:$true] %s71
      %77 = dma.hbm_to_vmem [thread:$0]  %s7, 8192, %s72, [#allocation9], 256, 256, 16
    $region33: #{vae_forward.1} parent=1 // pred_fallthru
      _
    // Predicated region
    $region34: #{vae_forward.1} parent=1 // pred_check
      _
    $region35: #{vae_forward.1} parent=1 // pred_check_branch
      %79 = sbr.rel (0) target = $region37
    $region36: #{vae_forward.1} parent=1 // pred_region
      %s81 = ssub.s32 14336, 14336
      %82 = vsyncadd [#allocation9], %s81
      %s83 = sshll.u32 [#allocation10], 4
      %s84 = int_to_ptr.vmem [resolvable:$true] %s83
      %89 = dma.hbm_to_vmem [thread:$0]  %s8, 14336, %s84, [#allocation9], 896, 896, 56
    $region37: #{vae_forward.1} parent=1 // pred_fallthru
      _
    // Predicated region
    $region38: #{vae_forward.1} parent=1 // pred_check
      _
    $region39: #{vae_forward.1} parent=1 // pred_check_branch
      %91 = sbr.rel (0) target = $region41
    $region40: #{vae_forward.1} parent=1 // pred_region
      _
    $region41: #{vae_forward.1} parent=1 // pred_fallthru
      _
    // Predicated region
    $region42: #{vae_forward.1} parent=1 // pred_check
      _
    $region43: #{vae_forward.1} parent=1 // pred_check_branch
      %93 = sbr.rel (0) target = $region45
    $region44: #{vae_forward.1} parent=1 // pred_region
      _
    $region45: #{vae_forward.1} parent=1 // pred_fallthru
      _
    // Predicated region
    $region46: #{vae_forward.1} parent=1 // pred_check
      _
    $region47: #{vae_forward.1} parent=1 // pred_check_branch
      %95 = sbr.rel (0) target = $region49
    $region48: #{vae_forward.1} parent=1 // pred_region
      %96 = dma.done [#allocation3], 14336
    $region49: #{vae_forward.1} parent=1 // pred_fallthru
      _
    // Predicated region
    $region50: #{vae_forward.1} parent=1 // pred_check
      _
    $region51: #{vae_forward.1} parent=1 // pred_check_branch
      %98 = sbr.rel (0) target = $region53
    $region52: #{vae_forward.1} parent=1 // pred_region
      %99 = dma.done [#allocation6], 8192
    $region53: #{vae_forward.1} parent=1 // pred_fallthru
      _
    // Predicated region
    $region54: #{vae_forward.1} parent=1 // pred_check
      _
    $region55: #{vae_forward.1} parent=1 // pred_check_branch
      %101 = sbr.rel (0) target = $region57
    $region56: #{vae_forward.1} parent=1 // pred_region
      %102 = dma.done [#allocation6], 2048
    $region57: #{vae_forward.1} parent=1 // pred_fallthru
      _
    // Predicated region
    $region58: #{vae_forward.1} parent=1 // pred_check
      _
    $region59: #{vae_forward.1} parent=1 // pred_check_branch
      %104 = sbr.rel (0) target = $region61
    $region60: #{vae_forward.1} parent=1 // pred_region
      %105 = dma.done [#allocation9], 8192
    $region61: #{vae_forward.1} parent=1 // pred_fallthru
      _
    // Predicated region
    $region62: #{vae_forward.1} parent=1 // pred_check
      _
    $region63: #{vae_forward.1} parent=1 // pred_check_branch
      %107 = sbr.rel (0) target = $region65
    $region64: #{vae_forward.1} parent=1 // pred_region
      %108 = dma.done [#allocation9], 14336
    $region65: #{vae_forward.1} parent=1 // pred_fallthru
      _
    %v110 = vld [vmem:[%s0] sm:$0xff]
    %v111 = vld [vmem:[%s0 + $0x8] sm:$0xff]
    %v112 = vld [vmem:[%s0 + $0x10] sm:$0xff]
    %v113 = vld [vmem:[%s0 + $0x18] sm:$0xff]
    %v114 = vld [vmem:[%s0 + $0x20] sm:$0xff]
    %v115 = vld [vmem:[%s0 + $0x28] sm:$0xff]
    %v116 = vld [vmem:[%s0 + $0x30] sm:$0xff]
    %v117 = vpack.c.bf16 %v110, %v110
    %v118 = vpack.c.bf16 %v111, %v111
    %v119 = vpack.c.bf16 %v112, %v112
    %v120 = vpack.c.bf16 %v113, %v113
    %v121 = vpack.c.bf16 %v114, %v114
    %v122 = vpack.c.bf16 %v115, %v115
    %v123 = vpack.c.bf16 %v116, %v116
    %v124 = vld [vmem:[#allocation2] sm:$0xff]
    %v125 = vld [vmem:[#allocation2 + $0x8] sm:$0xff]
    %v126 = vld [vmem:[#allocation2 + $0x10] sm:$0xff]
    %v127 = vld [vmem:[#allocation2 + $0x18] sm:$0xff]
    %v128 = vld [vmem:[#allocation2 + $0x20] sm:$0xff]
    %v129 = vld [vmem:[#allocation2 + $0x28] sm:$0xff]
    %v130 = vld [vmem:[#allocation2 + $0x30] sm:$0xff]
    %v131 = vld [vmem:[#allocation2 + $0x38] sm:$0xff]
    %v132 = vld [vmem:[#allocation2 + $0x40] sm:$0xff]
    %v133 = vld [vmem:[#allocation2 + $0x48] sm:$0xff]
    %v134 = vld [vmem:[#allocation2 + $0x50] sm:$0xff]
    %v135 = vld [vmem:[#allocation2 + $0x58] sm:$0xff]
    %v136 = vld [vmem:[#allocation2 + $0x60] sm:$0xff]
    %v137 = vld [vmem:[#allocation2 + $0x68] sm:$0xff]
    %v138 = vld [vmem:[#allocation2 + $0x70] sm:$0xff]
    %v139 = vld [vmem:[#allocation2 + $0x78] sm:$0xff]
    %v140 = vld [vmem:[#allocation2 + $0x80] sm:$0xff]
    %v141 = vld [vmem:[#allocation2 + $0x88] sm:$0xff]
    %v142 = vld [vmem:[#allocation2 + $0x90] sm:$0xff]
    %v143 = vld [vmem:[#allocation2 + $0x98] sm:$0xff]
    %v144 = vld [vmem:[#allocation2 + $0xa0] sm:$0xff]
    %v145 = vld [vmem:[#allocation2 + $0xa8] sm:$0xff]
    %v146 = vld [vmem:[#allocation2 + $0xb0] sm:$0xff]
    %v147 = vld [vmem:[#allocation2 + $0xb8] sm:$0xff]
    %v148 = vld [vmem:[#allocation2 + $0xc0] sm:$0xff]
    %v149 = vld [vmem:[#allocation2 + $0xc8] sm:$0xff]
    %v150 = vld [vmem:[#allocation2 + $0xd0] sm:$0xff]
    %v151 = vld [vmem:[#allocation2 + $0xd8] sm:$0xff]
    %v152 = vld [vmem:[#allocation2 + $0xe0] sm:$0xff]
    %v153 = vld [vmem:[#allocation2 + $0xe8] sm:$0xff]
    %v154 = vld [vmem:[#allocation2 + $0xf0] sm:$0xff]
    %v155 = vld [vmem:[#allocation2 + $0xf8] sm:$0xff]
    %v156 = vld [vmem:[#allocation2 + $0x100] sm:$0xff]
    %v157 = vld [vmem:[#allocation2 + $0x108] sm:$0xff]
    %v158 = vld [vmem:[#allocation2 + $0x110] sm:$0xff]
    %v159 = vld [vmem:[#allocation2 + $0x118] sm:$0xff]
    %v160 = vld [vmem:[#allocation2 + $0x120] sm:$0xff]
    %v161 = vld [vmem:[#allocation2 + $0x128] sm:$0xff]
    %v162 = vld [vmem:[#allocation2 + $0x130] sm:$0xff]
    %v163 = vld [vmem:[#allocation2 + $0x138] sm:$0xff]
    %v164 = vld [vmem:[#allocation2 + $0x140] sm:$0xff]
    %v165 = vld [vmem:[#allocation2 + $0x148] sm:$0xff]
    %v166 = vld [vmem:[#allocation2 + $0x150] sm:$0xff]
    %v167 = vld [vmem:[#allocation2 + $0x158] sm:$0xff]
    %v168 = vld [vmem:[#allocation2 + $0x160] sm:$0xff]
    %v169 = vld [vmem:[#allocation2 + $0x168] sm:$0xff]
    %v170 = vld [vmem:[#allocation2 + $0x170] sm:$0xff]
    %v171 = vld [vmem:[#allocation2 + $0x178] sm:$0xff]
    %v172 = vld [vmem:[#allocation2 + $0x180] sm:$0xff]
    %v173 = vld [vmem:[#allocation2 + $0x188] sm:$0xff]
    %v174 = vld [vmem:[#allocation2 + $0x190] sm:$0xff]
    %v175 = vld [vmem:[#allocation2 + $0x198] sm:$0xff]
    %v176 = vld [vmem:[#allocation2 + $0x1a0] sm:$0xff]
    %v177 = vld [vmem:[#allocation2 + $0x1a8] sm:$0xff]
    %v178 = vld [vmem:[#allocation2 + $0x1b0] sm:$0xff]
    %v179 = vld [vmem:[#allocation2 + $0x1b8] sm:$0xff]
    %v180 = vld [vmem:[#allocation2 + $0x1c0] sm:$0xff]
    %v181 = vld [vmem:[#allocation2 + $0x1c8] sm:$0xff]
    %v182 = vld [vmem:[#allocation2 + $0x1d0] sm:$0xff]
    %v183 = vld [vmem:[#allocation2 + $0x1d8] sm:$0xff]
    %v184 = vld [vmem:[#allocation2 + $0x1e0] sm:$0xff]
    %v185 = vld [vmem:[#allocation2 + $0x1e8] sm:$0xff]
    %v186 = vld [vmem:[#allocation2 + $0x1f0] sm:$0xff]
    %v187 = vld [vmem:[#allocation2 + $0x1f8] sm:$0xff]
    %v188 = vld [vmem:[#allocation2 + $0x200] sm:$0xff]
    %v189 = vld [vmem:[#allocation2 + $0x208] sm:$0xff]
    %v190 = vld [vmem:[#allocation2 + $0x210] sm:$0xff]
    %v191 = vld [vmem:[#allocation2 + $0x218] sm:$0xff]
    %v192 = vld [vmem:[#allocation2 + $0x220] sm:$0xff]
    %v193 = vld [vmem:[#allocation2 + $0x228] sm:$0xff]
    %v194 = vld [vmem:[#allocation2 + $0x230] sm:$0xff]
    %v195 = vld [vmem:[#allocation2 + $0x238] sm:$0xff]
    %v196 = vld [vmem:[#allocation2 + $0x240] sm:$0xff]
    %v197 = vld [vmem:[#allocation2 + $0x248] sm:$0xff]
    %v198 = vld [vmem:[#allocation2 + $0x250] sm:$0xff]
    %v199 = vld [vmem:[#allocation2 + $0x258] sm:$0xff]
    %v200 = vld [vmem:[#allocation2 + $0x260] sm:$0xff]
    %v201 = vld [vmem:[#allocation2 + $0x268] sm:$0xff]
    %v202 = vld [vmem:[#allocation2 + $0x270] sm:$0xff]
    %v203 = vld [vmem:[#allocation2 + $0x278] sm:$0xff]
    %v204 = vld [vmem:[#allocation2 + $0x280] sm:$0xff]
    %v205 = vld [vmem:[#allocation2 + $0x288] sm:$0xff]
    %v206 = vld [vmem:[#allocation2 + $0x290] sm:$0xff]
    %v207 = vld [vmem:[#allocation2 + $0x298] sm:$0xff]
    %v208 = vld [vmem:[#allocation2 + $0x2a0] sm:$0xff]
    %v209 = vld [vmem:[#allocation2 + $0x2a8] sm:$0xff]
    %v210 = vld [vmem:[#allocation2 + $0x2b0] sm:$0xff]
    %v211 = vld [vmem:[#allocation2 + $0x2b8] sm:$0xff]
    %v212 = vld [vmem:[#allocation2 + $0x2c0] sm:$0xff]
    %v213 = vld [vmem:[#allocation2 + $0x2c8] sm:$0xff]
    %v214 = vld [vmem:[#allocation2 + $0x2d0] sm:$0xff]
    %v215 = vld [vmem:[#allocation2 + $0x2d8] sm:$0xff]
    %v216 = vld [vmem:[#allocation2 + $0x2e0] sm:$0xff]
    %v217 = vld [vmem:[#allocation2 + $0x2e8] sm:$0xff]
    %v218 = vld [vmem:[#allocation2 + $0x2f0] sm:$0xff]
    %v219 = vld [vmem:[#allocation2 + $0x2f8] sm:$0xff]
    %v220 = vld [vmem:[#allocation2 + $0x300] sm:$0xff]
    %v221 = vld [vmem:[#allocation2 + $0x308] sm:$0xff]
    %v222 = vld [vmem:[#allocation2 + $0x310] sm:$0xff]
    %v223 = vld [vmem:[#allocation2 + $0x318] sm:$0xff]
    %v224 = vld [vmem:[#allocation2 + $0x320] sm:$0xff]
    %v225 = vld [vmem:[#allocation2 + $0x328] sm:$0xff]
    %v226 = vld [vmem:[#allocation2 + $0x330] sm:$0xff]
    %v227 = vld [vmem:[#allocation2 + $0x338] sm:$0xff]
    %v228 = vld [vmem:[#allocation2 + $0x340] sm:$0xff]
    %v229 = vld [vmem:[#allocation2 + $0x348] sm:$0xff]
    %v230 = vld [vmem:[#allocation2 + $0x350] sm:$0xff]
    %v231 = vld [vmem:[#allocation2 + $0x358] sm:$0xff]
    %v232 = vld [vmem:[#allocation2 + $0x360] sm:$0xff]
    %v233 = vld [vmem:[#allocation2 + $0x368] sm:$0xff]
    %v234 = vld [vmem:[#allocation2 + $0x370] sm:$0xff]
    %v235 = vld [vmem:[#allocation2 + $0x378] sm:$0xff]
    %v236 = vunpack.c.l.s8.bf16 %v124
    %v237 = vunpack.c.l.s8.bf16 %v125
    %v238 = vunpack.c.l.s8.bf16 %v126
    %v239 = vunpack.c.l.s8.bf16 %v127
    %v240 = vunpack.c.h.s8.bf16 %v124
    %v241 = vunpack.c.h.s8.bf16 %v125
    %v242 = vunpack.c.h.s8.bf16 %v126
    %v243 = vunpack.c.h.s8.bf16 %v127
    %v244 = vunpack.c.l.s8.bf16 %v128
    %v245 = vunpack.c.l.s8.bf16 %v129
    %v246 = vunpack.c.l.s8.bf16 %v130
    %v247 = vunpack.c.l.s8.bf16 %v131
    %v248 = vunpack.c.h.s8.bf16 %v128
    %v249 = vunpack.c.h.s8.bf16 %v129
    %v250 = vunpack.c.h.s8.bf16 %v130
    %v251 = vunpack.c.h.s8.bf16 %v131
    %v252 = vunpack.c.l.s8.bf16 %v132
    %v253 = vunpack.c.l.s8.bf16 %v133
    %v254 = vunpack.c.l.s8.bf16 %v134
    %v255 = vunpack.c.l.s8.bf16 %v135
    %v256 = vunpack.c.h.s8.bf16 %v132
    %v257 = vunpack.c.h.s8.bf16 %v133
    %v258 = vunpack.c.h.s8.bf16 %v134
    %v259 = vunpack.c.h.s8.bf16 %v135
    %v260 = vunpack.c.l.s8.bf16 %v136
    %v261 = vunpack.c.l.s8.bf16 %v137
    %v262 = vunpack.c.l.s8.bf16 %v138
    %v263 = vunpack.c.l.s8.bf16 %v139
    %v264 = vunpack.c.h.s8.bf16 %v136
    %v265 = vunpack.c.h.s8.bf16 %v137
    %v266 = vunpack.c.h.s8.bf16 %v138
    %v267 = vunpack.c.h.s8.bf16 %v139
    %v268 = vunpack.c.l.s8.bf16 %v140
    %v269 = vunpack.c.l.s8.bf16 %v141
    %v270 = vunpack.c.l.s8.bf16 %v142
    %v271 = vunpack.c.l.s8.bf16 %v143
    %v272 = vunpack.c.h.s8.bf16 %v140
    %v273 = vunpack.c.h.s8.bf16 %v141
    %v274 = vunpack.c.h.s8.bf16 %v142
    %v275 = vunpack.c.h.s8.bf16 %v143
    %v276 = vunpack.c.l.s8.bf16 %v144
    %v277 = vunpack.c.l.s8.bf16 %v145
    %v278 = vunpack.c.l.s8.bf16 %v146
    %v279 = vunpack.c.l.s8.bf16 %v147
    %v280 = vunpack.c.h.s8.bf16 %v144
    %v281 = vunpack.c.h.s8.bf16 %v145
    %v282 = vunpack.c.h.s8.bf16 %v146
    %v283 = vunpack.c.h.s8.bf16 %v147
    %v284 = vunpack.c.l.s8.bf16 %v148
    %v285 = vunpack.c.l.s8.bf16 %v149
    %v286 = vunpack.c.l.s8.bf16 %v150
    %v287 = vunpack.c.l.s8.bf16 %v151
    %v288 = vunpack.c.h.s8.bf16 %v148
    %v289 = vunpack.c.h.s8.bf16 %v149
    %v290 = vunpack.c.h.s8.bf16 %v150
    %v291 = vunpack.c.h.s8.bf16 %v151
    %v292 = vunpack.c.l.s8.bf16 %v152
    %v293 = vunpack.c.l.s8.bf16 %v153
    %v294 = vunpack.c.l.s8.bf16 %v154
    %v295 = vunpack.c.l.s8.bf16 %v155
    %v296 = vunpack.c.h.s8.bf16 %v152
    %v297 = vunpack.c.h.s8.bf16 %v153
    %v298 = vunpack.c.h.s8.bf16 %v154
    %v299 = vunpack.c.h.s8.bf16 %v155
    %v300 = vunpack.c.l.s8.bf16 %v156
    %v301 = vunpack.c.l.s8.bf16 %v157
    %v302 = vunpack.c.l.s8.bf16 %v158
    %v303 = vunpack.c.l.s8.bf16 %v159
    %v304 = vunpack.c.h.s8.bf16 %v156
    %v305 = vunpack.c.h.s8.bf16 %v157
    %v306 = vunpack.c.h.s8.bf16 %v158
    %v307 = vunpack.c.h.s8.bf16 %v159
    %v308 = vunpack.c.l.s8.bf16 %v160
    %v309 = vunpack.c.l.s8.bf16 %v161
    %v310 = vunpack.c.l.s8.bf16 %v162
    %v311 = vunpack.c.l.s8.bf16 %v163
    %v312 = vunpack.c.h.s8.bf16 %v160
    %v313 = vunpack.c.h.s8.bf16 %v161
    %v314 = vunpack.c.h.s8.bf16 %v162
    %v315 = vunpack.c.h.s8.bf16 %v163
    %v316 = vunpack.c.l.s8.bf16 %v164
    %v317 = vunpack.c.l.s8.bf16 %v165
    %v318 = vunpack.c.l.s8.bf16 %v166
    %v319 = vunpack.c.l.s8.bf16 %v167
    %v320 = vunpack.c.h.s8.bf16 %v164
    %v321 = vunpack.c.h.s8.bf16 %v165
    %v322 = vunpack.c.h.s8.bf16 %v166
    %v323 = vunpack.c.h.s8.bf16 %v167
    %v324 = vunpack.c.l.s8.bf16 %v168
    %v325 = vunpack.c.l.s8.bf16 %v169
    %v326 = vunpack.c.l.s8.bf16 %v170
    %v327 = vunpack.c.l.s8.bf16 %v171
    %v328 = vunpack.c.h.s8.bf16 %v168
    %v329 = vunpack.c.h.s8.bf16 %v169
    %v330 = vunpack.c.h.s8.bf16 %v170
    %v331 = vunpack.c.h.s8.bf16 %v171
    %v332 = vunpack.c.l.s8.bf16 %v172
    %v333 = vunpack.c.l.s8.bf16 %v173
    %v334 = vunpack.c.l.s8.bf16 %v174
    %v335 = vunpack.c.l.s8.bf16 %v175
    %v336 = vunpack.c.h.s8.bf16 %v172
    %v337 = vunpack.c.h.s8.bf16 %v173
    %v338 = vunpack.c.h.s8.bf16 %v174
    %v339 = vunpack.c.h.s8.bf16 %v175
    %v340 = vunpack.c.l.s8.bf16 %v176
    %v341 = vunpack.c.l.s8.bf16 %v177
    %v342 = vunpack.c.l.s8.bf16 %v178
    %v343 = vunpack.c.l.s8.bf16 %v179
    %v344 = vunpack.c.h.s8.bf16 %v176
    %v345 = vunpack.c.h.s8.bf16 %v177
    %v346 = vunpack.c.h.s8.bf16 %v178
    %v347 = vunpack.c.h.s8.bf16 %v179
    %v348 = vunpack.c.l.s8.bf16 %v180
    %v349 = vunpack.c.l.s8.bf16 %v181
    %v350 = vunpack.c.l.s8.bf16 %v182
    %v351 = vunpack.c.l.s8.bf16 %v183
    %v352 = vunpack.c.h.s8.bf16 %v180
    %v353 = vunpack.c.h.s8.bf16 %v181
    %v354 = vunpack.c.h.s8.bf16 %v182
    %v355 = vunpack.c.h.s8.bf16 %v183
    %v356 = vunpack.c.l.s8.bf16 %v184
    %v357 = vunpack.c.l.s8.bf16 %v185
    %v358 = vunpack.c.l.s8.bf16 %v186
    %v359 = vunpack.c.l.s8.bf16 %v187
    %v360 = vunpack.c.h.s8.bf16 %v184
    %v361 = vunpack.c.h.s8.bf16 %v185
    %v362 = vunpack.c.h.s8.bf16 %v186
    %v363 = vunpack.c.h.s8.bf16 %v187
    %v364 = vunpack.c.l.s8.bf16 %v188
    %v365 = vunpack.c.l.s8.bf16 %v189
    %v366 = vunpack.c.l.s8.bf16 %v190
    %v367 = vunpack.c.l.s8.bf16 %v191
    %v368 = vunpack.c.h.s8.bf16 %v188
    %v369 = vunpack.c.h.s8.bf16 %v189
    %v370 = vunpack.c.h.s8.bf16 %v190
    %v371 = vunpack.c.h.s8.bf16 %v191
    %v372 = vunpack.c.l.s8.bf16 %v192
    %v373 = vunpack.c.l.s8.bf16 %v193
    %v374 = vunpack.c.l.s8.bf16 %v194
    %v375 = vunpack.c.l.s8.bf16 %v195
    %v376 = vunpack.c.h.s8.bf16 %v192
    %v377 = vunpack.c.h.s8.bf16 %v193
    %v378 = vunpack.c.h.s8.bf16 %v194
    %v379 = vunpack.c.h.s8.bf16 %v195
    %v380 = vunpack.c.l.s8.bf16 %v196
    %v381 = vunpack.c.l.s8.bf16 %v197
    %v382 = vunpack.c.l.s8.bf16 %v198
    %v383 = vunpack.c.l.s8.bf16 %v199
    %v384 = vunpack.c.h.s8.bf16 %v196
    %v385 = vunpack.c.h.s8.bf16 %v197
    %v386 = vunpack.c.h.s8.bf16 %v198
    %v387 = vunpack.c.h.s8.bf16 %v199
    %v388 = vunpack.c.l.s8.bf16 %v200
    %v389 = vunpack.c.l.s8.bf16 %v201
    %v390 = vunpack.c.l.s8.bf16 %v202
    %v391 = vunpack.c.l.s8.bf16 %v203
    %v392 = vunpack.c.h.s8.bf16 %v200
    %v393 = vunpack.c.h.s8.bf16 %v201
    %v394 = vunpack.c.h.s8.bf16 %v202
    %v395 = vunpack.c.h.s8.bf16 %v203
    %v396 = vunpack.c.l.s8.bf16 %v204
    %v397 = vunpack.c.l.s8.bf16 %v205
    %v398 = vunpack.c.l.s8.bf16 %v206
    %v399 = vunpack.c.l.s8.bf16 %v207
    %v400 = vunpack.c.h.s8.bf16 %v204
    %v401 = vunpack.c.h.s8.bf16 %v205
    %v402 = vunpack.c.h.s8.bf16 %v206
    %v403 = vunpack.c.h.s8.bf16 %v207
    %v404 = vunpack.c.l.s8.bf16 %v208
    %v405 = vunpack.c.l.s8.bf16 %v209
    %v406 = vunpack.c.l.s8.bf16 %v210
    %v407 = vunpack.c.l.s8.bf16 %v211
    %v408 = vunpack.c.h.s8.bf16 %v208
    %v409 = vunpack.c.h.s8.bf16 %v209
    %v410 = vunpack.c.h.s8.bf16 %v210
    %v411 = vunpack.c.h.s8.bf16 %v211
    %v412 = vunpack.c.l.s8.bf16 %v212
    %v413 = vunpack.c.l.s8.bf16 %v213
    %v414 = vunpack.c.l.s8.bf16 %v214
    %v415 = vunpack.c.l.s8.bf16 %v215
    %v416 = vunpack.c.h.s8.bf16 %v212
    %v417 = vunpack.c.h.s8.bf16 %v213
    %v418 = vunpack.c.h.s8.bf16 %v214
    %v419 = vunpack.c.h.s8.bf16 %v215
    %v420 = vunpack.c.l.s8.bf16 %v216
    %v421 = vunpack.c.l.s8.bf16 %v217
    %v422 = vunpack.c.l.s8.bf16 %v218
    %v423 = vunpack.c.l.s8.bf16 %v219
    %v424 = vunpack.c.h.s8.bf16 %v216
    %v425 = vunpack.c.h.s8.bf16 %v217
    %v426 = vunpack.c.h.s8.bf16 %v218
    %v427 = vunpack.c.h.s8.bf16 %v219
    %v428 = vunpack.c.l.s8.bf16 %v220
    %v429 = vunpack.c.l.s8.bf16 %v221
    %v430 = vunpack.c.l.s8.bf16 %v222
    %v431 = vunpack.c.l.s8.bf16 %v223
    %v432 = vunpack.c.h.s8.bf16 %v220
    %v433 = vunpack.c.h.s8.bf16 %v221
    %v434 = vunpack.c.h.s8.bf16 %v222
    %v435 = vunpack.c.h.s8.bf16 %v223
    %v436 = vunpack.c.l.s8.bf16 %v224
    %v437 = vunpack.c.l.s8.bf16 %v225
    %v438 = vunpack.c.l.s8.bf16 %v226
    %v439 = vunpack.c.l.s8.bf16 %v227
    %v440 = vunpack.c.h.s8.bf16 %v224
    %v441 = vunpack.c.h.s8.bf16 %v225
    %v442 = vunpack.c.h.s8.bf16 %v226
    %v443 = vunpack.c.h.s8.bf16 %v227
    %v444 = vunpack.c.l.s8.bf16 %v228
    %v445 = vunpack.c.l.s8.bf16 %v229
    %v446 = vunpack.c.l.s8.bf16 %v230
    %v447 = vunpack.c.l.s8.bf16 %v231
    %v448 = vunpack.c.h.s8.bf16 %v228
    %v449 = vunpack.c.h.s8.bf16 %v229
    %v450 = vunpack.c.h.s8.bf16 %v230
    %v451 = vunpack.c.h.s8.bf16 %v231
    %v452 = vunpack.c.l.s8.bf16 %v232
    %v453 = vunpack.c.l.s8.bf16 %v233
    %v454 = vunpack.c.l.s8.bf16 %v234
    %v455 = vunpack.c.l.s8.bf16 %v235
    %v456 = vunpack.c.h.s8.bf16 %v232
    %v457 = vunpack.c.h.s8.bf16 %v233
    %v458 = vunpack.c.h.s8.bf16 %v234
    %v459 = vunpack.c.h.s8.bf16 %v235
    %460 = vmatprep.subr.bf16.mxu0 %v237
    %461 = vmatpush1.bf16.msra.mxu0 %v236
    %462 = vmatprep.subr.bf16.mxu0 %v241
    %463 = vmatpush1.bf16.msra.mxu0 %v240
    %464 = vmatprep.subr.bf16.mxu0 %v245
    %465 = vmatpush1.bf16.msra.mxu0 %v244
    %466 = vmatprep.subr.bf16.mxu0 %v249
    %467 = vmatpush1.bf16.msra.mxu0 %v248
    %468 = vmatprep.subr.bf16.mxu0 %v253
    %469 = vmatpush1.bf16.msra.mxu0 %v252
    %470 = vmatprep.subr.bf16.mxu0 %v257
    %471 = vmatpush1.bf16.msra.mxu0 %v256
    %472 = vmatprep.subr.bf16.mxu0 %v261
    %473 = vmatpush1.bf16.msra.mxu0 %v260
    %474 = vmatprep.subr.bf16.mxu0 %v265
    %475 = vmatpush1.bf16.msra.mxu0 %v264
    %476 = vmatprep.subr.bf16.mxu0 %v269
    %477 = vmatpush1.bf16.msra.mxu0 %v268
    %478 = vmatprep.subr.bf16.mxu0 %v273
    %479 = vmatpush1.bf16.msra.mxu0 %v272
    %480 = vmatprep.subr.bf16.mxu0 %v277
    %481 = vmatpush1.bf16.msra.mxu0 %v276
    %482 = vmatprep.subr.bf16.mxu0 %v281
    %483 = vmatpush1.bf16.msra.mxu0 %v280
    %484 = vmatprep.subr.bf16.mxu0 %v285
    %485 = vmatpush1.bf16.msra.mxu0 %v284
    %486 = vmatprep.subr.bf16.mxu0 %v289
    %487 = vmatpush1.bf16.msra.mxu0 %v288
    %488 = vmatprep.subr.bf16.mxu0 %v293
    %489 = vmatpush1.bf16.msra.mxu0 %v292
    %490 = vmatprep.subr.bf16.mxu0 %v297
    %491 = vmatpush1.bf16.msra.mxu0 %v296
    %492 = vmatprep.mubr.bf16.mxu0 %v118
    %493 = vmatmul.mubr.bf16.gmra.mrb[0].mxu0 %v117
    %v494 = vpop.f32.mrb[0].mxu0
    %v495 = vadd.f32 0.0, %v494
    %v496 = vpop.f32.mrb[0].mxu0
    %v497 = vadd.f32 0.0, %v496
    %v498 = vpop.f32.mrb[0].mxu0
    %v499 = vpop.f32.mrb[0].mxu0
    %500 = vdwg.mxu0
    %501 = vmatprep.subr.bf16.mxu0 %v301
    %502 = vmatpush1.bf16.msra.mxu0 %v300
    %503 = vmatprep.subr.bf16.mxu0 %v305
    %504 = vmatpush1.bf16.msra.mxu0 %v304
    %505 = vmatprep.subr.bf16.mxu0 %v309
    %506 = vmatpush1.bf16.msra.mxu0 %v308
    %507 = vmatprep.subr.bf16.mxu0 %v313
    %508 = vmatpush1.bf16.msra.mxu0 %v312
    %509 = vmatprep.subr.bf16.mxu0 %v317
    %510 = vmatpush1.bf16.msra.mxu0 %v316
    %511 = vmatprep.subr.bf16.mxu0 %v321
    %512 = vmatpush1.bf16.msra.mxu0 %v320
    %513 = vmatprep.subr.bf16.mxu0 %v325
    %514 = vmatpush1.bf16.msra.mxu0 %v324
    %515 = vmatprep.subr.bf16.mxu0 %v329
    %516 = vmatpush1.bf16.msra.mxu0 %v328
    %517 = vmatprep.subr.bf16.mxu0 %v333
    %518 = vmatpush1.bf16.msra.mxu0 %v332
    %519 = vmatprep.subr.bf16.mxu0 %v337
    %520 = vmatpush1.bf16.msra.mxu0 %v336
    %521 = vmatprep.subr.bf16.mxu0 %v341
    %522 = vmatpush1.bf16.msra.mxu0 %v340
    %523 = vmatprep.subr.bf16.mxu0 %v345
    %524 = vmatpush1.bf16.msra.mxu0 %v344
    %525 = vmatprep.subr.bf16.mxu0 %v349
    %526 = vmatpush1.bf16.msra.mxu0 %v348
    %527 = vmatprep.subr.bf16.mxu0 %v353
    %528 = vmatpush1.bf16.msra.mxu0 %v352
    %529 = vmatprep.subr.bf16.mxu0 %v357
    %530 = vmatpush1.bf16.msra.mxu0 %v356
    %531 = vmatprep.subr.bf16.mxu0 %v361
    %532 = vmatpush1.bf16.msra.mxu0 %v360
    %533 = vmatprep.mubr.bf16.mxu0 %v120
    %534 = vmatmul.mubr.bf16.gmra.mrb[0].mxu0 %v119
    %v535 = vpop.f32.mrb[0].mxu0
    %v536 = vadd.f32 %v495, %v535
    %v537 = vpop.f32.mrb[0].mxu0
    %v538 = vadd.f32 %v497, %v537
    %v539 = vpop.f32.mrb[0].mxu0
    %v540 = vpop.f32.mrb[0].mxu0
    %541 = vdwg.mxu0
    %542 = vmatprep.subr.bf16.mxu0 %v365
    %543 = vmatpush1.bf16.msra.mxu0 %v364
    %544 = vmatprep.subr.bf16.mxu0 %v369
    %545 = vmatpush1.bf16.msra.mxu0 %v368
    %546 = vmatprep.subr.bf16.mxu0 %v373
    %547 = vmatpush1.bf16.msra.mxu0 %v372
    %548 = vmatprep.subr.bf16.mxu0 %v377
    %549 = vmatpush1.bf16.msra.mxu0 %v376
    %550 = vmatprep.subr.bf16.mxu0 %v381
    %551 = vmatpush1.bf16.msra.mxu0 %v380
    %552 = vmatprep.subr.bf16.mxu0 %v385
    %553 = vmatpush1.bf16.msra.mxu0 %v384
    %554 = vmatprep.subr.bf16.mxu0 %v389
    %555 = vmatpush1.bf16.msra.mxu0 %v388
    %556 = vmatprep.subr.bf16.mxu0 %v393
    %557 = vmatpush1.bf16.msra.mxu0 %v392
    %558 = vmatprep.subr.bf16.mxu0 %v397
    %559 = vmatpush1.bf16.msra.mxu0 %v396
    %560 = vmatprep.subr.bf16.mxu0 %v401
    %561 = vmatpush1.bf16.msra.mxu0 %v400
    %562 = vmatprep.subr.bf16.mxu0 %v405
    %563 = vmatpush1.bf16.msra.mxu0 %v404
    %564 = vmatprep.subr.bf16.mxu0 %v409
    %565 = vmatpush1.bf16.msra.mxu0 %v408
    %566 = vmatprep.subr.bf16.mxu0 %v413
    %567 = vmatpush1.bf16.msra.mxu0 %v412
    %568 = vmatprep.subr.bf16.mxu0 %v417
    %569 = vmatpush1.bf16.msra.mxu0 %v416
    %570 = vmatprep.subr.bf16.mxu0 %v421
    %571 = vmatpush1.bf16.msra.mxu0 %v420
    %572 = vmatprep.subr.bf16.mxu0 %v425
    %573 = vmatpush1.bf16.msra.mxu0 %v424
    %574 = vmatprep.mubr.bf16.mxu0 %v122
    %575 = vmatmul.mubr.bf16.gmra.mrb[0].mxu0 %v121
    %v576 = vpop.f32.mrb[0].mxu0
    %v577 = vadd.f32 %v536, %v576
    %v578 = vpop.f32.mrb[0].mxu0
    %v579 = vadd.f32 %v538, %v578
    %v580 = vpop.f32.mrb[0].mxu0
    %v581 = vpop.f32.mrb[0].mxu0
    %582 = vdwg.mxu0
    %583 = vmatprep.subr.bf16.mxu0 %v429
    %584 = vmatpush1.bf16.msra.mxu0 %v428
    %585 = vmatprep.subr.bf16.mxu0 %v433
    %586 = vmatpush1.bf16.msra.mxu0 %v432
    %587 = vmatprep.subr.bf16.mxu0 %v437
    %588 = vmatpush1.bf16.msra.mxu0 %v436
    %589 = vmatprep.subr.bf16.mxu0 %v441
    %590 = vmatpush1.bf16.msra.mxu0 %v440
    %591 = vmatprep.subr.bf16.mxu0 %v445
    %592 = vmatpush1.bf16.msra.mxu0 %v444
    %593 = vmatprep.subr.bf16.mxu0 %v449
    %594 = vmatpush1.bf16.msra.mxu0 %v448
    %595 = vmatprep.subr.bf16.mxu0 %v453
    %596 = vmatpush1.bf16.msra.mxu0 %v452
    %597 = vmatprep.subr.bf16.mxu0 %v457
    %598 = vmatpush1.bf16.msra.mxu0 %v456
    %599 = vmatprep.subr.bf16.mxu0 0
    %600 = vmatpush1.bf16.msra.mxu0 0
    %601 = vmatprep.subr.bf16.mxu0 0
    %602 = vmatpush1.bf16.msra.mxu0 0
    %603 = vmatprep.subr.bf16.mxu0 0
    %604 = vmatpush1.bf16.msra.mxu0 0
    %605 = vmatprep.subr.bf16.mxu0 0
    %606 = vmatpush1.bf16.msra.mxu0 0
    %607 = vmatprep.subr.bf16.mxu0 0
    %608 = vmatpush1.bf16.msra.mxu0 0
    %609 = vmatprep.subr.bf16.mxu0 0
    %610 = vmatpush1.bf16.msra.mxu0 0
    %611 = vmatprep.subr.bf16.mxu0 0
    %612 = vmatpush1.bf16.msra.mxu0 0
    %613 = vmatprep.subr.bf16.mxu0 0
    %614 = vmatpush1.bf16.msra.mxu0 0
    %615 = vmatprep.mubr.bf16.mxu0 0
    %616 = vmatmul.mubr.bf16.gmra.mrb[0].mxu0 %v123
    %v617 = vpop.f32.mrb[0].mxu0
    %v618 = vadd.f32 %v577, %v617
    %v619 = vpop.f32.mrb[0].mxu0
    %v620 = vadd.f32 %v579, %v619
    %v621 = vpop.f32.mrb[0].mxu0
    %v622 = vpop.f32.mrb[0].mxu0
    %623 = vdwg.mxu0
    %624 = vmatprep.subr.bf16.mxu0 %v239
    %625 = vmatpush1.bf16.msra.mxu0 %v238
    %626 = vmatprep.subr.bf16.mxu0 %v243
    %627 = vmatpush1.bf16.msra.mxu0 %v242
    %628 = vmatprep.subr.bf16.mxu0 %v247
    %629 = vmatpush1.bf16.msra.mxu0 %v246
    %630 = vmatprep.subr.bf16.mxu0 %v251
    %631 = vmatpush1.bf16.msra.mxu0 %v250
    %632 = vmatprep.subr.bf16.mxu0 %v255
    %633 = vmatpush1.bf16.msra.mxu0 %v254
    %634 = vmatprep.subr.bf16.mxu0 %v259
    %635 = vmatpush1.bf16.msra.mxu0 %v258
    %636 = vmatprep.subr.bf16.mxu0 %v263
    %637 = vmatpush1.bf16.msra.mxu0 %v262
    %638 = vmatprep.subr.bf16.mxu0 %v267
    %639 = vmatpush1.bf16.msra.mxu0 %v266
    %640 = vmatprep.subr.bf16.mxu0 %v271
    %641 = vmatpush1.bf16.msra.mxu0 %v270
    %642 = vmatprep.subr.bf16.mxu0 %v275
    %643 = vmatpush1.bf16.msra.mxu0 %v274
    %644 = vmatprep.subr.bf16.mxu0 %v279
    %645 = vmatpush1.bf16.msra.mxu0 %v278
    %646 = vmatprep.subr.bf16.mxu0 %v283
    %647 = vmatpush1.bf16.msra.mxu0 %v282
    %648 = vmatprep.subr.bf16.mxu0 %v287
    %649 = vmatpush1.bf16.msra.mxu0 %v286
    %650 = vmatprep.subr.bf16.mxu0 %v291
    %651 = vmatpush1.bf16.msra.mxu0 %v290
    %652 = vmatprep.subr.bf16.mxu0 %v295
    %653 = vmatpush1.bf16.msra.mxu0 %v294
    %654 = vmatprep.subr.bf16.mxu0 %v299
    %655 = vmatpush1.bf16.msra.mxu0 %v298
    %656 = vmatprep.mubr.bf16.mxu0 %v118
    %657 = vmatmul.mubr.bf16.gmra.mrb[0].mxu0 %v117
    %v658 = vpop.f32.mrb[0].mxu0
    %v659 = vadd.f32 0.0, %v658
    %v660 = vpop.f32.mrb[0].mxu0
    %v661 = vadd.f32 0.0, %v660
    %v662 = vpop.f32.mrb[0].mxu0
    %v663 = vpop.f32.mrb[0].mxu0
    %664 = vdwg.mxu0
    %665 = vmatprep.subr.bf16.mxu0 %v303
    %666 = vmatpush1.bf16.msra.mxu0 %v302
    %667 = vmatprep.subr.bf16.mxu0 %v307
    %668 = vmatpush1.bf16.msra.mxu0 %v306
    %669 = vmatprep.subr.bf16.mxu0 %v311
    %670 = vmatpush1.bf16.msra.mxu0 %v310
    %671 = vmatprep.subr.bf16.mxu0 %v315
    %672 = vmatpush1.bf16.msra.mxu0 %v314
    %673 = vmatprep.subr.bf16.mxu0 %v319
    %674 = vmatpush1.bf16.msra.mxu0 %v318
    %675 = vmatprep.subr.bf16.mxu0 %v323
    %676 = vmatpush1.bf16.msra.mxu0 %v322
    %677 = vmatprep.subr.bf16.mxu0 %v327
    %678 = vmatpush1.bf16.msra.mxu0 %v326
    %679 = vmatprep.subr.bf16.mxu0 %v331
    %680 = vmatpush1.bf16.msra.mxu0 %v330
    %681 = vmatprep.subr.bf16.mxu0 %v335
    %682 = vmatpush1.bf16.msra.mxu0 %v334
    %683 = vmatprep.subr.bf16.mxu0 %v339
    %684 = vmatpush1.bf16.msra.mxu0 %v338
    %685 = vmatprep.subr.bf16.mxu0 %v343
    %686 = vmatpush1.bf16.msra.mxu0 %v342
    %687 = vmatprep.subr.bf16.mxu0 %v347
    %688 = vmatpush1.bf16.msra.mxu0 %v346
    %689 = vmatprep.subr.bf16.mxu0 %v351
    %690 = vmatpush1.bf16.msra.mxu0 %v350
    %691 = vmatprep.subr.bf16.mxu0 %v355
    %692 = vmatpush1.bf16.msra.mxu0 %v354
    %693 = vmatprep.subr.bf16.mxu0 %v359
    %694 = vmatpush1.bf16.msra.mxu0 %v358
    %695 = vmatprep.subr.bf16.mxu0 %v363
    %696 = vmatpush1.bf16.msra.mxu0 %v362
    %697 = vmatprep.mubr.bf16.mxu0 %v120
    %698 = vmatmul.mubr.bf16.gmra.mrb[0].mxu0 %v119
    %v699 = vpop.f32.mrb[0].mxu0
    %v700 = vadd.f32 %v659, %v699
    %v701 = vpop.f32.mrb[0].mxu0
    %v702 = vadd.f32 %v661, %v701
    %v703 = vpop.f32.mrb[0].mxu0
    %v704 = vpop.f32.mrb[0].mxu0
    %705 = vdwg.mxu0
    %706 = vmatprep.subr.bf16.mxu0 %v367
    %707 = vmatpush1.bf16.msra.mxu0 %v366
    %708 = vmatprep.subr.bf16.mxu0 %v371
    %709 = vmatpush1.bf16.msra.mxu0 %v370
    %710 = vmatprep.subr.bf16.mxu0 %v375
    %711 = vmatpush1.bf16.msra.mxu0 %v374
    %712 = vmatprep.subr.bf16.mxu0 %v379
    %713 = vmatpush1.bf16.msra.mxu0 %v378
    %714 = vmatprep.subr.bf16.mxu0 %v383
    %715 = vmatpush1.bf16.msra.mxu0 %v382
    %716 = vmatprep.subr.bf16.mxu0 %v387
    %717 = vmatpush1.bf16.msra.mxu0 %v386
    %718 = vmatprep.subr.bf16.mxu0 %v391
    %719 = vmatpush1.bf16.msra.mxu0 %v390
    %720 = vmatprep.subr.bf16.mxu0 %v395
    %721 = vmatpush1.bf16.msra.mxu0 %v394
    %722 = vmatprep.subr.bf16.mxu0 %v399
    %723 = vmatpush1.bf16.msra.mxu0 %v398
    %724 = vmatprep.subr.bf16.mxu0 %v403
    %725 = vmatpush1.bf16.msra.mxu0 %v402
    %726 = vmatprep.subr.bf16.mxu0 %v407
    %727 = vmatpush1.bf16.msra.mxu0 %v406
    %728 = vmatprep.subr.bf16.mxu0 %v411
    %729 = vmatpush1.bf16.msra.mxu0 %v410
    %730 = vmatprep.subr.bf16.mxu0 %v415
    %731 = vmatpush1.bf16.msra.mxu0 %v414
    %732 = vmatprep.subr.bf16.mxu0 %v419
    %733 = vmatpush1.bf16.msra.mxu0 %v418
    %734 = vmatprep.subr.bf16.mxu0 %v423
    %735 = vmatpush1.bf16.msra.mxu0 %v422
    %736 = vmatprep.subr.bf16.mxu0 %v427
    %737 = vmatpush1.bf16.msra.mxu0 %v426
    %738 = vmatprep.mubr.bf16.mxu0 %v122
    %739 = vmatmul.mubr.bf16.gmra.mrb[0].mxu0 %v121
    %v740 = vpop.f32.mrb[0].mxu0
    %v741 = vadd.f32 %v700, %v740
    %v742 = vpop.f32.mrb[0].mxu0
    %v743 = vadd.f32 %v702, %v742
    %v744 = vpop.f32.mrb[0].mxu0
    %v745 = vpop.f32.mrb[0].mxu0
    %746 = vdwg.mxu0
    %747 = vmatprep.subr.bf16.mxu0 %v431
    %748 = vmatpush1.bf16.msra.mxu0 %v430
    %749 = vmatprep.subr.bf16.mxu0 %v435
    %750 = vmatpush1.bf16.msra.mxu0 %v434
    %751 = vmatprep.subr.bf16.mxu0 %v439
    %752 = vmatpush1.bf16.msra.mxu0 %v438
    %753 = vmatprep.subr.bf16.mxu0 %v443
    %754 = vmatpush1.bf16.msra.mxu0 %v442
    %755 = vmatprep.subr.bf16.mxu0 %v447
    %756 = vmatpush1.bf16.msra.mxu0 %v446
    %757 = vmatprep.subr.bf16.mxu0 %v451
    %758 = vmatpush1.bf16.msra.mxu0 %v450
    %759 = vmatprep.subr.bf16.mxu0 %v455
    %760 = vmatpush1.bf16.msra.mxu0 %v454
    %761 = vmatprep.subr.bf16.mxu0 %v459
    %762 = vmatpush1.bf16.msra.mxu0 %v458
    %763 = vmatprep.subr.bf16.mxu0 0
    %764 = vmatpush1.bf16.msra.mxu0 0
    %765 = vmatprep.subr.bf16.mxu0 0
    %766 = vmatpush1.bf16.msra.mxu0 0
    %767 = vmatprep.subr.bf16.mxu0 0
    %768 = vmatpush1.bf16.msra.mxu0 0
    %769 = vmatprep.subr.bf16.mxu0 0
    %770 = vmatpush1.bf16.msra.mxu0 0
    %771 = vmatprep.subr.bf16.mxu0 0
    %772 = vmatpush1.bf16.msra.mxu0 0
    %773 = vmatprep.subr.bf16.mxu0 0
    %774 = vmatpush1.bf16.msra.mxu0 0
    %775 = vmatprep.subr.bf16.mxu0 0
    %776 = vmatpush1.bf16.msra.mxu0 0
    %777 = vmatprep.subr.bf16.mxu0 0
    %778 = vmatpush1.bf16.msra.mxu0 0
    %779 = vmatprep.mubr.bf16.mxu0 0
    %780 = vmatmul.mubr.bf16.gmra.mrb[0].mxu0 %v123
    %v781 = vpop.f32.mrb[0].mxu0
    %v782 = vadd.f32 %v741, %v781
    %v783 = vpop.f32.mrb[0].mxu0
    %v784 = vadd.f32 %v743, %v783
    %v785 = vpop.f32.mrb[0].mxu0
    %v786 = vpop.f32.mrb[0].mxu0
    %787 = vdwg.mxu0
    %v788 = vld [vmem:[%s3] sm:$0xf]
    %v790 = vlaneseq
    %v791 = vshrl.u32 %v790, 7
    %v792 = vsub.s32 0, %v791
    %v793 = vrot.slane %v788, %v792
    %v794 = vlaneseq
    %v795 = vshrl.u32 %v794, 7
    %v796 = vsub.s32 1, %v795
    %v797 = vrot.slane %v788, %v796
    %v798 = vlaneseq
    %v799 = vshrl.u32 %v798, 7
    %v800 = vsub.s32 2, %v799
    %v801 = vrot.slane %v788, %v800
    %v802 = vlaneseq
    %v803 = vshrl.u32 %v802, 7
    %v804 = vsub.s32 3, %v803
    %v805 = vrot.slane %v788, %v804
    %v810 = vmul.f32 %v618, %v793
    %v811 = vmul.f32 %v620, %v797
    %v812 = vmul.f32 %v782, %v801
    %v813 = vmul.f32 %v784, %v805
    %v814 = vld [vmem:[%s10] sm:$0xf]
    %v816 = vlaneseq
    %v817 = vshrl.u32 %v816, 7
    %v818 = vsub.s32 0, %v817
    %v819 = vrot.slane %v814, %v818
    %v820 = vlaneseq
    %v821 = vshrl.u32 %v820, 7
    %v822 = vsub.s32 1, %v821
    %v823 = vrot.slane %v814, %v822
    %v824 = vlaneseq
    %v825 = vshrl.u32 %v824, 7
    %v826 = vsub.s32 2, %v825
    %v827 = vrot.slane %v814, %v826
    %v828 = vlaneseq
    %v829 = vshrl.u32 %v828, 7
    %v830 = vsub.s32 3, %v829
    %v831 = vrot.slane %v814, %v830
    %v836 = vadd.f32 %v810, %v819
    %v837 = vadd.f32 %v811, %v823
    %v838 = vadd.f32 %v812, %v827
    %v839 = vadd.f32 %v813, %v831
    %vm840 = vcmp.gt.f32.partialorder %v836, 0.0
    %vm841 = vcmp.gt.f32.partialorder %v837, 0.0
    %vm842 = vcmp.gt.f32.partialorder %v838, 0.0
    %vm843 = vcmp.gt.f32.partialorder %v839, 0.0
    %v844 = vmul.f32 %v836, 0.2
    %v845 = vmul.f32 %v837, 0.2
    %v846 = vmul.f32 %v838, 0.2
    %v847 = vmul.f32 %v839, 0.2
    %v848 = vsel %vm840, %v836, %v844
    %v849 = vsel %vm841, %v837, %v845
    %v850 = vsel %vm842, %v838, %v846
    %v851 = vsel %vm843, %v839, %v847
    %v852 = vpack.c.bf16 %v848, %v848
    %v853 = vpack.c.bf16 %v849, %v849
    %v854 = vpack.c.bf16 %v850, %v850
    %v855 = vpack.c.bf16 %v851, %v851
    %v856 = vld [vmem:[#allocation5] sm:$0xff]
    %v857 = vld [vmem:[#allocation5 + $0x8] sm:$0xff]
    %v858 = vld [vmem:[#allocation5 + $0x10] sm:$0xff]
    %v859 = vld [vmem:[#allocation5 + $0x18] sm:$0xff]
    %v860 = vld [vmem:[#allocation5 + $0x20] sm:$0xff]
    %v861 = vld [vmem:[#allocation5 + $0x28] sm:$0xff]
    %v862 = vld [vmem:[#allocation5 + $0x30] sm:$0xff]
    %v863 = vld [vmem:[#allocation5 + $0x38] sm:$0xff]
    %v864 = vld [vmem:[#allocation5 + $0x40] sm:$0xff]
    %v865 = vld [vmem:[#allocation5 + $0x48] sm:$0xff]
    %v866 = vld [vmem:[#allocation5 + $0x50] sm:$0xff]
    %v867 = vld [vmem:[#allocation5 + $0x58] sm:$0xff]
    %v868 = vld [vmem:[#allocation5 + $0x60] sm:$0xff]
    %v869 = vld [vmem:[#allocation5 + $0x68] sm:$0xff]
    %v870 = vld [vmem:[#allocation5 + $0x70] sm:$0xff]
    %v871 = vld [vmem:[#allocation5 + $0x78] sm:$0xff]
    %v872 = vld [vmem:[#allocation5 + $0x80] sm:$0xff]
    %v873 = vld [vmem:[#allocation5 + $0x88] sm:$0xff]
    %v874 = vld [vmem:[#allocation5 + $0x90] sm:$0xff]
    %v875 = vld [vmem:[#allocation5 + $0x98] sm:$0xff]
    %v876 = vld [vmem:[#allocation5 + $0xa0] sm:$0xff]
    %v877 = vld [vmem:[#allocation5 + $0xa8] sm:$0xff]
    %v878 = vld [vmem:[#allocation5 + $0xb0] sm:$0xff]
    %v879 = vld [vmem:[#allocation5 + $0xb8] sm:$0xff]
    %v880 = vld [vmem:[#allocation5 + $0xc0] sm:$0xff]
    %v881 = vld [vmem:[#allocation5 + $0xc8] sm:$0xff]
    %v882 = vld [vmem:[#allocation5 + $0xd0] sm:$0xff]
    %v883 = vld [vmem:[#allocation5 + $0xd8] sm:$0xff]
    %v884 = vld [vmem:[#allocation5 + $0xe0] sm:$0xff]
    %v885 = vld [vmem:[#allocation5 + $0xe8] sm:$0xff]
    %v886 = vld [vmem:[#allocation5 + $0xf0] sm:$0xff]
    %v887 = vld [vmem:[#allocation5 + $0xf8] sm:$0xff]
    %v888 = vld [vmem:[#allocation5 + $0x100] sm:$0xff]
    %v889 = vld [vmem:[#allocation5 + $0x108] sm:$0xff]
    %v890 = vld [vmem:[#allocation5 + $0x110] sm:$0xff]
    %v891 = vld [vmem:[#allocation5 + $0x118] sm:$0xff]
    %v892 = vld [vmem:[#allocation5 + $0x120] sm:$0xff]
    %v893 = vld [vmem:[#allocation5 + $0x128] sm:$0xff]
    %v894 = vld [vmem:[#allocation5 + $0x130] sm:$0xff]
    %v895 = vld [vmem:[#allocation5 + $0x138] sm:$0xff]
    %v896 = vld [vmem:[#allocation5 + $0x140] sm:$0xff]
    %v897 = vld [vmem:[#allocation5 + $0x148] sm:$0xff]
    %v898 = vld [vmem:[#allocation5 + $0x150] sm:$0xff]
    %v899 = vld [vmem:[#allocation5 + $0x158] sm:$0xff]
    %v900 = vld [vmem:[#allocation5 + $0x160] sm:$0xff]
    %v901 = vld [vmem:[#allocation5 + $0x168] sm:$0xff]
    %v902 = vld [vmem:[#allocation5 + $0x170] sm:$0xff]
    %v903 = vld [vmem:[#allocation5 + $0x178] sm:$0xff]
    %v904 = vld [vmem:[#allocation5 + $0x180] sm:$0xff]
    %v905 = vld [vmem:[#allocation5 + $0x188] sm:$0xff]
    %v906 = vld [vmem:[#allocation5 + $0x190] sm:$0xff]
    %v907 = vld [vmem:[#allocation5 + $0x198] sm:$0xff]
    %v908 = vld [vmem:[#allocation5 + $0x1a0] sm:$0xff]
    %v909 = vld [vmem:[#allocation5 + $0x1a8] sm:$0xff]
    %v910 = vld [vmem:[#allocation5 + $0x1b0] sm:$0xff]
    %v911 = vld [vmem:[#allocation5 + $0x1b8] sm:$0xff]
    %v912 = vld [vmem:[#allocation5 + $0x1c0] sm:$0xff]
    %v913 = vld [vmem:[#allocation5 + $0x1c8] sm:$0xff]
    %v914 = vld [vmem:[#allocation5 + $0x1d0] sm:$0xff]
    %v915 = vld [vmem:[#allocation5 + $0x1d8] sm:$0xff]
    %v916 = vld [vmem:[#allocation5 + $0x1e0] sm:$0xff]
    %v917 = vld [vmem:[#allocation5 + $0x1e8] sm:$0xff]
    %v918 = vld [vmem:[#allocation5 + $0x1f0] sm:$0xff]
    %v919 = vld [vmem:[#allocation5 + $0x1f8] sm:$0xff]
    %v920 = vld [vmem:[%s10 + $0x4] sm:$0x3]
    %v922 = vlaneseq
    %v923 = vshrl.u32 %v922, 7
    %v924 = vsub.s32 0, %v923
    %v925 = vrot.slane %v920, %v924
    %v926 = vlaneseq
    %v927 = vshrl.u32 %v926, 7
    %v928 = vsub.s32 1, %v927
    %v929 = vrot.slane %v920, %v928
    %v996 = vunpack.c.l.b16 %v856
    %v997 = vunpack.c.h.b16 %v856
    %v998 = vunpack.c.l.b16 %v857
    %v999 = vunpack.c.h.b16 %v857
    %v1000 = vunpack.c.l.b16 %v858
    %v1001 = vunpack.c.h.b16 %v858
    %v1002 = vunpack.c.l.b16 %v859
    %v1003 = vunpack.c.h.b16 %v859
    %v1004 = vunpack.c.l.b16 %v860
    %v1005 = vunpack.c.h.b16 %v860
    %v1006 = vunpack.c.l.b16 %v861
    %v1007 = vunpack.c.h.b16 %v861
    %v1008 = vunpack.c.l.b16 %v862
    %v1009 = vunpack.c.h.b16 %v862
    %v1010 = vunpack.c.l.b16 %v863
    %v1011 = vunpack.c.h.b16 %v863
    %v1012 = vunpack.c.l.b16 %v864
    %v1013 = vunpack.c.h.b16 %v864
    %v1014 = vunpack.c.l.b16 %v865
    %v1015 = vunpack.c.h.b16 %v865
    %v1016 = vunpack.c.l.b16 %v866
    %v1017 = vunpack.c.h.b16 %v866
    %v1018 = vunpack.c.l.b16 %v867
    %v1019 = vunpack.c.h.b16 %v867
    %v1020 = vunpack.c.l.b16 %v868
    %v1021 = vunpack.c.h.b16 %v868
    %v1022 = vunpack.c.l.b16 %v869
    %v1023 = vunpack.c.h.b16 %v869
    %v1024 = vunpack.c.l.b16 %v870
    %v1025 = vunpack.c.h.b16 %v870
    %v1026 = vunpack.c.l.b16 %v871
    %v1027 = vunpack.c.h.b16 %v871
    %v1028 = vunpack.c.l.b16 %v872
    %v1029 = vunpack.c.h.b16 %v872
    %v1030 = vunpack.c.l.b16 %v873
    %v1031 = vunpack.c.h.b16 %v873
    %v1032 = vunpack.c.l.b16 %v874
    %v1033 = vunpack.c.h.b16 %v874
    %v1034 = vunpack.c.l.b16 %v875
    %v1035 = vunpack.c.h.b16 %v875
    %v1036 = vunpack.c.l.b16 %v876
    %v1037 = vunpack.c.h.b16 %v876
    %v1038 = vunpack.c.l.b16 %v877
    %v1039 = vunpack.c.h.b16 %v877
    %v1040 = vunpack.c.l.b16 %v878
    %v1041 = vunpack.c.h.b16 %v878
    %v1042 = vunpack.c.l.b16 %v879
    %v1043 = vunpack.c.h.b16 %v879
    %v1044 = vunpack.c.l.b16 %v880
    %v1045 = vunpack.c.h.b16 %v880
    %v1046 = vunpack.c.l.b16 %v881
    %v1047 = vunpack.c.h.b16 %v881
    %v1048 = vunpack.c.l.b16 %v882
    %v1049 = vunpack.c.h.b16 %v882
    %v1050 = vunpack.c.l.b16 %v883
    %v1051 = vunpack.c.h.b16 %v883
    %v1052 = vunpack.c.l.b16 %v884
    %v1053 = vunpack.c.h.b16 %v884
    %v1054 = vunpack.c.l.b16 %v885
    %v1055 = vunpack.c.h.b16 %v885
    %v1056 = vunpack.c.l.b16 %v886
    %v1057 = vunpack.c.h.b16 %v886
    %v1058 = vunpack.c.l.b16 %v887
    %v1059 = vunpack.c.h.b16 %v887
    %v1060 = vunpack.c.l.b16 %v888
    %v1061 = vunpack.c.h.b16 %v888
    %v1062 = vunpack.c.l.b16 %v889
    %v1063 = vunpack.c.h.b16 %v889
    %v1064 = vunpack.c.l.b16 %v890
    %v1065 = vunpack.c.h.b16 %v890
    %v1066 = vunpack.c.l.b16 %v891
    %v1067 = vunpack.c.h.b16 %v891
    %v1068 = vunpack.c.l.b16 %v892
    %v1069 = vunpack.c.h.b16 %v892
    %v1070 = vunpack.c.l.b16 %v893
    %v1071 = vunpack.c.h.b16 %v893
    %v1072 = vunpack.c.l.b16 %v894
    %v1073 = vunpack.c.h.b16 %v894
    %v1074 = vunpack.c.l.b16 %v895
    %v1075 = vunpack.c.h.b16 %v895
    %v1076 = vunpack.c.l.b16 %v896
    %v1077 = vunpack.c.h.b16 %v896
    %v1078 = vunpack.c.l.b16 %v897
    %v1079 = vunpack.c.h.b16 %v897
    %v1080 = vunpack.c.l.b16 %v898
    %v1081 = vunpack.c.h.b16 %v898
    %v1082 = vunpack.c.l.b16 %v899
    %v1083 = vunpack.c.h.b16 %v899
    %v1084 = vunpack.c.l.b16 %v900
    %v1085 = vunpack.c.h.b16 %v900
    %v1086 = vunpack.c.l.b16 %v901
    %v1087 = vunpack.c.h.b16 %v901
    %v1088 = vunpack.c.l.b16 %v902
    %v1089 = vunpack.c.h.b16 %v902
    %v1090 = vunpack.c.l.b16 %v903
    %v1091 = vunpack.c.h.b16 %v903
    %v1092 = vunpack.c.l.b16 %v904
    %v1093 = vunpack.c.h.b16 %v904
    %v1094 = vunpack.c.l.b16 %v905
    %v1095 = vunpack.c.h.b16 %v905
    %v1096 = vunpack.c.l.b16 %v906
    %v1097 = vunpack.c.h.b16 %v906
    %v1098 = vunpack.c.l.b16 %v907
    %v1099 = vunpack.c.h.b16 %v907
    %v1100 = vunpack.c.l.b16 %v908
    %v1101 = vunpack.c.h.b16 %v908
    %v1102 = vunpack.c.l.b16 %v909
    %v1103 = vunpack.c.h.b16 %v909
    %v1104 = vunpack.c.l.b16 %v910
    %v1105 = vunpack.c.h.b16 %v910
    %v1106 = vunpack.c.l.b16 %v911
    %v1107 = vunpack.c.h.b16 %v911
    %v1108 = vunpack.c.l.b16 %v912
    %v1109 = vunpack.c.h.b16 %v912
    %v1110 = vunpack.c.l.b16 %v913
    %v1111 = vunpack.c.h.b16 %v913
    %v1112 = vunpack.c.l.b16 %v914
    %v1113 = vunpack.c.h.b16 %v914
    %v1114 = vunpack.c.l.b16 %v915
    %v1115 = vunpack.c.h.b16 %v915
    %v1116 = vunpack.c.l.b16 %v916
    %v1117 = vunpack.c.h.b16 %v916
    %v1118 = vunpack.c.l.b16 %v917
    %v1119 = vunpack.c.h.b16 %v917
    %v1120 = vunpack.c.l.b16 %v918
    %v1121 = vunpack.c.h.b16 %v918
    %v1122 = vunpack.c.l.b16 %v919
    %v1123 = vunpack.c.h.b16 %v919
    %v1124 = vpack.c.b16 %v998, %v996
    %v1125 = vpack.c.b16 %v999, %v997
    %v1126 = vpack.c.b16 %v1002, %v1000
    %v1127 = vpack.c.b16 %v1003, %v1001
    %v1128 = vpack.c.b16 %v1006, %v1004
    %v1129 = vpack.c.b16 %v1007, %v1005
    %v1130 = vpack.c.b16 %v1010, %v1008
    %v1131 = vpack.c.b16 %v1011, %v1009
    %v1132 = vpack.c.b16 %v1014, %v1012
    %v1133 = vpack.c.b16 %v1015, %v1013
    %v1134 = vpack.c.b16 %v1018, %v1016
    %v1135 = vpack.c.b16 %v1019, %v1017
    %v1136 = vpack.c.b16 %v1022, %v1020
    %v1137 = vpack.c.b16 %v1023, %v1021
    %v1138 = vpack.c.b16 %v1026, %v1024
    %v1139 = vpack.c.b16 %v1027, %v1025
    %v1140 = vpack.c.b16 %v1030, %v1028
    %v1141 = vpack.c.b16 %v1031, %v1029
    %v1142 = vpack.c.b16 %v1034, %v1032
    %v1143 = vpack.c.b16 %v1035, %v1033
    %v1144 = vpack.c.b16 %v1038, %v1036
    %v1145 = vpack.c.b16 %v1039, %v1037
    %v1146 = vpack.c.b16 %v1042, %v1040
    %v1147 = vpack.c.b16 %v1043, %v1041
    %v1148 = vpack.c.b16 %v1046, %v1044
    %v1149 = vpack.c.b16 %v1047, %v1045
    %v1150 = vpack.c.b16 %v1050, %v1048
    %v1151 = vpack.c.b16 %v1051, %v1049
    %v1152 = vpack.c.b16 %v1054, %v1052
    %v1153 = vpack.c.b16 %v1055, %v1053
    %v1154 = vpack.c.b16 %v1058, %v1056
    %v1155 = vpack.c.b16 %v1059, %v1057
    %v1156 = vpack.c.b16 %v1062, %v1060
    %v1157 = vpack.c.b16 %v1063, %v1061
    %v1158 = vpack.c.b16 %v1066, %v1064
    %v1159 = vpack.c.b16 %v1067, %v1065
    %v1160 = vpack.c.b16 %v1070, %v1068
    %v1161 = vpack.c.b16 %v1071, %v1069
    %v1162 = vpack.c.b16 %v1074, %v1072
    %v1163 = vpack.c.b16 %v1075, %v1073
    %v1164 = vpack.c.b16 %v1078, %v1076
    %v1165 = vpack.c.b16 %v1079, %v1077
    %v1166 = vpack.c.b16 %v1082, %v1080
    %v1167 = vpack.c.b16 %v1083, %v1081
    %v1168 = vpack.c.b16 %v1086, %v1084
    %v1169 = vpack.c.b16 %v1087, %v1085
    %v1170 = vpack.c.b16 %v1090, %v1088
    %v1171 = vpack.c.b16 %v1091, %v1089
    %v1172 = vpack.c.b16 %v1094, %v1092
    %v1173 = vpack.c.b16 %v1095, %v1093
    %v1174 = vpack.c.b16 %v1098, %v1096
    %v1175 = vpack.c.b16 %v1099, %v1097
    %v1176 = vpack.c.b16 %v1102, %v1100
    %v1177 = vpack.c.b16 %v1103, %v1101
    %v1178 = vpack.c.b16 %v1106, %v1104
    %v1179 = vpack.c.b16 %v1107, %v1105
    %v1180 = vpack.c.b16 %v1110, %v1108
    %v1181 = vpack.c.b16 %v1111, %v1109
    %v1182 = vpack.c.b16 %v1114, %v1112
    %v1183 = vpack.c.b16 %v1115, %v1113
    %v1184 = vpack.c.b16 %v1118, %v1116
    %v1185 = vpack.c.b16 %v1119, %v1117
    %v1186 = vpack.c.b16 %v1122, %v1120
    %v1187 = vpack.c.b16 %v1123, %v1121
    %1252 = vmatprep.subr.bf16.mxu0 %v1125
    %1253 = vmatpush1.bf16.msra.mxu0 %v1124
    %1254 = vmatprep.subr.bf16.mxu0 %v1127
    %1255 = vmatpush1.bf16.msra.mxu0 %v1126
    %1256 = vmatprep.subr.bf16.mxu0 %v1129
    %1257 = vmatpush1.bf16.msra.mxu0 %v1128
    %1258 = vmatprep.subr.bf16.mxu0 %v1131
    %1259 = vmatpush1.bf16.msra.mxu0 %v1130
    %1260 = vmatprep.subr.bf16.mxu0 %v1133
    %1261 = vmatpush1.bf16.msra.mxu0 %v1132
    %1262 = vmatprep.subr.bf16.mxu0 %v1135
    %1263 = vmatpush1.bf16.msra.mxu0 %v1134
    %1264 = vmatprep.subr.bf16.mxu0 %v1137
    %1265 = vmatpush1.bf16.msra.mxu0 %v1136
    %1266 = vmatprep.subr.bf16.mxu0 %v1139
    %1267 = vmatpush1.bf16.msra.mxu0 %v1138
    %1268 = vmatprep.subr.bf16.mxu0 %v1141
    %1269 = vmatpush1.bf16.msra.mxu0 %v1140
    %1270 = vmatprep.subr.bf16.mxu0 %v1143
    %1271 = vmatpush1.bf16.msra.mxu0 %v1142
    %1272 = vmatprep.subr.bf16.mxu0 %v1145
    %1273 = vmatpush1.bf16.msra.mxu0 %v1144
    %1274 = vmatprep.subr.bf16.mxu0 %v1147
    %1275 = vmatpush1.bf16.msra.mxu0 %v1146
    %1276 = vmatprep.subr.bf16.mxu0 %v1149
    %1277 = vmatpush1.bf16.msra.mxu0 %v1148
    %1278 = vmatprep.subr.bf16.mxu0 %v1151
    %1279 = vmatpush1.bf16.msra.mxu0 %v1150
    %1280 = vmatprep.subr.bf16.mxu0 %v1153
    %1281 = vmatpush1.bf16.msra.mxu0 %v1152
    %1282 = vmatprep.subr.bf16.mxu0 %v1155
    %1283 = vmatpush1.bf16.msra.mxu0 %v1154
    %1284 = vmatprep.mubr.bf16.mxu0 %v853
    %1285 = vmatmul.mubr.bf16.gmra.mrb[0].mxu0 %v852
    %v1286 = vpop.f32.mrb[0].mxu0
    %v1287 = vadd.f32 %v925, %v1286
    %v1288 = vpop.f32.mrb[0].mxu0
    %v1289 = vadd.f32 %v929, %v1288
    %v1290 = vpop.f32.mrb[0].mxu0
    %v1291 = vpop.f32.mrb[0].mxu0
    %1292 = vdwg.mxu0
    %1293 = vmatprep.subr.bf16.mxu0 %v1157
    %1294 = vmatpush1.bf16.msra.mxu0 %v1156
    %1295 = vmatprep.subr.bf16.mxu0 %v1159
    %1296 = vmatpush1.bf16.msra.mxu0 %v1158
    %1297 = vmatprep.subr.bf16.mxu0 %v1161
    %1298 = vmatpush1.bf16.msra.mxu0 %v1160
    %1299 = vmatprep.subr.bf16.mxu0 %v1163
    %1300 = vmatpush1.bf16.msra.mxu0 %v1162
    %1301 = vmatprep.subr.bf16.mxu0 %v1165
    %1302 = vmatpush1.bf16.msra.mxu0 %v1164
    %1303 = vmatprep.subr.bf16.mxu0 %v1167
    %1304 = vmatpush1.bf16.msra.mxu0 %v1166
    %1305 = vmatprep.subr.bf16.mxu0 %v1169
    %1306 = vmatpush1.bf16.msra.mxu0 %v1168
    %1307 = vmatprep.subr.bf16.mxu0 %v1171
    %1308 = vmatpush1.bf16.msra.mxu0 %v1170
    %1309 = vmatprep.subr.bf16.mxu0 %v1173
    %1310 = vmatpush1.bf16.msra.mxu0 %v1172
    %1311 = vmatprep.subr.bf16.mxu0 %v1175
    %1312 = vmatpush1.bf16.msra.mxu0 %v1174
    %1313 = vmatprep.subr.bf16.mxu0 %v1177
    %1314 = vmatpush1.bf16.msra.mxu0 %v1176
    %1315 = vmatprep.subr.bf16.mxu0 %v1179
    %1316 = vmatpush1.bf16.msra.mxu0 %v1178
    %1317 = vmatprep.subr.bf16.mxu0 %v1181
    %1318 = vmatpush1.bf16.msra.mxu0 %v1180
    %1319 = vmatprep.subr.bf16.mxu0 %v1183
    %1320 = vmatpush1.bf16.msra.mxu0 %v1182
    %1321 = vmatprep.subr.bf16.mxu0 %v1185
    %1322 = vmatpush1.bf16.msra.mxu0 %v1184
    %1323 = vmatprep.subr.bf16.mxu0 %v1187
    %1324 = vmatpush1.bf16.msra.mxu0 %v1186
    %1325 = vmatprep.mubr.bf16.mxu0 %v855
    %1326 = vmatmul.mubr.bf16.gmra.mrb[0].mxu0 %v854
    %v1327 = vpop.f32.mrb[0].mxu0
    %v1328 = vadd.f32 %v1287, %v1327
    %v1329 = vpop.f32.mrb[0].mxu0
    %v1330 = vadd.f32 %v1289, %v1329
    %v1331 = vpop.f32.mrb[0].mxu0
    %v1332 = vpop.f32.mrb[0].mxu0
    %1333 = vdwg.mxu0
    %vm1334 = vcmp.gt.f32.partialorder %v1328, 0.0
    %vm1335 = vcmp.gt.f32.partialorder %v1330, 0.0
    %v1336 = vmul.f32 %v1328, 0.2
    %v1337 = vmul.f32 %v1330, 0.2
    %v1338 = vsel %vm1334, %v1328, %v1336
    %v1339 = vsel %vm1335, %v1330, %v1337
    %v1340 = vpack.c.bf16 %v1338, %v1338
    %v1341 = vpack.c.bf16 %v1339, %v1339
    %v1342 = vld [vmem:[%s5] sm:$0xf]
    %v1343 = vld [vmem:[%s5 + $0x4] sm:$0xf]
    %v1344 = vld [vmem:[%s5 + $0x8] sm:$0xf]
    %v1345 = vld [vmem:[%s5 + $0xc] sm:$0xf]
    %v1346 = vld [vmem:[%s5 + $0x10] sm:$0xf]
    %v1347 = vld [vmem:[%s5 + $0x14] sm:$0xf]
    %v1348 = vld [vmem:[%s5 + $0x18] sm:$0xf]
    %v1349 = vld [vmem:[%s5 + $0x1c] sm:$0xf]
    %v1350 = vld [vmem:[%s5 + $0x20] sm:$0xf]
    %v1351 = vld [vmem:[%s5 + $0x24] sm:$0xf]
    %v1352 = vld [vmem:[%s5 + $0x28] sm:$0xf]
    %v1353 = vld [vmem:[%s5 + $0x2c] sm:$0xf]
    %v1354 = vld [vmem:[%s5 + $0x30] sm:$0xf]
    %v1355 = vld [vmem:[%s5 + $0x34] sm:$0xf]
    %v1356 = vld [vmem:[%s5 + $0x38] sm:$0xf]
    %v1357 = vld [vmem:[%s5 + $0x3c] sm:$0xf]
    %v1358 = vld [vmem:[%s5 + $0x40] sm:$0xf]
    %v1359 = vld [vmem:[%s5 + $0x44] sm:$0xf]
    %v1360 = vld [vmem:[%s5 + $0x48] sm:$0xf]
    %v1361 = vld [vmem:[%s5 + $0x4c] sm:$0xf]
    %v1362 = vld [vmem:[%s5 + $0x50] sm:$0xf]
    %v1363 = vld [vmem:[%s5 + $0x54] sm:$0xf]
    %v1364 = vld [vmem:[%s5 + $0x58] sm:$0xf]
    %v1365 = vld [vmem:[%s5 + $0x5c] sm:$0xf]
    %v1366 = vld [vmem:[%s5 + $0x60] sm:$0xf]
    %v1367 = vld [vmem:[%s5 + $0x64] sm:$0xf]
    %v1368 = vld [vmem:[%s5 + $0x68] sm:$0xf]
    %v1369 = vld [vmem:[%s5 + $0x6c] sm:$0xf]
    %v1370 = vld [vmem:[%s5 + $0x70] sm:$0xf]
    %v1371 = vld [vmem:[%s5 + $0x74] sm:$0xf]
    %v1372 = vld [vmem:[%s5 + $0x78] sm:$0xf]
    %v1373 = vld [vmem:[%s5 + $0x7c] sm:$0xf]
    %v1374 = vld [vmem:[%s10 + $0x6] sm:$0x1]
    %v1376 = vlaneseq
    %v1377 = vshrl.u32 %v1376, 7
    %v1378 = vsub.s32 0, %v1377
    %v1379 = vrot.slane %v1374, %v1378
    %v1413 = vunpack.c.l.b16 %v1342
    %v1414 = vunpack.c.l.b16 %v1343
    %v1415 = vunpack.c.l.b16 %v1344
    %v1416 = vunpack.c.l.b16 %v1345
    %v1417 = vunpack.c.l.b16 %v1346
    %v1418 = vunpack.c.l.b16 %v1347
    %v1419 = vunpack.c.l.b16 %v1348
    %v1420 = vunpack.c.l.b16 %v1349
    %v1421 = vunpack.c.l.b16 %v1350
    %v1422 = vunpack.c.l.b16 %v1351
    %v1423 = vunpack.c.l.b16 %v1352
    %v1424 = vunpack.c.l.b16 %v1353
    %v1425 = vunpack.c.l.b16 %v1354
    %v1426 = vunpack.c.l.b16 %v1355
    %v1427 = vunpack.c.l.b16 %v1356
    %v1428 = vunpack.c.l.b16 %v1357
    %v1429 = vunpack.c.l.b16 %v1358
    %v1430 = vunpack.c.l.b16 %v1359
    %v1431 = vunpack.c.l.b16 %v1360
    %v1432 = vunpack.c.l.b16 %v1361
    %v1433 = vunpack.c.l.b16 %v1362
    %v1434 = vunpack.c.l.b16 %v1363
    %v1435 = vunpack.c.l.b16 %v1364
    %v1436 = vunpack.c.l.b16 %v1365
    %v1437 = vunpack.c.l.b16 %v1366
    %v1438 = vunpack.c.l.b16 %v1367
    %v1439 = vunpack.c.l.b16 %v1368
    %v1440 = vunpack.c.l.b16 %v1369
    %v1441 = vunpack.c.l.b16 %v1370
    %v1442 = vunpack.c.l.b16 %v1371
    %v1443 = vunpack.c.l.b16 %v1372
    %v1444 = vunpack.c.l.b16 %v1373
    %v1445 = vpack.c.b16 %v1414, %v1413
    %v1446 = vpack.c.b16 %v1416, %v1415
    %v1447 = vpack.c.b16 %v1418, %v1417
    %v1448 = vpack.c.b16 %v1420, %v1419
    %v1449 = vpack.c.b16 %v1422, %v1421
    %v1450 = vpack.c.b16 %v1424, %v1423
    %v1451 = vpack.c.b16 %v1426, %v1425
    %v1452 = vpack.c.b16 %v1428, %v1427
    %v1453 = vpack.c.b16 %v1430, %v1429
    %v1454 = vpack.c.b16 %v1432, %v1431
    %v1455 = vpack.c.b16 %v1434, %v1433
    %v1456 = vpack.c.b16 %v1436, %v1435
    %v1457 = vpack.c.b16 %v1438, %v1437
    %v1458 = vpack.c.b16 %v1440, %v1439
    %v1459 = vpack.c.b16 %v1442, %v1441
    %v1460 = vpack.c.b16 %v1444, %v1443
    %1477 = vmatprep.subr.bf16.mxu0 0
    %1478 = vmatpush1.bf16.msra.mxu0 %v1445
    %1479 = vmatprep.subr.bf16.mxu0 0
    %1480 = vmatpush1.bf16.msra.mxu0 %v1446
    %1481 = vmatprep.subr.bf16.mxu0 0
    %1482 = vmatpush1.bf16.msra.mxu0 %v1447
    %1483 = vmatprep.subr.bf16.mxu0 0
    %1484 = vmatpush1.bf16.msra.mxu0 %v1448
    %1485 = vmatprep.subr.bf16.mxu0 0
    %1486 = vmatpush1.bf16.msra.mxu0 %v1449
    %1487 = vmatprep.subr.bf16.mxu0 0
    %1488 = vmatpush1.bf16.msra.mxu0 %v1450
    %1489 = vmatprep.subr.bf16.mxu0 0
    %1490 = vmatpush1.bf16.msra.mxu0 %v1451
    %1491 = vmatprep.subr.bf16.mxu0 0
    %1492 = vmatpush1.bf16.msra.mxu0 %v1452
    %1493 = vmatprep.subr.bf16.mxu0 0
    %1494 = vmatpush1.bf16.msra.mxu0 %v1453
    %1495 = vmatprep.subr.bf16.mxu0 0
    %1496 = vmatpush1.bf16.msra.mxu0 %v1454
    %1497 = vmatprep.subr.bf16.mxu0 0
    %1498 = vmatpush1.bf16.msra.mxu0 %v1455
    %1499 = vmatprep.subr.bf16.mxu0 0
    %1500 = vmatpush1.bf16.msra.mxu0 %v1456
    %1501 = vmatprep.subr.bf16.mxu0 0
    %1502 = vmatpush1.bf16.msra.mxu0 %v1457
    %1503 = vmatprep.subr.bf16.mxu0 0
    %1504 = vmatpush1.bf16.msra.mxu0 %v1458
    %1505 = vmatprep.subr.bf16.mxu0 0
    %1506 = vmatpush1.bf16.msra.mxu0 %v1459
    %1507 = vmatprep.subr.bf16.mxu0 0
    %1508 = vmatpush1.bf16.msra.mxu0 %v1460
    %1509 = vmatprep.mubr.bf16.mxu0 %v1341
    %1510 = vmatmul.mubr.bf16.gmra.mrb[0].mxu0 %v1340
    %v1511 = vpop.f32.mrb[0].mxu0
    %v1512 = vadd.f32 %v1379, %v1511
    %v1513 = vpop.f32.mrb[0].mxu0
    %v1514 = vpop.f32.mrb[0].mxu0
    %v1515 = vpop.f32.mrb[0].mxu0
    %1516 = vdwg.mxu0
    %1517 = vst [vmem:[%s12] sm:$0xff] %v1512
    %v1518 = vld [vmem:[%s1] sm:$0xff]
    %v1519 = vmul.f32 %v1512, %v1518
    %v1520 = vpack.c.bf16 %v1519, %v1519
    %v1521 = vld [vmem:[#allocation7] sm:$0xff]
    %v1522 = vld [vmem:[#allocation7 + $0x8] sm:$0xff]
    %v1523 = vld [vmem:[#allocation7 + $0x10] sm:$0xff]
    %v1524 = vld [vmem:[#allocation7 + $0x18] sm:$0xff]
    %v1525 = vld [vmem:[#allocation7 + $0x20] sm:$0xff]
    %v1526 = vld [vmem:[#allocation7 + $0x28] sm:$0xff]
    %v1527 = vld [vmem:[#allocation7 + $0x30] sm:$0xff]
    %v1528 = vld [vmem:[#allocation7 + $0x38] sm:$0xff]
    %v1529 = vld [vmem:[#allocation7 + $0x40] sm:$0xff]
    %v1530 = vld [vmem:[#allocation7 + $0x48] sm:$0xff]
    %v1531 = vld [vmem:[#allocation7 + $0x50] sm:$0xff]
    %v1532 = vld [vmem:[#allocation7 + $0x58] sm:$0xff]
    %v1533 = vld [vmem:[#allocation7 + $0x60] sm:$0xff]
    %v1534 = vld [vmem:[#allocation7 + $0x68] sm:$0xff]
    %v1535 = vld [vmem:[#allocation7 + $0x70] sm:$0xff]
    %v1536 = vld [vmem:[#allocation7 + $0x78] sm:$0xff]
    %v1537 = vld [vmem:[%s10 + $0x7] sm:$0x3]
    %v1539 = vlaneseq
    %v1540 = vshrl.u32 %v1539, 7
    %v1541 = vsub.s32 0, %v1540
    %v1542 = vrot.slane %v1537, %v1541
    %v1543 = vlaneseq
    %v1544 = vshrl.u32 %v1543, 7
    %v1545 = vsub.s32 1, %v1544
    %v1546 = vrot.slane %v1537, %v1545
    %v1565 = vunpack.c.l.b16 %v1521
    %v1566 = vunpack.c.h.b16 %v1521
    %v1567 = vunpack.c.l.b16 %v1522
    %v1568 = vunpack.c.h.b16 %v1522
    %v1569 = vunpack.c.l.b16 %v1523
    %v1570 = vunpack.c.h.b16 %v1523
    %v1571 = vunpack.c.l.b16 %v1524
    %v1572 = vunpack.c.h.b16 %v1524
    %v1573 = vunpack.c.l.b16 %v1525
    %v1574 = vunpack.c.h.b16 %v1525
    %v1575 = vunpack.c.l.b16 %v1526
    %v1576 = vunpack.c.h.b16 %v1526
    %v1577 = vunpack.c.l.b16 %v1527
    %v1578 = vunpack.c.h.b16 %v1527
    %v1579 = vunpack.c.l.b16 %v1528
    %v1580 = vunpack.c.h.b16 %v1528
    %v1581 = vunpack.c.l.b16 %v1529
    %v1582 = vunpack.c.h.b16 %v1529
    %v1583 = vunpack.c.l.b16 %v1530
    %v1584 = vunpack.c.h.b16 %v1530
    %v1585 = vunpack.c.l.b16 %v1531
    %v1586 = vunpack.c.h.b16 %v1531
    %v1587 = vunpack.c.l.b16 %v1532
    %v1588 = vunpack.c.h.b16 %v1532
    %v1589 = vunpack.c.l.b16 %v1533
    %v1590 = vunpack.c.h.b16 %v1533
    %v1591 = vunpack.c.l.b16 %v1534
    %v1592 = vunpack.c.h.b16 %v1534
    %v1593 = vunpack.c.l.b16 %v1535
    %v1594 = vunpack.c.h.b16 %v1535
    %v1595 = vunpack.c.l.b16 %v1536
    %v1596 = vunpack.c.h.b16 %v1536
    %v1597 = vpack.c.b16 %v1567, %v1565
    %v1598 = vpack.c.b16 %v1568, %v1566
    %v1599 = vpack.c.b16 %v1571, %v1569
    %v1600 = vpack.c.b16 %v1572, %v1570
    %v1601 = vpack.c.b16 %v1575, %v1573
    %v1602 = vpack.c.b16 %v1576, %v1574
    %v1603 = vpack.c.b16 %v1579, %v1577
    %v1604 = vpack.c.b16 %v1580, %v1578
    %v1605 = vpack.c.b16 %v1583, %v1581
    %v1606 = vpack.c.b16 %v1584, %v1582
    %v1607 = vpack.c.b16 %v1587, %v1585
    %v1608 = vpack.c.b16 %v1588, %v1586
    %v1609 = vpack.c.b16 %v1591, %v1589
    %v1610 = vpack.c.b16 %v1592, %v1590
    %v1611 = vpack.c.b16 %v1595, %v1593
    %v1612 = vpack.c.b16 %v1596, %v1594
    %1629 = vmatprep.subr.bf16.mxu0 %v1598
    %1630 = vmatpush1.bf16.msra.mxu0 %v1597
    %1631 = vmatprep.subr.bf16.mxu0 %v1600
    %1632 = vmatpush1.bf16.msra.mxu0 %v1599
    %1633 = vmatprep.subr.bf16.mxu0 %v1602
    %1634 = vmatpush1.bf16.msra.mxu0 %v1601
    %1635 = vmatprep.subr.bf16.mxu0 %v1604
    %1636 = vmatpush1.bf16.msra.mxu0 %v1603
    %1637 = vmatprep.subr.bf16.mxu0 %v1606
    %1638 = vmatpush1.bf16.msra.mxu0 %v1605
    %1639 = vmatprep.subr.bf16.mxu0 %v1608
    %1640 = vmatpush1.bf16.msra.mxu0 %v1607
    %1641 = vmatprep.subr.bf16.mxu0 %v1610
    %1642 = vmatpush1.bf16.msra.mxu0 %v1609
    %1643 = vmatprep.subr.bf16.mxu0 %v1612
    %1644 = vmatpush1.bf16.msra.mxu0 %v1611
    %1645 = vmatprep.subr.bf16.mxu0 0
    %1646 = vmatpush1.bf16.msra.mxu0 0
    %1647 = vmatprep.subr.bf16.mxu0 0
    %1648 = vmatpush1.bf16.msra.mxu0 0
    %1649 = vmatprep.subr.bf16.mxu0 0
    %1650 = vmatpush1.bf16.msra.mxu0 0
    %1651 = vmatprep.subr.bf16.mxu0 0
    %1652 = vmatpush1.bf16.msra.mxu0 0
    %1653 = vmatprep.subr.bf16.mxu0 0
    %1654 = vmatpush1.bf16.msra.mxu0 0
    %1655 = vmatprep.subr.bf16.mxu0 0
    %1656 = vmatpush1.bf16.msra.mxu0 0
    %1657 = vmatprep.subr.bf16.mxu0 0
    %1658 = vmatpush1.bf16.msra.mxu0 0
    %1659 = vmatprep.subr.bf16.mxu0 0
    %1660 = vmatpush1.bf16.msra.mxu0 0
    %1661 = vmatprep.mubr.bf16.mxu0 0
    %1662 = vmatmul.mubr.bf16.gmra.mrb[0].mxu0 %v1520
    %v1663 = vpop.f32.mrb[0].mxu0
    %v1664 = vadd.f32 %v1542, %v1663
    %v1665 = vpop.f32.mrb[0].mxu0
    %v1666 = vadd.f32 %v1546, %v1665
    %v1667 = vpop.f32.mrb[0].mxu0
    %v1668 = vpop.f32.mrb[0].mxu0
    %1669 = vdwg.mxu0
    %vm1670 = vcmp.gt.f32.partialorder %v1664, 0.0
    %vm1671 = vcmp.gt.f32.partialorder %v1666, 0.0
    %v1672 = vmul.f32 %v1664, 0.2
    %v1673 = vmul.f32 %v1666, 0.2
    %v1674 = vsel %vm1670, %v1664, %v1672
    %v1675 = vsel %vm1671, %v1666, %v1673
    %v1676 = vpack.c.bf16 %v1674, %v1674
    %v1677 = vpack.c.bf16 %v1675, %v1675
    %v1678 = vld [vmem:[#allocation8] sm:$0xff]
    %v1679 = vld [vmem:[#allocation8 + $0x8] sm:$0xff]
    %v1680 = vld [vmem:[#allocation8 + $0x10] sm:$0xff]
    %v1681 = vld [vmem:[#allocation8 + $0x18] sm:$0xff]
    %v1682 = vld [vmem:[#allocation8 + $0x20] sm:$0xff]
    %v1683 = vld [vmem:[#allocation8 + $0x28] sm:$0xff]
    %v1684 = vld [vmem:[#allocation8 + $0x30] sm:$0xff]
    %v1685 = vld [vmem:[#allocation8 + $0x38] sm:$0xff]
    %v1686 = vld [vmem:[#allocation8 + $0x40] sm:$0xff]
    %v1687 = vld [vmem:[#allocation8 + $0x48] sm:$0xff]
    %v1688 = vld [vmem:[#allocation8 + $0x50] sm:$0xff]
    %v1689 = vld [vmem:[#allocation8 + $0x58] sm:$0xff]
    %v1690 = vld [vmem:[#allocation8 + $0x60] sm:$0xff]
    %v1691 = vld [vmem:[#allocation8 + $0x68] sm:$0xff]
    %v1692 = vld [vmem:[#allocation8 + $0x70] sm:$0xff]
    %v1693 = vld [vmem:[#allocation8 + $0x78] sm:$0xff]
    %v1694 = vld [vmem:[#allocation8 + $0x80] sm:$0xff]
    %v1695 = vld [vmem:[#allocation8 + $0x88] sm:$0xff]
    %v1696 = vld [vmem:[#allocation8 + $0x90] sm:$0xff]
    %v1697 = vld [vmem:[#allocation8 + $0x98] sm:$0xff]
    %v1698 = vld [vmem:[#allocation8 + $0xa0] sm:$0xff]
    %v1699 = vld [vmem:[#allocation8 + $0xa8] sm:$0xff]
    %v1700 = vld [vmem:[#allocation8 + $0xb0] sm:$0xff]
    %v1701 = vld [vmem:[#allocation8 + $0xb8] sm:$0xff]
    %v1702 = vld [vmem:[#allocation8 + $0xc0] sm:$0xff]
    %v1703 = vld [vmem:[#allocation8 + $0xc8] sm:$0xff]
    %v1704 = vld [vmem:[#allocation8 + $0xd0] sm:$0xff]
    %v1705 = vld [vmem:[#allocation8 + $0xd8] sm:$0xff]
    %v1706 = vld [vmem:[#allocation8 + $0xe0] sm:$0xff]
    %v1707 = vld [vmem:[#allocation8 + $0xe8] sm:$0xff]
    %v1708 = vld [vmem:[#allocation8 + $0xf0] sm:$0xff]
    %v1709 = vld [vmem:[#allocation8 + $0xf8] sm:$0xff]
    %v1710 = vld [vmem:[#allocation8 + $0x100] sm:$0xff]
    %v1711 = vld [vmem:[#allocation8 + $0x108] sm:$0xff]
    %v1712 = vld [vmem:[#allocation8 + $0x110] sm:$0xff]
    %v1713 = vld [vmem:[#allocation8 + $0x118] sm:$0xff]
    %v1714 = vld [vmem:[#allocation8 + $0x120] sm:$0xff]
    %v1715 = vld [vmem:[#allocation8 + $0x128] sm:$0xff]
    %v1716 = vld [vmem:[#allocation8 + $0x130] sm:$0xff]
    %v1717 = vld [vmem:[#allocation8 + $0x138] sm:$0xff]
    %v1718 = vld [vmem:[#allocation8 + $0x140] sm:$0xff]
    %v1719 = vld [vmem:[#allocation8 + $0x148] sm:$0xff]
    %v1720 = vld [vmem:[#allocation8 + $0x150] sm:$0xff]
    %v1721 = vld [vmem:[#allocation8 + $0x158] sm:$0xff]
    %v1722 = vld [vmem:[#allocation8 + $0x160] sm:$0xff]
    %v1723 = vld [vmem:[#allocation8 + $0x168] sm:$0xff]
    %v1724 = vld [vmem:[#allocation8 + $0x170] sm:$0xff]
    %v1725 = vld [vmem:[#allocation8 + $0x178] sm:$0xff]
    %v1726 = vld [vmem:[#allocation8 + $0x180] sm:$0xff]
    %v1727 = vld [vmem:[#allocation8 + $0x188] sm:$0xff]
    %v1728 = vld [vmem:[#allocation8 + $0x190] sm:$0xff]
    %v1729 = vld [vmem:[#allocation8 + $0x198] sm:$0xff]
    %v1730 = vld [vmem:[#allocation8 + $0x1a0] sm:$0xff]
    %v1731 = vld [vmem:[#allocation8 + $0x1a8] sm:$0xff]
    %v1732 = vld [vmem:[#allocation8 + $0x1b0] sm:$0xff]
    %v1733 = vld [vmem:[#allocation8 + $0x1b8] sm:$0xff]
    %v1734 = vld [vmem:[#allocation8 + $0x1c0] sm:$0xff]
    %v1735 = vld [vmem:[#allocation8 + $0x1c8] sm:$0xff]
    %v1736 = vld [vmem:[#allocation8 + $0x1d0] sm:$0xff]
    %v1737 = vld [vmem:[#allocation8 + $0x1d8] sm:$0xff]
    %v1738 = vld [vmem:[#allocation8 + $0x1e0] sm:$0xff]
    %v1739 = vld [vmem:[#allocation8 + $0x1e8] sm:$0xff]
    %v1740 = vld [vmem:[#allocation8 + $0x1f0] sm:$0xff]
    %v1741 = vld [vmem:[#allocation8 + $0x1f8] sm:$0xff]
    %v1742 = vld [vmem:[%s10 + $0x9] sm:$0xf]
    %v1744 = vlaneseq
    %v1745 = vshrl.u32 %v1744, 7
    %v1746 = vsub.s32 0, %v1745
    %v1747 = vrot.slane %v1742, %v1746
    %v1748 = vlaneseq
    %v1749 = vshrl.u32 %v1748, 7
    %v1750 = vsub.s32 1, %v1749
    %v1751 = vrot.slane %v1742, %v1750
    %v1752 = vlaneseq
    %v1753 = vshrl.u32 %v1752, 7
    %v1754 = vsub.s32 2, %v1753
    %v1755 = vrot.slane %v1742, %v1754
    %v1756 = vlaneseq
    %v1757 = vshrl.u32 %v1756, 7
    %v1758 = vsub.s32 3, %v1757
    %v1759 = vrot.slane %v1742, %v1758
    %v1828 = vunpack.c.l.b16 %v1678
    %v1829 = vunpack.c.h.b16 %v1678
    %v1830 = vunpack.c.l.b16 %v1679
    %v1831 = vunpack.c.h.b16 %v1679
    %v1832 = vunpack.c.l.b16 %v1680
    %v1833 = vunpack.c.h.b16 %v1680
    %v1834 = vunpack.c.l.b16 %v1681
    %v1835 = vunpack.c.h.b16 %v1681
    %v1836 = vunpack.c.l.b16 %v1682
    %v1837 = vunpack.c.h.b16 %v1682
    %v1838 = vunpack.c.l.b16 %v1683
    %v1839 = vunpack.c.h.b16 %v1683
    %v1840 = vunpack.c.l.b16 %v1684
    %v1841 = vunpack.c.h.b16 %v1684
    %v1842 = vunpack.c.l.b16 %v1685
    %v1843 = vunpack.c.h.b16 %v1685
    %v1844 = vunpack.c.l.b16 %v1686
    %v1845 = vunpack.c.h.b16 %v1686
    %v1846 = vunpack.c.l.b16 %v1687
    %v1847 = vunpack.c.h.b16 %v1687
    %v1848 = vunpack.c.l.b16 %v1688
    %v1849 = vunpack.c.h.b16 %v1688
    %v1850 = vunpack.c.l.b16 %v1689
    %v1851 = vunpack.c.h.b16 %v1689
    %v1852 = vunpack.c.l.b16 %v1690
    %v1853 = vunpack.c.h.b16 %v1690
    %v1854 = vunpack.c.l.b16 %v1691
    %v1855 = vunpack.c.h.b16 %v1691
    %v1856 = vunpack.c.l.b16 %v1692
    %v1857 = vunpack.c.h.b16 %v1692
    %v1858 = vunpack.c.l.b16 %v1693
    %v1859 = vunpack.c.h.b16 %v1693
    %v1860 = vunpack.c.l.b16 %v1694
    %v1861 = vunpack.c.h.b16 %v1694
    %v1862 = vunpack.c.l.b16 %v1695
    %v1863 = vunpack.c.h.b16 %v1695
    %v1864 = vunpack.c.l.b16 %v1696
    %v1865 = vunpack.c.h.b16 %v1696
    %v1866 = vunpack.c.l.b16 %v1697
    %v1867 = vunpack.c.h.b16 %v1697
    %v1868 = vunpack.c.l.b16 %v1698
    %v1869 = vunpack.c.h.b16 %v1698
    %v1870 = vunpack.c.l.b16 %v1699
    %v1871 = vunpack.c.h.b16 %v1699
    %v1872 = vunpack.c.l.b16 %v1700
    %v1873 = vunpack.c.h.b16 %v1700
    %v1874 = vunpack.c.l.b16 %v1701
    %v1875 = vunpack.c.h.b16 %v1701
    %v1876 = vunpack.c.l.b16 %v1702
    %v1877 = vunpack.c.h.b16 %v1702
    %v1878 = vunpack.c.l.b16 %v1703
    %v1879 = vunpack.c.h.b16 %v1703
    %v1880 = vunpack.c.l.b16 %v1704
    %v1881 = vunpack.c.h.b16 %v1704
    %v1882 = vunpack.c.l.b16 %v1705
    %v1883 = vunpack.c.h.b16 %v1705
    %v1884 = vunpack.c.l.b16 %v1706
    %v1885 = vunpack.c.h.b16 %v1706
    %v1886 = vunpack.c.l.b16 %v1707
    %v1887 = vunpack.c.h.b16 %v1707
    %v1888 = vunpack.c.l.b16 %v1708
    %v1889 = vunpack.c.h.b16 %v1708
    %v1890 = vunpack.c.l.b16 %v1709
    %v1891 = vunpack.c.h.b16 %v1709
    %v1892 = vunpack.c.l.b16 %v1710
    %v1893 = vunpack.c.h.b16 %v1710
    %v1894 = vunpack.c.l.b16 %v1711
    %v1895 = vunpack.c.h.b16 %v1711
    %v1896 = vunpack.c.l.b16 %v1712
    %v1897 = vunpack.c.h.b16 %v1712
    %v1898 = vunpack.c.l.b16 %v1713
    %v1899 = vunpack.c.h.b16 %v1713
    %v1900 = vunpack.c.l.b16 %v1714
    %v1901 = vunpack.c.h.b16 %v1714
    %v1902 = vunpack.c.l.b16 %v1715
    %v1903 = vunpack.c.h.b16 %v1715
    %v1904 = vunpack.c.l.b16 %v1716
    %v1905 = vunpack.c.h.b16 %v1716
    %v1906 = vunpack.c.l.b16 %v1717
    %v1907 = vunpack.c.h.b16 %v1717
    %v1908 = vunpack.c.l.b16 %v1718
    %v1909 = vunpack.c.h.b16 %v1718
    %v1910 = vunpack.c.l.b16 %v1719
    %v1911 = vunpack.c.h.b16 %v1719
    %v1912 = vunpack.c.l.b16 %v1720
    %v1913 = vunpack.c.h.b16 %v1720
    %v1914 = vunpack.c.l.b16 %v1721
    %v1915 = vunpack.c.h.b16 %v1721
    %v1916 = vunpack.c.l.b16 %v1722
    %v1917 = vunpack.c.h.b16 %v1722
    %v1918 = vunpack.c.l.b16 %v1723
    %v1919 = vunpack.c.h.b16 %v1723
    %v1920 = vunpack.c.l.b16 %v1724
    %v1921 = vunpack.c.h.b16 %v1724
    %v1922 = vunpack.c.l.b16 %v1725
    %v1923 = vunpack.c.h.b16 %v1725
    %v1924 = vunpack.c.l.b16 %v1726
    %v1925 = vunpack.c.h.b16 %v1726
    %v1926 = vunpack.c.l.b16 %v1727
    %v1927 = vunpack.c.h.b16 %v1727
    %v1928 = vunpack.c.l.b16 %v1728
    %v1929 = vunpack.c.h.b16 %v1728
    %v1930 = vunpack.c.l.b16 %v1729
    %v1931 = vunpack.c.h.b16 %v1729
    %v1932 = vunpack.c.l.b16 %v1730
    %v1933 = vunpack.c.h.b16 %v1730
    %v1934 = vunpack.c.l.b16 %v1731
    %v1935 = vunpack.c.h.b16 %v1731
    %v1936 = vunpack.c.l.b16 %v1732
    %v1937 = vunpack.c.h.b16 %v1732
    %v1938 = vunpack.c.l.b16 %v1733
    %v1939 = vunpack.c.h.b16 %v1733
    %v1940 = vunpack.c.l.b16 %v1734
    %v1941 = vunpack.c.h.b16 %v1734
    %v1942 = vunpack.c.l.b16 %v1735
    %v1943 = vunpack.c.h.b16 %v1735
    %v1944 = vunpack.c.l.b16 %v1736
    %v1945 = vunpack.c.h.b16 %v1736
    %v1946 = vunpack.c.l.b16 %v1737
    %v1947 = vunpack.c.h.b16 %v1737
    %v1948 = vunpack.c.l.b16 %v1738
    %v1949 = vunpack.c.h.b16 %v1738
    %v1950 = vunpack.c.l.b16 %v1739
    %v1951 = vunpack.c.h.b16 %v1739
    %v1952 = vunpack.c.l.b16 %v1740
    %v1953 = vunpack.c.h.b16 %v1740
    %v1954 = vunpack.c.l.b16 %v1741
    %v1955 = vunpack.c.h.b16 %v1741
    %v1956 = vpack.c.b16 %v1832, %v1828
    %v1957 = vpack.c.b16 %v1833, %v1829
    %v1958 = vpack.c.b16 %v1834, %v1830
    %v1959 = vpack.c.b16 %v1835, %v1831
    %v1960 = vpack.c.b16 %v1840, %v1836
    %v1961 = vpack.c.b16 %v1841, %v1837
    %v1962 = vpack.c.b16 %v1842, %v1838
    %v1963 = vpack.c.b16 %v1843, %v1839
    %v1964 = vpack.c.b16 %v1848, %v1844
    %v1965 = vpack.c.b16 %v1849, %v1845
    %v1966 = vpack.c.b16 %v1850, %v1846
    %v1967 = vpack.c.b16 %v1851, %v1847
    %v1968 = vpack.c.b16 %v1856, %v1852
    %v1969 = vpack.c.b16 %v1857, %v1853
    %v1970 = vpack.c.b16 %v1858, %v1854
    %v1971 = vpack.c.b16 %v1859, %v1855
    %v1972 = vpack.c.b16 %v1864, %v1860
    %v1973 = vpack.c.b16 %v1865, %v1861
    %v1974 = vpack.c.b16 %v1866, %v1862
    %v1975 = vpack.c.b16 %v1867, %v1863
    %v1976 = vpack.c.b16 %v1872, %v1868
    %v1977 = vpack.c.b16 %v1873, %v1869
    %v1978 = vpack.c.b16 %v1874, %v1870
    %v1979 = vpack.c.b16 %v1875, %v1871
    %v1980 = vpack.c.b16 %v1880, %v1876
    %v1981 = vpack.c.b16 %v1881, %v1877
    %v1982 = vpack.c.b16 %v1882, %v1878
    %v1983 = vpack.c.b16 %v1883, %v1879
    %v1984 = vpack.c.b16 %v1888, %v1884
    %v1985 = vpack.c.b16 %v1889, %v1885
    %v1986 = vpack.c.b16 %v1890, %v1886
    %v1987 = vpack.c.b16 %v1891, %v1887
    %v1988 = vpack.c.b16 %v1896, %v1892
    %v1989 = vpack.c.b16 %v1897, %v1893
    %v1990 = vpack.c.b16 %v1898, %v1894
    %v1991 = vpack.c.b16 %v1899, %v1895
    %v1992 = vpack.c.b16 %v1904, %v1900
    %v1993 = vpack.c.b16 %v1905, %v1901
    %v1994 = vpack.c.b16 %v1906, %v1902
    %v1995 = vpack.c.b16 %v1907, %v1903
    %v1996 = vpack.c.b16 %v1912, %v1908
    %v1997 = vpack.c.b16 %v1913, %v1909
    %v1998 = vpack.c.b16 %v1914, %v1910
    %v1999 = vpack.c.b16 %v1915, %v1911
    %v2000 = vpack.c.b16 %v1920, %v1916
    %v2001 = vpack.c.b16 %v1921, %v1917
    %v2002 = vpack.c.b16 %v1922, %v1918
    %v2003 = vpack.c.b16 %v1923, %v1919
    %v2004 = vpack.c.b16 %v1928, %v1924
    %v2005 = vpack.c.b16 %v1929, %v1925
    %v2006 = vpack.c.b16 %v1930, %v1926
    %v2007 = vpack.c.b16 %v1931, %v1927
    %v2008 = vpack.c.b16 %v1936, %v1932
    %v2009 = vpack.c.b16 %v1937, %v1933
    %v2010 = vpack.c.b16 %v1938, %v1934
    %v2011 = vpack.c.b16 %v1939, %v1935
    %v2012 = vpack.c.b16 %v1944, %v1940
    %v2013 = vpack.c.b16 %v1945, %v1941
    %v2014 = vpack.c.b16 %v1946, %v1942
    %v2015 = vpack.c.b16 %v1947, %v1943
    %v2016 = vpack.c.b16 %v1952, %v1948
    %v2017 = vpack.c.b16 %v1953, %v1949
    %v2018 = vpack.c.b16 %v1954, %v1950
    %v2019 = vpack.c.b16 %v1955, %v1951
    %2084 = vmatprep.subr.bf16.mxu0 %v1957
    %2085 = vmatpush1.bf16.msra.mxu0 %v1956
    %2086 = vmatprep.subr.bf16.mxu0 %v1961
    %2087 = vmatpush1.bf16.msra.mxu0 %v1960
    %2088 = vmatprep.subr.bf16.mxu0 %v1965
    %2089 = vmatpush1.bf16.msra.mxu0 %v1964
    %2090 = vmatprep.subr.bf16.mxu0 %v1969
    %2091 = vmatpush1.bf16.msra.mxu0 %v1968
    %2092 = vmatprep.subr.bf16.mxu0 %v1973
    %2093 = vmatpush1.bf16.msra.mxu0 %v1972
    %2094 = vmatprep.subr.bf16.mxu0 %v1977
    %2095 = vmatpush1.bf16.msra.mxu0 %v1976
    %2096 = vmatprep.subr.bf16.mxu0 %v1981
    %2097 = vmatpush1.bf16.msra.mxu0 %v1980
    %2098 = vmatprep.subr.bf16.mxu0 %v1985
    %2099 = vmatpush1.bf16.msra.mxu0 %v1984
    %2100 = vmatprep.subr.bf16.mxu0 %v1989
    %2101 = vmatpush1.bf16.msra.mxu0 %v1988
    %2102 = vmatprep.subr.bf16.mxu0 %v1993
    %2103 = vmatpush1.bf16.msra.mxu0 %v1992
    %2104 = vmatprep.subr.bf16.mxu0 %v1997
    %2105 = vmatpush1.bf16.msra.mxu0 %v1996
    %2106 = vmatprep.subr.bf16.mxu0 %v2001
    %2107 = vmatpush1.bf16.msra.mxu0 %v2000
    %2108 = vmatprep.subr.bf16.mxu0 %v2005
    %2109 = vmatpush1.bf16.msra.mxu0 %v2004
    %2110 = vmatprep.subr.bf16.mxu0 %v2009
    %2111 = vmatpush1.bf16.msra.mxu0 %v2008
    %2112 = vmatprep.subr.bf16.mxu0 %v2013
    %2113 = vmatpush1.bf16.msra.mxu0 %v2012
    %2114 = vmatprep.subr.bf16.mxu0 %v2017
    %2115 = vmatpush1.bf16.msra.mxu0 %v2016
    %2116 = vmatprep.mubr.bf16.mxu0 %v1677
    %2117 = vmatmul.mubr.bf16.gmra.mrb[0].mxu0 %v1676
    %v2118 = vpop.f32.mrb[0].mxu0
    %v2119 = vadd.f32 %v1747, %v2118
    %v2120 = vpop.f32.mrb[0].mxu0
    %v2121 = vadd.f32 %v1751, %v2120
    %v2122 = vpop.f32.mrb[0].mxu0
    %v2123 = vpop.f32.mrb[0].mxu0
    %2124 = vdwg.mxu0
    %2125 = vmatprep.subr.bf16.mxu0 %v1959
    %2126 = vmatpush1.bf16.msra.mxu0 %v1958
    %2127 = vmatprep.subr.bf16.mxu0 %v1963
    %2128 = vmatpush1.bf16.msra.mxu0 %v1962
    %2129 = vmatprep.subr.bf16.mxu0 %v1967
    %2130 = vmatpush1.bf16.msra.mxu0 %v1966
    %2131 = vmatprep.subr.bf16.mxu0 %v1971
    %2132 = vmatpush1.bf16.msra.mxu0 %v1970
    %2133 = vmatprep.subr.bf16.mxu0 %v1975
    %2134 = vmatpush1.bf16.msra.mxu0 %v1974
    %2135 = vmatprep.subr.bf16.mxu0 %v1979
    %2136 = vmatpush1.bf16.msra.mxu0 %v1978
    %2137 = vmatprep.subr.bf16.mxu0 %v1983
    %2138 = vmatpush1.bf16.msra.mxu0 %v1982
    %2139 = vmatprep.subr.bf16.mxu0 %v1987
    %2140 = vmatpush1.bf16.msra.mxu0 %v1986
    %2141 = vmatprep.subr.bf16.mxu0 %v1991
    %2142 = vmatpush1.bf16.msra.mxu0 %v1990
    %2143 = vmatprep.subr.bf16.mxu0 %v1995
    %2144 = vmatpush1.bf16.msra.mxu0 %v1994
    %2145 = vmatprep.subr.bf16.mxu0 %v1999
    %2146 = vmatpush1.bf16.msra.mxu0 %v1998
    %2147 = vmatprep.subr.bf16.mxu0 %v2003
    %2148 = vmatpush1.bf16.msra.mxu0 %v2002
    %2149 = vmatprep.subr.bf16.mxu0 %v2007
    %2150 = vmatpush1.bf16.msra.mxu0 %v2006
    %2151 = vmatprep.subr.bf16.mxu0 %v2011
    %2152 = vmatpush1.bf16.msra.mxu0 %v2010
    %2153 = vmatprep.subr.bf16.mxu0 %v2015
    %2154 = vmatpush1.bf16.msra.mxu0 %v2014
    %2155 = vmatprep.subr.bf16.mxu0 %v2019
    %2156 = vmatpush1.bf16.msra.mxu0 %v2018
    %2157 = vmatprep.mubr.bf16.mxu0 %v1677
    %2158 = vmatmul.mubr.bf16.gmra.mrb[0].mxu0 %v1676
    %v2159 = vpop.f32.mrb[0].mxu0
    %v2160 = vadd.f32 %v1755, %v2159
    %v2161 = vpop.f32.mrb[0].mxu0
    %v2162 = vadd.f32 %v1759, %v2161
    %v2163 = vpop.f32.mrb[0].mxu0
    %v2164 = vpop.f32.mrb[0].mxu0
    %2165 = vdwg.mxu0
    %vm2166 = vcmp.gt.f32.partialorder %v2119, 0.0
    %vm2167 = vcmp.gt.f32.partialorder %v2121, 0.0
    %vm2168 = vcmp.gt.f32.partialorder %v2160, 0.0
    %vm2169 = vcmp.gt.f32.partialorder %v2162, 0.0
    %v2170 = vmul.f32 %v2119, 0.2
    %v2171 = vmul.f32 %v2121, 0.2
    %v2172 = vmul.f32 %v2160, 0.2
    %v2173 = vmul.f32 %v2162, 0.2
    %v2174 = vsel %vm2166, %v2119, %v2170
    %v2175 = vsel %vm2167, %v2121, %v2171
    %v2176 = vsel %vm2168, %v2160, %v2172
    %v2177 = vsel %vm2169, %v2162, %v2173
    %v2178 = vpack.c.bf16 %v2174, %v2174
    %v2179 = vpack.c.bf16 %v2175, %v2175
    %v2180 = vpack.c.bf16 %v2176, %v2176
    %v2181 = vpack.c.bf16 %v2177, %v2177
    %v2182 = vld [vmem:[#allocation10] sm:$0xff]
    %v2183 = vld [vmem:[#allocation10 + $0x8] sm:$0xff]
    %v2184 = vld [vmem:[#allocation10 + $0x10] sm:$0xff]
    %v2185 = vld [vmem:[#allocation10 + $0x18] sm:$0xff]
    %v2186 = vld [vmem:[#allocation10 + $0x20] sm:$0xff]
    %v2187 = vld [vmem:[#allocation10 + $0x28] sm:$0xff]
    %v2188 = vld [vmem:[#allocation10 + $0x30] sm:$0xff]
    %v2189 = vld [vmem:[#allocation10 + $0x38] sm:$0xff]
    %v2190 = vld [vmem:[#allocation10 + $0x40] sm:$0xff]
    %v2191 = vld [vmem:[#allocation10 + $0x48] sm:$0xff]
    %v2192 = vld [vmem:[#allocation10 + $0x50] sm:$0xff]
    %v2193 = vld [vmem:[#allocation10 + $0x58] sm:$0xff]
    %v2194 = vld [vmem:[#allocation10 + $0x60] sm:$0xff]
    %v2195 = vld [vmem:[#allocation10 + $0x68] sm:$0xff]
    %v2196 = vld [vmem:[#allocation10 + $0x70] sm:$0xff]
    %v2197 = vld [vmem:[#allocation10 + $0x78] sm:$0xff]
    %v2198 = vld [vmem:[#allocation10 + $0x80] sm:$0xff]
    %v2199 = vld [vmem:[#allocation10 + $0x88] sm:$0xff]
    %v2200 = vld [vmem:[#allocation10 + $0x90] sm:$0xff]
    %v2201 = vld [vmem:[#allocation10 + $0x98] sm:$0xff]
    %v2202 = vld [vmem:[#allocation10 + $0xa0] sm:$0xff]
    %v2203 = vld [vmem:[#allocation10 + $0xa8] sm:$0xff]
    %v2204 = vld [vmem:[#allocation10 + $0xb0] sm:$0xff]
    %v2205 = vld [vmem:[#allocation10 + $0xb8] sm:$0xff]
    %v2206 = vld [vmem:[#allocation10 + $0xc0] sm:$0xff]
    %v2207 = vld [vmem:[#allocation10 + $0xc8] sm:$0xff]
    %v2208 = vld [vmem:[#allocation10 + $0xd0] sm:$0xff]
    %v2209 = vld [vmem:[#allocation10 + $0xd8] sm:$0xff]
    %v2210 = vld [vmem:[#allocation10 + $0xe0] sm:$0xff]
    %v2211 = vld [vmem:[#allocation10 + $0xe8] sm:$0xff]
    %v2212 = vld [vmem:[#allocation10 + $0xf0] sm:$0xff]
    %v2213 = vld [vmem:[#allocation10 + $0xf8] sm:$0xff]
    %v2214 = vld [vmem:[#allocation10 + $0x100] sm:$0xff]
    %v2215 = vld [vmem:[#allocation10 + $0x108] sm:$0xff]
    %v2216 = vld [vmem:[#allocation10 + $0x110] sm:$0xff]
    %v2217 = vld [vmem:[#allocation10 + $0x118] sm:$0xff]
    %v2218 = vld [vmem:[#allocation10 + $0x120] sm:$0xff]
    %v2219 = vld [vmem:[#allocation10 + $0x128] sm:$0xff]
    %v2220 = vld [vmem:[#allocation10 + $0x130] sm:$0xff]
    %v2221 = vld [vmem:[#allocation10 + $0x138] sm:$0xff]
    %v2222 = vld [vmem:[#allocation10 + $0x140] sm:$0xff]
    %v2223 = vld [vmem:[#allocation10 + $0x148] sm:$0xff]
    %v2224 = vld [vmem:[#allocation10 + $0x150] sm:$0xff]
    %v2225 = vld [vmem:[#allocation10 + $0x158] sm:$0xff]
    %v2226 = vld [vmem:[#allocation10 + $0x160] sm:$0xff]
    %v2227 = vld [vmem:[#allocation10 + $0x168] sm:$0xff]
    %v2228 = vld [vmem:[#allocation10 + $0x170] sm:$0xff]
    %v2229 = vld [vmem:[#allocation10 + $0x178] sm:$0xff]
    %v2230 = vld [vmem:[#allocation10 + $0x180] sm:$0xff]
    %v2231 = vld [vmem:[#allocation10 + $0x188] sm:$0xff]
    %v2232 = vld [vmem:[#allocation10 + $0x190] sm:$0xff]
    %v2233 = vld [vmem:[#allocation10 + $0x198] sm:$0xff]
    %v2234 = vld [vmem:[#allocation10 + $0x1a0] sm:$0xff]
    %v2235 = vld [vmem:[#allocation10 + $0x1a8] sm:$0xff]
    %v2236 = vld [vmem:[#allocation10 + $0x1b0] sm:$0xff]
    %v2237 = vld [vmem:[#allocation10 + $0x1b8] sm:$0xff]
    %v2238 = vld [vmem:[#allocation10 + $0x1c0] sm:$0xff]
    %v2239 = vld [vmem:[#allocation10 + $0x1c8] sm:$0xff]
    %v2240 = vld [vmem:[#allocation10 + $0x1d0] sm:$0xff]
    %v2241 = vld [vmem:[#allocation10 + $0x1d8] sm:$0xff]
    %v2242 = vld [vmem:[#allocation10 + $0x1e0] sm:$0xff]
    %v2243 = vld [vmem:[#allocation10 + $0x1e8] sm:$0xff]
    %v2244 = vld [vmem:[#allocation10 + $0x1f0] sm:$0xff]
    %v2245 = vld [vmem:[#allocation10 + $0x1f8] sm:$0xff]
    %v2246 = vld [vmem:[#allocation10 + $0x200] sm:$0xff]
    %v2247 = vld [vmem:[#allocation10 + $0x208] sm:$0xff]
    %v2248 = vld [vmem:[#allocation10 + $0x210] sm:$0xff]
    %v2249 = vld [vmem:[#allocation10 + $0x218] sm:$0xff]
    %v2250 = vld [vmem:[#allocation10 + $0x220] sm:$0xff]
    %v2251 = vld [vmem:[#allocation10 + $0x228] sm:$0xff]
    %v2252 = vld [vmem:[#allocation10 + $0x230] sm:$0xff]
    %v2253 = vld [vmem:[#allocation10 + $0x238] sm:$0xff]
    %v2254 = vld [vmem:[#allocation10 + $0x240] sm:$0xff]
    %v2255 = vld [vmem:[#allocation10 + $0x248] sm:$0xff]
    %v2256 = vld [vmem:[#allocation10 + $0x250] sm:$0xff]
    %v2257 = vld [vmem:[#allocation10 + $0x258] sm:$0xff]
    %v2258 = vld [vmem:[#allocation10 + $0x260] sm:$0xff]
    %v2259 = vld [vmem:[#allocation10 + $0x268] sm:$0xff]
    %v2260 = vld [vmem:[#allocation10 + $0x270] sm:$0xff]
    %v2261 = vld [vmem:[#allocation10 + $0x278] sm:$0xff]
    %v2262 = vld [vmem:[#allocation10 + $0x280] sm:$0xff]
    %v2263 = vld [vmem:[#allocation10 + $0x288] sm:$0xff]
    %v2264 = vld [vmem:[#allocation10 + $0x290] sm:$0xff]
    %v2265 = vld [vmem:[#allocation10 + $0x298] sm:$0xff]
    %v2266 = vld [vmem:[#allocation10 + $0x2a0] sm:$0xff]
    %v2267 = vld [vmem:[#allocation10 + $0x2a8] sm:$0xff]
    %v2268 = vld [vmem:[#allocation10 + $0x2b0] sm:$0xff]
    %v2269 = vld [vmem:[#allocation10 + $0x2b8] sm:$0xff]
    %v2270 = vld [vmem:[#allocation10 + $0x2c0] sm:$0xff]
    %v2271 = vld [vmem:[#allocation10 + $0x2c8] sm:$0xff]
    %v2272 = vld [vmem:[#allocation10 + $0x2d0] sm:$0xff]
    %v2273 = vld [vmem:[#allocation10 + $0x2d8] sm:$0xff]
    %v2274 = vld [vmem:[#allocation10 + $0x2e0] sm:$0xff]
    %v2275 = vld [vmem:[#allocation10 + $0x2e8] sm:$0xff]
    %v2276 = vld [vmem:[#allocation10 + $0x2f0] sm:$0xff]
    %v2277 = vld [vmem:[#allocation10 + $0x2f8] sm:$0xff]
    %v2278 = vld [vmem:[#allocation10 + $0x300] sm:$0xff]
    %v2279 = vld [vmem:[#allocation10 + $0x308] sm:$0xff]
    %v2280 = vld [vmem:[#allocation10 + $0x310] sm:$0xff]
    %v2281 = vld [vmem:[#allocation10 + $0x318] sm:$0xff]
    %v2282 = vld [vmem:[#allocation10 + $0x320] sm:$0xff]
    %v2283 = vld [vmem:[#allocation10 + $0x328] sm:$0xff]
    %v2284 = vld [vmem:[#allocation10 + $0x330] sm:$0xff]
    %v2285 = vld [vmem:[#allocation10 + $0x338] sm:$0xff]
    %v2286 = vld [vmem:[#allocation10 + $0x340] sm:$0xff]
    %v2287 = vld [vmem:[#allocation10 + $0x348] sm:$0xff]
    %v2288 = vld [vmem:[#allocation10 + $0x350] sm:$0xff]
    %v2289 = vld [vmem:[#allocation10 + $0x358] sm:$0xff]
    %v2290 = vld [vmem:[#allocation10 + $0x360] sm:$0xff]
    %v2291 = vld [vmem:[#allocation10 + $0x368] sm:$0xff]
    %v2292 = vld [vmem:[#allocation10 + $0x370] sm:$0xff]
    %v2293 = vld [vmem:[#allocation10 + $0x378] sm:$0xff]
    %v2294 = vunpack.c.l.s8.bf16 %v2182
    %v2295 = vunpack.c.l.s8.bf16 %v2183
    %v2296 = vunpack.c.l.s8.bf16 %v2184
    %v2297 = vunpack.c.l.s8.bf16 %v2185
    %v2298 = vunpack.c.l.s8.bf16 %v2186
    %v2299 = vunpack.c.l.s8.bf16 %v2187
    %v2300 = vunpack.c.l.s8.bf16 %v2188
    %v2301 = vunpack.c.h.s8.bf16 %v2182
    %v2302 = vunpack.c.h.s8.bf16 %v2183
    %v2303 = vunpack.c.h.s8.bf16 %v2184
    %v2304 = vunpack.c.h.s8.bf16 %v2185
    %v2305 = vunpack.c.h.s8.bf16 %v2186
    %v2306 = vunpack.c.h.s8.bf16 %v2187
    %v2307 = vunpack.c.h.s8.bf16 %v2188
    %v2308 = vunpack.c.l.s8.bf16 %v2189
    %v2309 = vunpack.c.l.s8.bf16 %v2190
    %v2310 = vunpack.c.l.s8.bf16 %v2191
    %v2311 = vunpack.c.l.s8.bf16 %v2192
    %v2312 = vunpack.c.l.s8.bf16 %v2193
    %v2313 = vunpack.c.l.s8.bf16 %v2194
    %v2314 = vunpack.c.l.s8.bf16 %v2195
    %v2315 = vunpack.c.h.s8.bf16 %v2189
    %v2316 = vunpack.c.h.s8.bf16 %v2190
    %v2317 = vunpack.c.h.s8.bf16 %v2191
    %v2318 = vunpack.c.h.s8.bf16 %v2192
    %v2319 = vunpack.c.h.s8.bf16 %v2193
    %v2320 = vunpack.c.h.s8.bf16 %v2194
    %v2321 = vunpack.c.h.s8.bf16 %v2195
    %v2322 = vunpack.c.l.s8.bf16 %v2196
    %v2323 = vunpack.c.l.s8.bf16 %v2197
    %v2324 = vunpack.c.l.s8.bf16 %v2198
    %v2325 = vunpack.c.l.s8.bf16 %v2199
    %v2326 = vunpack.c.l.s8.bf16 %v2200
    %v2327 = vunpack.c.l.s8.bf16 %v2201
    %v2328 = vunpack.c.l.s8.bf16 %v2202
    %v2329 = vunpack.c.h.s8.bf16 %v2196
    %v2330 = vunpack.c.h.s8.bf16 %v2197
    %v2331 = vunpack.c.h.s8.bf16 %v2198
    %v2332 = vunpack.c.h.s8.bf16 %v2199
    %v2333 = vunpack.c.h.s8.bf16 %v2200
    %v2334 = vunpack.c.h.s8.bf16 %v2201
    %v2335 = vunpack.c.h.s8.bf16 %v2202
    %v2336 = vunpack.c.l.s8.bf16 %v2203
    %v2337 = vunpack.c.l.s8.bf16 %v2204
    %v2338 = vunpack.c.l.s8.bf16 %v2205
    %v2339 = vunpack.c.l.s8.bf16 %v2206
    %v2340 = vunpack.c.l.s8.bf16 %v2207
    %v2341 = vunpack.c.l.s8.bf16 %v2208
    %v2342 = vunpack.c.l.s8.bf16 %v2209
    %v2343 = vunpack.c.h.s8.bf16 %v2203
    %v2344 = vunpack.c.h.s8.bf16 %v2204
    %v2345 = vunpack.c.h.s8.bf16 %v2205
    %v2346 = vunpack.c.h.s8.bf16 %v2206
    %v2347 = vunpack.c.h.s8.bf16 %v2207
    %v2348 = vunpack.c.h.s8.bf16 %v2208
    %v2349 = vunpack.c.h.s8.bf16 %v2209
    %v2350 = vunpack.c.l.s8.bf16 %v2210
    %v2351 = vunpack.c.l.s8.bf16 %v2211
    %v2352 = vunpack.c.l.s8.bf16 %v2212
    %v2353 = vunpack.c.l.s8.bf16 %v2213
    %v2354 = vunpack.c.l.s8.bf16 %v2214
    %v2355 = vunpack.c.l.s8.bf16 %v2215
    %v2356 = vunpack.c.l.s8.bf16 %v2216
    %v2357 = vunpack.c.h.s8.bf16 %v2210
    %v2358 = vunpack.c.h.s8.bf16 %v2211
    %v2359 = vunpack.c.h.s8.bf16 %v2212
    %v2360 = vunpack.c.h.s8.bf16 %v2213
    %v2361 = vunpack.c.h.s8.bf16 %v2214
    %v2362 = vunpack.c.h.s8.bf16 %v2215
    %v2363 = vunpack.c.h.s8.bf16 %v2216
    %v2364 = vunpack.c.l.s8.bf16 %v2217
    %v2365 = vunpack.c.l.s8.bf16 %v2218
    %v2366 = vunpack.c.l.s8.bf16 %v2219
    %v2367 = vunpack.c.l.s8.bf16 %v2220
    %v2368 = vunpack.c.l.s8.bf16 %v2221
    %v2369 = vunpack.c.l.s8.bf16 %v2222
    %v2370 = vunpack.c.l.s8.bf16 %v2223
    %v2371 = vunpack.c.h.s8.bf16 %v2217
    %v2372 = vunpack.c.h.s8.bf16 %v2218
    %v2373 = vunpack.c.h.s8.bf16 %v2219
    %v2374 = vunpack.c.h.s8.bf16 %v2220
    %v2375 = vunpack.c.h.s8.bf16 %v2221
    %v2376 = vunpack.c.h.s8.bf16 %v2222
    %v2377 = vunpack.c.h.s8.bf16 %v2223
    %v2378 = vunpack.c.l.s8.bf16 %v2224
    %v2379 = vunpack.c.l.s8.bf16 %v2225
    %v2380 = vunpack.c.l.s8.bf16 %v2226
    %v2381 = vunpack.c.l.s8.bf16 %v2227
    %v2382 = vunpack.c.l.s8.bf16 %v2228
    %v2383 = vunpack.c.l.s8.bf16 %v2229
    %v2384 = vunpack.c.l.s8.bf16 %v2230
    %v2385 = vunpack.c.h.s8.bf16 %v2224
    %v2386 = vunpack.c.h.s8.bf16 %v2225
    %v2387 = vunpack.c.h.s8.bf16 %v2226
    %v2388 = vunpack.c.h.s8.bf16 %v2227
    %v2389 = vunpack.c.h.s8.bf16 %v2228
    %v2390 = vunpack.c.h.s8.bf16 %v2229
    %v2391 = vunpack.c.h.s8.bf16 %v2230
    %v2392 = vunpack.c.l.s8.bf16 %v2231
    %v2393 = vunpack.c.l.s8.bf16 %v2232
    %v2394 = vunpack.c.l.s8.bf16 %v2233
    %v2395 = vunpack.c.l.s8.bf16 %v2234
    %v2396 = vunpack.c.l.s8.bf16 %v2235
    %v2397 = vunpack.c.l.s8.bf16 %v2236
    %v2398 = vunpack.c.l.s8.bf16 %v2237
    %v2399 = vunpack.c.h.s8.bf16 %v2231
    %v2400 = vunpack.c.h.s8.bf16 %v2232
    %v2401 = vunpack.c.h.s8.bf16 %v2233
    %v2402 = vunpack.c.h.s8.bf16 %v2234
    %v2403 = vunpack.c.h.s8.bf16 %v2235
    %v2404 = vunpack.c.h.s8.bf16 %v2236
    %v2405 = vunpack.c.h.s8.bf16 %v2237
    %v2406 = vunpack.c.l.s8.bf16 %v2238
    %v2407 = vunpack.c.l.s8.bf16 %v2239
    %v2408 = vunpack.c.l.s8.bf16 %v2240
    %v2409 = vunpack.c.l.s8.bf16 %v2241
    %v2410 = vunpack.c.l.s8.bf16 %v2242
    %v2411 = vunpack.c.l.s8.bf16 %v2243
    %v2412 = vunpack.c.l.s8.bf16 %v2244
    %v2413 = vunpack.c.h.s8.bf16 %v2238
    %v2414 = vunpack.c.h.s8.bf16 %v2239
    %v2415 = vunpack.c.h.s8.bf16 %v2240
    %v2416 = vunpack.c.h.s8.bf16 %v2241
    %v2417 = vunpack.c.h.s8.bf16 %v2242
    %v2418 = vunpack.c.h.s8.bf16 %v2243
    %v2419 = vunpack.c.h.s8.bf16 %v2244
    %v2420 = vunpack.c.l.s8.bf16 %v2245
    %v2421 = vunpack.c.l.s8.bf16 %v2246
    %v2422 = vunpack.c.l.s8.bf16 %v2247
    %v2423 = vunpack.c.l.s8.bf16 %v2248
    %v2424 = vunpack.c.l.s8.bf16 %v2249
    %v2425 = vunpack.c.l.s8.bf16 %v2250
    %v2426 = vunpack.c.l.s8.bf16 %v2251
    %v2427 = vunpack.c.h.s8.bf16 %v2245
    %v2428 = vunpack.c.h.s8.bf16 %v2246
    %v2429 = vunpack.c.h.s8.bf16 %v2247
    %v2430 = vunpack.c.h.s8.bf16 %v2248
    %v2431 = vunpack.c.h.s8.bf16 %v2249
    %v2432 = vunpack.c.h.s8.bf16 %v2250
    %v2433 = vunpack.c.h.s8.bf16 %v2251
    %v2434 = vunpack.c.l.s8.bf16 %v2252
    %v2435 = vunpack.c.l.s8.bf16 %v2253
    %v2436 = vunpack.c.l.s8.bf16 %v2254
    %v2437 = vunpack.c.l.s8.bf16 %v2255
    %v2438 = vunpack.c.l.s8.bf16 %v2256
    %v2439 = vunpack.c.l.s8.bf16 %v2257
    %v2440 = vunpack.c.l.s8.bf16 %v2258
    %v2441 = vunpack.c.h.s8.bf16 %v2252
    %v2442 = vunpack.c.h.s8.bf16 %v2253
    %v2443 = vunpack.c.h.s8.bf16 %v2254
    %v2444 = vunpack.c.h.s8.bf16 %v2255
    %v2445 = vunpack.c.h.s8.bf16 %v2256
    %v2446 = vunpack.c.h.s8.bf16 %v2257
    %v2447 = vunpack.c.h.s8.bf16 %v2258
    %v2448 = vunpack.c.l.s8.bf16 %v2259
    %v2449 = vunpack.c.l.s8.bf16 %v2260
    %v2450 = vunpack.c.l.s8.bf16 %v2261
    %v2451 = vunpack.c.l.s8.bf16 %v2262
    %v2452 = vunpack.c.l.s8.bf16 %v2263
    %v2453 = vunpack.c.l.s8.bf16 %v2264
    %v2454 = vunpack.c.l.s8.bf16 %v2265
    %v2455 = vunpack.c.h.s8.bf16 %v2259
    %v2456 = vunpack.c.h.s8.bf16 %v2260
    %v2457 = vunpack.c.h.s8.bf16 %v2261
    %v2458 = vunpack.c.h.s8.bf16 %v2262
    %v2459 = vunpack.c.h.s8.bf16 %v2263
    %v2460 = vunpack.c.h.s8.bf16 %v2264
    %v2461 = vunpack.c.h.s8.bf16 %v2265
    %v2462 = vunpack.c.l.s8.bf16 %v2266
    %v2463 = vunpack.c.l.s8.bf16 %v2267
    %v2464 = vunpack.c.l.s8.bf16 %v2268
    %v2465 = vunpack.c.l.s8.bf16 %v2269
    %v2466 = vunpack.c.l.s8.bf16 %v2270
    %v2467 = vunpack.c.l.s8.bf16 %v2271
    %v2468 = vunpack.c.l.s8.bf16 %v2272
    %v2469 = vunpack.c.h.s8.bf16 %v2266
    %v2470 = vunpack.c.h.s8.bf16 %v2267
    %v2471 = vunpack.c.h.s8.bf16 %v2268
    %v2472 = vunpack.c.h.s8.bf16 %v2269
    %v2473 = vunpack.c.h.s8.bf16 %v2270
    %v2474 = vunpack.c.h.s8.bf16 %v2271
    %v2475 = vunpack.c.h.s8.bf16 %v2272
    %v2476 = vunpack.c.l.s8.bf16 %v2273
    %v2477 = vunpack.c.l.s8.bf16 %v2274
    %v2478 = vunpack.c.l.s8.bf16 %v2275
    %v2479 = vunpack.c.l.s8.bf16 %v2276
    %v2480 = vunpack.c.l.s8.bf16 %v2277
    %v2481 = vunpack.c.l.s8.bf16 %v2278
    %v2482 = vunpack.c.l.s8.bf16 %v2279
    %v2483 = vunpack.c.h.s8.bf16 %v2273
    %v2484 = vunpack.c.h.s8.bf16 %v2274
    %v2485 = vunpack.c.h.s8.bf16 %v2275
    %v2486 = vunpack.c.h.s8.bf16 %v2276
    %v2487 = vunpack.c.h.s8.bf16 %v2277
    %v2488 = vunpack.c.h.s8.bf16 %v2278
    %v2489 = vunpack.c.h.s8.bf16 %v2279
    %v2490 = vunpack.c.l.s8.bf16 %v2280
    %v2491 = vunpack.c.l.s8.bf16 %v2281
    %v2492 = vunpack.c.l.s8.bf16 %v2282
    %v2493 = vunpack.c.l.s8.bf16 %v2283
    %v2494 = vunpack.c.l.s8.bf16 %v2284
    %v2495 = vunpack.c.l.s8.bf16 %v2285
    %v2496 = vunpack.c.l.s8.bf16 %v2286
    %v2497 = vunpack.c.h.s8.bf16 %v2280
    %v2498 = vunpack.c.h.s8.bf16 %v2281
    %v2499 = vunpack.c.h.s8.bf16 %v2282
    %v2500 = vunpack.c.h.s8.bf16 %v2283
    %v2501 = vunpack.c.h.s8.bf16 %v2284
    %v2502 = vunpack.c.h.s8.bf16 %v2285
    %v2503 = vunpack.c.h.s8.bf16 %v2286
    %v2504 = vunpack.c.l.s8.bf16 %v2287
    %v2505 = vunpack.c.l.s8.bf16 %v2288
    %v2506 = vunpack.c.l.s8.bf16 %v2289
    %v2507 = vunpack.c.l.s8.bf16 %v2290
    %v2508 = vunpack.c.l.s8.bf16 %v2291
    %v2509 = vunpack.c.l.s8.bf16 %v2292
    %v2510 = vunpack.c.l.s8.bf16 %v2293
    %v2511 = vunpack.c.h.s8.bf16 %v2287
    %v2512 = vunpack.c.h.s8.bf16 %v2288
    %v2513 = vunpack.c.h.s8.bf16 %v2289
    %v2514 = vunpack.c.h.s8.bf16 %v2290
    %v2515 = vunpack.c.h.s8.bf16 %v2291
    %v2516 = vunpack.c.h.s8.bf16 %v2292
    %v2517 = vunpack.c.h.s8.bf16 %v2293
    %2518 = vmatprep.subr.bf16.mxu0 %v2295
    %2519 = vmatpush1.bf16.msra.mxu0 %v2294
    %2520 = vmatprep.subr.bf16.mxu0 %v2302
    %2521 = vmatpush1.bf16.msra.mxu0 %v2301
    %2522 = vmatprep.subr.bf16.mxu0 %v2309
    %2523 = vmatpush1.bf16.msra.mxu0 %v2308
    %2524 = vmatprep.subr.bf16.mxu0 %v2316
    %2525 = vmatpush1.bf16.msra.mxu0 %v2315
    %2526 = vmatprep.subr.bf16.mxu0 %v2323
    %2527 = vmatpush1.bf16.msra.mxu0 %v2322
    %2528 = vmatprep.subr.bf16.mxu0 %v2330
    %2529 = vmatpush1.bf16.msra.mxu0 %v2329
    %2530 = vmatprep.subr.bf16.mxu0 %v2337
    %2531 = vmatpush1.bf16.msra.mxu0 %v2336
    %2532 = vmatprep.subr.bf16.mxu0 %v2344
    %2533 = vmatpush1.bf16.msra.mxu0 %v2343
    %2534 = vmatprep.subr.bf16.mxu0 %v2351
    %2535 = vmatpush1.bf16.msra.mxu0 %v2350
    %2536 = vmatprep.subr.bf16.mxu0 %v2358
    %2537 = vmatpush1.bf16.msra.mxu0 %v2357
    %2538 = vmatprep.subr.bf16.mxu0 %v2365
    %2539 = vmatpush1.bf16.msra.mxu0 %v2364
    %2540 = vmatprep.subr.bf16.mxu0 %v2372
    %2541 = vmatpush1.bf16.msra.mxu0 %v2371
    %2542 = vmatprep.subr.bf16.mxu0 %v2379
    %2543 = vmatpush1.bf16.msra.mxu0 %v2378
    %2544 = vmatprep.subr.bf16.mxu0 %v2386
    %2545 = vmatpush1.bf16.msra.mxu0 %v2385
    %2546 = vmatprep.subr.bf16.mxu0 %v2393
    %2547 = vmatpush1.bf16.msra.mxu0 %v2392
    %2548 = vmatprep.subr.bf16.mxu0 %v2400
    %2549 = vmatpush1.bf16.msra.mxu0 %v2399
    %2550 = vmatprep.mubr.bf16.mxu0 %v2179
    %2551 = vmatmul.mubr.bf16.gmra.mrb[0].mxu0 %v2178
    %v2552 = vpop.f32.mrb[0].mxu0
    %v2553 = vadd.f32 0.0, %v2552
    %v2554 = vpop.f32.mrb[0].mxu0
    %v2555 = vadd.f32 0.0, %v2554
    %v2556 = vpop.f32.mrb[0].mxu0
    %v2557 = vpop.f32.mrb[0].mxu0
    %2558 = vdwg.mxu0
    %2559 = vmatprep.subr.bf16.mxu0 %v2407
    %2560 = vmatpush1.bf16.msra.mxu0 %v2406
    %2561 = vmatprep.subr.bf16.mxu0 %v2414
    %2562 = vmatpush1.bf16.msra.mxu0 %v2413
    %2563 = vmatprep.subr.bf16.mxu0 %v2421
    %2564 = vmatpush1.bf16.msra.mxu0 %v2420
    %2565 = vmatprep.subr.bf16.mxu0 %v2428
    %2566 = vmatpush1.bf16.msra.mxu0 %v2427
    %2567 = vmatprep.subr.bf16.mxu0 %v2435
    %2568 = vmatpush1.bf16.msra.mxu0 %v2434
    %2569 = vmatprep.subr.bf16.mxu0 %v2442
    %2570 = vmatpush1.bf16.msra.mxu0 %v2441
    %2571 = vmatprep.subr.bf16.mxu0 %v2449
    %2572 = vmatpush1.bf16.msra.mxu0 %v2448
    %2573 = vmatprep.subr.bf16.mxu0 %v2456
    %2574 = vmatpush1.bf16.msra.mxu0 %v2455
    %2575 = vmatprep.subr.bf16.mxu0 %v2463
    %2576 = vmatpush1.bf16.msra.mxu0 %v2462
    %2577 = vmatprep.subr.bf16.mxu0 %v2470
    %2578 = vmatpush1.bf16.msra.mxu0 %v2469
    %2579 = vmatprep.subr.bf16.mxu0 %v2477
    %2580 = vmatpush1.bf16.msra.mxu0 %v2476
    %2581 = vmatprep.subr.bf16.mxu0 %v2484
    %2582 = vmatpush1.bf16.msra.mxu0 %v2483
    %2583 = vmatprep.subr.bf16.mxu0 %v2491
    %2584 = vmatpush1.bf16.msra.mxu0 %v2490
    %2585 = vmatprep.subr.bf16.mxu0 %v2498
    %2586 = vmatpush1.bf16.msra.mxu0 %v2497
    %2587 = vmatprep.subr.bf16.mxu0 %v2505
    %2588 = vmatpush1.bf16.msra.mxu0 %v2504
    %2589 = vmatprep.subr.bf16.mxu0 %v2512
    %2590 = vmatpush1.bf16.msra.mxu0 %v2511
    %2591 = vmatprep.mubr.bf16.mxu0 %v2181
    %2592 = vmatmul.mubr.bf16.gmra.mrb[0].mxu0 %v2180
    %v2593 = vpop.f32.mrb[0].mxu0
    %v2594 = vadd.f32 %v2553, %v2593
    %v2595 = vpop.f32.mrb[0].mxu0
    %v2596 = vadd.f32 %v2555, %v2595
    %v2597 = vpop.f32.mrb[0].mxu0
    %v2598 = vpop.f32.mrb[0].mxu0
    %2599 = vdwg.mxu0
    %2600 = vmatprep.subr.bf16.mxu0 %v2297
    %2601 = vmatpush1.bf16.msra.mxu0 %v2296
    %2602 = vmatprep.subr.bf16.mxu0 %v2304
    %2603 = vmatpush1.bf16.msra.mxu0 %v2303
    %2604 = vmatprep.subr.bf16.mxu0 %v2311
    %2605 = vmatpush1.bf16.msra.mxu0 %v2310
    %2606 = vmatprep.subr.bf16.mxu0 %v2318
    %2607 = vmatpush1.bf16.msra.mxu0 %v2317
    %2608 = vmatprep.subr.bf16.mxu0 %v2325
    %2609 = vmatpush1.bf16.msra.mxu0 %v2324
    %2610 = vmatprep.subr.bf16.mxu0 %v2332
    %2611 = vmatpush1.bf16.msra.mxu0 %v2331
    %2612 = vmatprep.subr.bf16.mxu0 %v2339
    %2613 = vmatpush1.bf16.msra.mxu0 %v2338
    %2614 = vmatprep.subr.bf16.mxu0 %v2346
    %2615 = vmatpush1.bf16.msra.mxu0 %v2345
    %2616 = vmatprep.subr.bf16.mxu0 %v2353
    %2617 = vmatpush1.bf16.msra.mxu0 %v2352
    %2618 = vmatprep.subr.bf16.mxu0 %v2360
    %2619 = vmatpush1.bf16.msra.mxu0 %v2359
    %2620 = vmatprep.subr.bf16.mxu0 %v2367
    %2621 = vmatpush1.bf16.msra.mxu0 %v2366
    %2622 = vmatprep.subr.bf16.mxu0 %v2374
    %2623 = vmatpush1.bf16.msra.mxu0 %v2373
    %2624 = vmatprep.subr.bf16.mxu0 %v2381
    %2625 = vmatpush1.bf16.msra.mxu0 %v2380
    %2626 = vmatprep.subr.bf16.mxu0 %v2388
    %2627 = vmatpush1.bf16.msra.mxu0 %v2387
    %2628 = vmatprep.subr.bf16.mxu0 %v2395
    %2629 = vmatpush1.bf16.msra.mxu0 %v2394
    %2630 = vmatprep.subr.bf16.mxu0 %v2402
    %2631 = vmatpush1.bf16.msra.mxu0 %v2401
    %2632 = vmatprep.mubr.bf16.mxu0 %v2179
    %2633 = vmatmul.mubr.bf16.gmra.mrb[0].mxu0 %v2178
    %v2634 = vpop.f32.mrb[0].mxu0
    %v2635 = vadd.f32 0.0, %v2634
    %v2636 = vpop.f32.mrb[0].mxu0
    %v2637 = vadd.f32 0.0, %v2636
    %v2638 = vpop.f32.mrb[0].mxu0
    %v2639 = vpop.f32.mrb[0].mxu0
    %2640 = vdwg.mxu0
    %2641 = vmatprep.subr.bf16.mxu0 %v2409
    %2642 = vmatpush1.bf16.msra.mxu0 %v2408
    %2643 = vmatprep.subr.bf16.mxu0 %v2416
    %2644 = vmatpush1.bf16.msra.mxu0 %v2415
    %2645 = vmatprep.subr.bf16.mxu0 %v2423
    %2646 = vmatpush1.bf16.msra.mxu0 %v2422
    %2647 = vmatprep.subr.bf16.mxu0 %v2430
    %2648 = vmatpush1.bf16.msra.mxu0 %v2429
    %2649 = vmatprep.subr.bf16.mxu0 %v2437
    %2650 = vmatpush1.bf16.msra.mxu0 %v2436
    %2651 = vmatprep.subr.bf16.mxu0 %v2444
    %2652 = vmatpush1.bf16.msra.mxu0 %v2443
    %2653 = vmatprep.subr.bf16.mxu0 %v2451
    %2654 = vmatpush1.bf16.msra.mxu0 %v2450
    %2655 = vmatprep.subr.bf16.mxu0 %v2458
    %2656 = vmatpush1.bf16.msra.mxu0 %v2457
    %2657 = vmatprep.subr.bf16.mxu0 %v2465
    %2658 = vmatpush1.bf16.msra.mxu0 %v2464
    %2659 = vmatprep.subr.bf16.mxu0 %v2472
    %2660 = vmatpush1.bf16.msra.mxu0 %v2471
    %2661 = vmatprep.subr.bf16.mxu0 %v2479
    %2662 = vmatpush1.bf16.msra.mxu0 %v2478
    %2663 = vmatprep.subr.bf16.mxu0 %v2486
    %2664 = vmatpush1.bf16.msra.mxu0 %v2485
    %2665 = vmatprep.subr.bf16.mxu0 %v2493
    %2666 = vmatpush1.bf16.msra.mxu0 %v2492
    %2667 = vmatprep.subr.bf16.mxu0 %v2500
    %2668 = vmatpush1.bf16.msra.mxu0 %v2499
    %2669 = vmatprep.subr.bf16.mxu0 %v2507
    %2670 = vmatpush1.bf16.msra.mxu0 %v2506
    %2671 = vmatprep.subr.bf16.mxu0 %v2514
    %2672 = vmatpush1.bf16.msra.mxu0 %v2513
    %2673 = vmatprep.mubr.bf16.mxu0 %v2181
    %2674 = vmatmul.mubr.bf16.gmra.mrb[0].mxu0 %v2180
    %v2675 = vpop.f32.mrb[0].mxu0
    %v2676 = vadd.f32 %v2635, %v2675
    %v2677 = vpop.f32.mrb[0].mxu0
    %v2678 = vadd.f32 %v2637, %v2677
    %v2679 = vpop.f32.mrb[0].mxu0
    %v2680 = vpop.f32.mrb[0].mxu0
    %2681 = vdwg.mxu0
    %2682 = vmatprep.subr.bf16.mxu0 %v2299
    %2683 = vmatpush1.bf16.msra.mxu0 %v2298
    %2684 = vmatprep.subr.bf16.mxu0 %v2306
    %2685 = vmatpush1.bf16.msra.mxu0 %v2305
    %2686 = vmatprep.subr.bf16.mxu0 %v2313
    %2687 = vmatpush1.bf16.msra.mxu0 %v2312
    %2688 = vmatprep.subr.bf16.mxu0 %v2320
    %2689 = vmatpush1.bf16.msra.mxu0 %v2319
    %2690 = vmatprep.subr.bf16.mxu0 %v2327
    %2691 = vmatpush1.bf16.msra.mxu0 %v2326
    %2692 = vmatprep.subr.bf16.mxu0 %v2334
    %2693 = vmatpush1.bf16.msra.mxu0 %v2333
    %2694 = vmatprep.subr.bf16.mxu0 %v2341
    %2695 = vmatpush1.bf16.msra.mxu0 %v2340
    %2696 = vmatprep.subr.bf16.mxu0 %v2348
    %2697 = vmatpush1.bf16.msra.mxu0 %v2347
    %2698 = vmatprep.subr.bf16.mxu0 %v2355
    %2699 = vmatpush1.bf16.msra.mxu0 %v2354
    %2700 = vmatprep.subr.bf16.mxu0 %v2362
    %2701 = vmatpush1.bf16.msra.mxu0 %v2361
    %2702 = vmatprep.subr.bf16.mxu0 %v2369
    %2703 = vmatpush1.bf16.msra.mxu0 %v2368
    %2704 = vmatprep.subr.bf16.mxu0 %v2376
    %2705 = vmatpush1.bf16.msra.mxu0 %v2375
    %2706 = vmatprep.subr.bf16.mxu0 %v2383
    %2707 = vmatpush1.bf16.msra.mxu0 %v2382
    %2708 = vmatprep.subr.bf16.mxu0 %v2390
    %2709 = vmatpush1.bf16.msra.mxu0 %v2389
    %2710 = vmatprep.subr.bf16.mxu0 %v2397
    %2711 = vmatpush1.bf16.msra.mxu0 %v2396
    %2712 = vmatprep.subr.bf16.mxu0 %v2404
    %2713 = vmatpush1.bf16.msra.mxu0 %v2403
    %2714 = vmatprep.mubr.bf16.mxu0 %v2179
    %2715 = vmatmul.mubr.bf16.gmra.mrb[0].mxu0 %v2178
    %v2716 = vpop.f32.mrb[0].mxu0
    %v2717 = vadd.f32 0.0, %v2716
    %v2718 = vpop.f32.mrb[0].mxu0
    %v2719 = vadd.f32 0.0, %v2718
    %v2720 = vpop.f32.mrb[0].mxu0
    %v2721 = vpop.f32.mrb[0].mxu0
    %2722 = vdwg.mxu0
    %2723 = vmatprep.subr.bf16.mxu0 %v2411
    %2724 = vmatpush1.bf16.msra.mxu0 %v2410
    %2725 = vmatprep.subr.bf16.mxu0 %v2418
    %2726 = vmatpush1.bf16.msra.mxu0 %v2417
    %2727 = vmatprep.subr.bf16.mxu0 %v2425
    %2728 = vmatpush1.bf16.msra.mxu0 %v2424
    %2729 = vmatprep.subr.bf16.mxu0 %v2432
    %2730 = vmatpush1.bf16.msra.mxu0 %v2431
    %2731 = vmatprep.subr.bf16.mxu0 %v2439
    %2732 = vmatpush1.bf16.msra.mxu0 %v2438
    %2733 = vmatprep.subr.bf16.mxu0 %v2446
    %2734 = vmatpush1.bf16.msra.mxu0 %v2445
    %2735 = vmatprep.subr.bf16.mxu0 %v2453
    %2736 = vmatpush1.bf16.msra.mxu0 %v2452
    %2737 = vmatprep.subr.bf16.mxu0 %v2460
    %2738 = vmatpush1.bf16.msra.mxu0 %v2459
    %2739 = vmatprep.subr.bf16.mxu0 %v2467
    %2740 = vmatpush1.bf16.msra.mxu0 %v2466
    %2741 = vmatprep.subr.bf16.mxu0 %v2474
    %2742 = vmatpush1.bf16.msra.mxu0 %v2473
    %2743 = vmatprep.subr.bf16.mxu0 %v2481
    %2744 = vmatpush1.bf16.msra.mxu0 %v2480
    %2745 = vmatprep.subr.bf16.mxu0 %v2488
    %2746 = vmatpush1.bf16.msra.mxu0 %v2487
    %2747 = vmatprep.subr.bf16.mxu0 %v2495
    %2748 = vmatpush1.bf16.msra.mxu0 %v2494
    %2749 = vmatprep.subr.bf16.mxu0 %v2502
    %2750 = vmatpush1.bf16.msra.mxu0 %v2501
    %2751 = vmatprep.subr.bf16.mxu0 %v2509
    %2752 = vmatpush1.bf16.msra.mxu0 %v2508
    %2753 = vmatprep.subr.bf16.mxu0 %v2516
    %2754 = vmatpush1.bf16.msra.mxu0 %v2515
    %2755 = vmatprep.mubr.bf16.mxu0 %v2181
    %2756 = vmatmul.mubr.bf16.gmra.mrb[0].mxu0 %v2180
    %v2757 = vpop.f32.mrb[0].mxu0
    %v2758 = vadd.f32 %v2717, %v2757
    %v2759 = vpop.f32.mrb[0].mxu0
    %v2760 = vadd.f32 %v2719, %v2759
    %v2761 = vpop.f32.mrb[0].mxu0
    %v2762 = vpop.f32.mrb[0].mxu0
    %2763 = vdwg.mxu0
    %2764 = vmatprep.subr.bf16.mxu0 0
    %2765 = vmatpush1.bf16.msra.mxu0 %v2300
    %2766 = vmatprep.subr.bf16.mxu0 0
    %2767 = vmatpush1.bf16.msra.mxu0 %v2307
    %2768 = vmatprep.subr.bf16.mxu0 0
    %2769 = vmatpush1.bf16.msra.mxu0 %v2314
    %2770 = vmatprep.subr.bf16.mxu0 0
    %2771 = vmatpush1.bf16.msra.mxu0 %v2321
    %2772 = vmatprep.subr.bf16.mxu0 0
    %2773 = vmatpush1.bf16.msra.mxu0 %v2328
    %2774 = vmatprep.subr.bf16.mxu0 0
    %2775 = vmatpush1.bf16.msra.mxu0 %v2335
    %2776 = vmatprep.subr.bf16.mxu0 0
    %2777 = vmatpush1.bf16.msra.mxu0 %v2342
    %2778 = vmatprep.subr.bf16.mxu0 0
    %2779 = vmatpush1.bf16.msra.mxu0 %v2349
    %2780 = vmatprep.subr.bf16.mxu0 0
    %2781 = vmatpush1.bf16.msra.mxu0 %v2356
    %2782 = vmatprep.subr.bf16.mxu0 0
    %2783 = vmatpush1.bf16.msra.mxu0 %v2363
    %2784 = vmatprep.subr.bf16.mxu0 0
    %2785 = vmatpush1.bf16.msra.mxu0 %v2370
    %2786 = vmatprep.subr.bf16.mxu0 0
    %2787 = vmatpush1.bf16.msra.mxu0 %v2377
    %2788 = vmatprep.subr.bf16.mxu0 0
    %2789 = vmatpush1.bf16.msra.mxu0 %v2384
    %2790 = vmatprep.subr.bf16.mxu0 0
    %2791 = vmatpush1.bf16.msra.mxu0 %v2391
    %2792 = vmatprep.subr.bf16.mxu0 0
    %2793 = vmatpush1.bf16.msra.mxu0 %v2398
    %2794 = vmatprep.subr.bf16.mxu0 0
    %2795 = vmatpush1.bf16.msra.mxu0 %v2405
    %2796 = vmatprep.mubr.bf16.mxu0 %v2179
    %2797 = vmatmul.mubr.bf16.gmra.mrb[0].mxu0 %v2178
    %v2798 = vpop.f32.mrb[0].mxu0
    %v2799 = vadd.f32 0.0, %v2798
    %v2800 = vpop.f32.mrb[0].mxu0
    %v2801 = vpop.f32.mrb[0].mxu0
    %v2802 = vpop.f32.mrb[0].mxu0
    %2803 = vdwg.mxu0
    %2804 = vmatprep.subr.bf16.mxu0 0
    %2805 = vmatpush1.bf16.msra.mxu0 %v2412
    %2806 = vmatprep.subr.bf16.mxu0 0
    %2807 = vmatpush1.bf16.msra.mxu0 %v2419
    %2808 = vmatprep.subr.bf16.mxu0 0
    %2809 = vmatpush1.bf16.msra.mxu0 %v2426
    %2810 = vmatprep.subr.bf16.mxu0 0
    %2811 = vmatpush1.bf16.msra.mxu0 %v2433
    %2812 = vmatprep.subr.bf16.mxu0 0
    %2813 = vmatpush1.bf16.msra.mxu0 %v2440
    %2814 = vmatprep.subr.bf16.mxu0 0
    %2815 = vmatpush1.bf16.msra.mxu0 %v2447
    %2816 = vmatprep.subr.bf16.mxu0 0
    %2817 = vmatpush1.bf16.msra.mxu0 %v2454
    %2818 = vmatprep.subr.bf16.mxu0 0
    %2819 = vmatpush1.bf16.msra.mxu0 %v2461
    %2820 = vmatprep.subr.bf16.mxu0 0
    %2821 = vmatpush1.bf16.msra.mxu0 %v2468
    %2822 = vmatprep.subr.bf16.mxu0 0
    %2823 = vmatpush1.bf16.msra.mxu0 %v2475
    %2824 = vmatprep.subr.bf16.mxu0 0
    %2825 = vmatpush1.bf16.msra.mxu0 %v2482
    %2826 = vmatprep.subr.bf16.mxu0 0
    %2827 = vmatpush1.bf16.msra.mxu0 %v2489
    %2828 = vmatprep.subr.bf16.mxu0 0
    %2829 = vmatpush1.bf16.msra.mxu0 %v2496
    %2830 = vmatprep.subr.bf16.mxu0 0
    %2831 = vmatpush1.bf16.msra.mxu0 %v2503
    %2832 = vmatprep.subr.bf16.mxu0 0
    %2833 = vmatpush1.bf16.msra.mxu0 %v2510
    %2834 = vmatprep.subr.bf16.mxu0 0
    %2835 = vmatpush1.bf16.msra.mxu0 %v2517
    %2836 = vmatprep.mubr.bf16.mxu0 %v2181
    %2837 = vmatmul.mubr.bf16.gmra.mrb[0].mxu0 %v2180
    %v2838 = vpop.f32.mrb[0].mxu0
    %v2839 = vadd.f32 %v2799, %v2838
    %v2840 = vpop.f32.mrb[0].mxu0
    %v2841 = vpop.f32.mrb[0].mxu0
    %v2842 = vpop.f32.mrb[0].mxu0
    %2843 = vdwg.mxu0
    %v2844 = vld [vmem:[%s9] sm:$0xff]
    %v2846 = vlaneseq
    %v2847 = vshrl.u32 %v2846, 7
    %v2848 = vsub.s32 0, %v2847
    %v2849 = vrot.slane %v2844, %v2848
    %v2850 = vlaneseq
    %v2851 = vshrl.u32 %v2850, 7
    %v2852 = vsub.s32 1, %v2851
    %v2853 = vrot.slane %v2844, %v2852
    %v2854 = vlaneseq
    %v2855 = vshrl.u32 %v2854, 7
    %v2856 = vsub.s32 2, %v2855
    %v2857 = vrot.slane %v2844, %v2856
    %v2858 = vlaneseq
    %v2859 = vshrl.u32 %v2858, 7
    %v2860 = vsub.s32 3, %v2859
    %v2861 = vrot.slane %v2844, %v2860
    %v2862 = vlaneseq
    %v2863 = vshrl.u32 %v2862, 7
    %v2864 = vsub.s32 4, %v2863
    %v2865 = vrot.slane %v2844, %v2864
    %v2866 = vlaneseq
    %v2867 = vshrl.u32 %v2866, 7
    %v2868 = vsub.s32 5, %v2867
    %v2869 = vrot.slane %v2844, %v2868
    %v2870 = vlaneseq
    %v2871 = vshrl.u32 %v2870, 7
    %v2872 = vsub.s32 6, %v2871
    %v2873 = vrot.slane %v2844, %v2872
    %v2881 = vmul.f32 %v2594, %v2849
    %v2882 = vmul.f32 %v2596, %v2853
    %v2883 = vmul.f32 %v2676, %v2857
    %v2884 = vmul.f32 %v2678, %v2861
    %v2885 = vmul.f32 %v2758, %v2865
    %v2886 = vmul.f32 %v2760, %v2869
    %v2887 = vmul.f32 %v2839, %v2873
    %v2888 = vld [vmem:[%s10 + $0xd] sm:$0xff]
    %v2890 = vlaneseq
    %v2891 = vshrl.u32 %v2890, 7
    %v2892 = vsub.s32 0, %v2891
    %v2893 = vrot.slane %v2888, %v2892
    %v2894 = vlaneseq
    %v2895 = vshrl.u32 %v2894, 7
    %v2896 = vsub.s32 1, %v2895
    %v2897 = vrot.slane %v2888, %v2896
    %v2898 = vlaneseq
    %v2899 = vshrl.u32 %v2898, 7
    %v2900 = vsub.s32 2, %v2899
    %v2901 = vrot.slane %v2888, %v2900
    %v2902 = vlaneseq
    %v2903 = vshrl.u32 %v2902, 7
    %v2904 = vsub.s32 3, %v2903
    %v2905 = vrot.slane %v2888, %v2904
    %v2906 = vlaneseq
    %v2907 = vshrl.u32 %v2906, 7
    %v2908 = vsub.s32 4, %v2907
    %v2909 = vrot.slane %v2888, %v2908
    %v2910 = vlaneseq
    %v2911 = vshrl.u32 %v2910, 7
    %v2912 = vsub.s32 5, %v2911
    %v2913 = vrot.slane %v2888, %v2912
    %v2914 = vlaneseq
    %v2915 = vshrl.u32 %v2914, 7
    %v2916 = vsub.s32 6, %v2915
    %v2917 = vrot.slane %v2888, %v2916
    %v2925 = vadd.f32 %v2881, %v2893
    %v2926 = vadd.f32 %v2882, %v2897
    %v2927 = vadd.f32 %v2883, %v2901
    %v2928 = vadd.f32 %v2884, %v2905
    %v2929 = vadd.f32 %v2885, %v2909
    %v2930 = vadd.f32 %v2886, %v2913
    %v2931 = vadd.f32 %v2887, %v2917
    %v2932 = vsub.f32 0.0, %v2925
    %v2933 = vsub.f32 0.0, %v2926
    %v2934 = vsub.f32 0.0, %v2927
    %v2935 = vsub.f32 0.0, %v2928
    %v2936 = vsub.f32 0.0, %v2929
    %v2937 = vsub.f32 0.0, %v2930
    %v2938 = vsub.f32 0.0, %v2931
    %v2939 = vmul.f32 %v2932, 1.442695
    %v2940 = vpow.pop %v2939
    %v2941 = vmul.f32 %v2933, 1.442695
    %v2942 = vpow.pop %v2941
    %v2943 = vmul.f32 %v2934, 1.442695
    %v2944 = vpow.pop %v2943
    %v2945 = vmul.f32 %v2935, 1.442695
    %v2946 = vpow.pop %v2945
    %v2947 = vmul.f32 %v2936, 1.442695
    %v2948 = vpow.pop %v2947
    %v2949 = vmul.f32 %v2937, 1.442695
    %v2950 = vpow.pop %v2949
    %v2951 = vmul.f32 %v2938, 1.442695
    %v2952 = vpow.pop %v2951
    %v2953 = vadd.f32 %v2940, 1.0
    %v2954 = vadd.f32 %v2942, 1.0
    %v2955 = vadd.f32 %v2944, 1.0
    %v2956 = vadd.f32 %v2946, 1.0
    %v2957 = vadd.f32 %v2948, 1.0
    %v2958 = vadd.f32 %v2950, 1.0
    %v2959 = vadd.f32 %v2952, 1.0
    %v2960 = vrcp.pop %v2953
    %v2961 = vmul.f32 1.0, %v2960
    %v2962 = vrcp.pop %v2954
    %v2963 = vmul.f32 1.0, %v2962
    %v2964 = vrcp.pop %v2955
    %v2965 = vmul.f32 1.0, %v2964
    %v2966 = vrcp.pop %v2956
    %v2967 = vmul.f32 1.0, %v2966
    %v2968 = vrcp.pop %v2957
    %v2969 = vmul.f32 1.0, %v2968
    %v2970 = vrcp.pop %v2958
    %v2971 = vmul.f32 1.0, %v2970
    %v2972 = vrcp.pop %v2959
    %v2973 = vmul.f32 1.0, %v2972
    %2974 = vst [vmem:[#allocation11] sm:$0xff] %v2961
    %2975 = vst [vmem:[#allocation11 + $0x8] sm:$0xff] %v2963
    %2976 = vst [vmem:[#allocation11 + $0x10] sm:$0xff] %v2965
    %2977 = vst [vmem:[#allocation11 + $0x18] sm:$0xff] %v2967
    %2978 = vst [vmem:[#allocation11 + $0x20] sm:$0xff] %v2969
    %2979 = vst [vmem:[#allocation11 + $0x28] sm:$0xff] %v2971
    %2980 = vst [vmem:[#allocation11 + $0x30] sm:$0xff] %v2973
    // Predicated region
    $region66: #{vae_forward.1} parent=1 // pred_check
      _
    $region67: #{vae_forward.1} parent=1 // pred_check_branch
      %2982 = sbr.rel (0) target = $region69
    $region68: #{vae_forward.1} parent=1 // pred_region
      %s2984 = ssub.s32 896, 896
      %2985 = vsyncadd [#allocation4], %s2984
      %s2987 = sshll.u32 [#allocation11], 4
      %s2988 = int_to_ptr.vmem [resolvable:$true] %s2987
      %2990 = dma.vmem_to_hbm [thread:$0]  %s2988, 896, %s11, [#allocation4]
    $region69: #{vae_forward.1} parent=1 // pred_fallthru
      _
    // Predicated region
    $region70: #{vae_forward.1} parent=1 // pred_check
      _
    $region71: #{vae_forward.1} parent=1 // pred_check_branch
      %2992 = sbr.rel (0) target = $region73
    $region72: #{vae_forward.1} parent=1 // pred_region
      _
    $region73: #{vae_forward.1} parent=1 // pred_fallthru
      _
    // Predicated region
    $region74: #{vae_forward.1} parent=1 // pred_check
      _
    $region75: #{vae_forward.1} parent=1 // pred_check_branch
      %2994 = sbr.rel (0) target = $region77
    $region76: #{vae_forward.1} parent=1 // pred_region
      %2995 = dma.done [#allocation4], 896
    $region77: #{vae_forward.1} parent=1 // pred_fallthru
      _
    // Predicated region
    $region78: #{vae_forward.1} parent=1 // pred_check
      _
    $region79: #{vae_forward.1} parent=1 // pred_check_branch
      %2997 = sbr.rel (0) target = $region81
    $region80: #{vae_forward.1} parent=1 // pred_region
      _
    $region81: #{vae_forward.1} parent=1 // pred_fallthru
      _
    %2998 = vsyncpa [#allocation3], 1
    %2999 = vsyncpa [#allocation6], 1
    %3000 = vsyncpa [#allocation9], 1
    %3001 = vsyncpa [#allocation4], 1

</llo_original>
